<compile_context>
chip_gen: v6e
topology: v6e:2x2x1
jax: 0.10.0
libtpu: 0.0.40
codegen_flags: <defaults>
</compile_context>

<pallas_src>
import math

import jax
import jax.numpy as jnp
from jax.experimental import pallas as pl
from jax.experimental.pallas import tpu as pltpu

C_IMG = 3
IMG = 16
HIDDEN = C_IMG * IMG * IMG          # 768 -- required by Decoder's view(-1, 3, 16, 16)


def _pick_row_tile(n):
    """Largest tile in {256,...,8} dividing n (n is always a multiple of 8 here)."""
    for t in (256, 128, 64, 32, 16, 8):
        if n % t == 0:
            return t
    return n


def _conv3x3_as_matrix(w):
    """Lower a 3x3 / stride-1 / pad-1 conv on (3,16,16) images to a dense matrix.

    Returns M of shape (768, 768) such that  y_flat = x_flat @ M , where the flat
    layout is the contiguous row-major (c, h, w) layout used by torch's
    .view(-1, 3, 16, 16).  `w` is in torch OIHW layout (co, ci, kh, kw).
    """
    kdim = w.shape[2]                                    # 3
    r = jnp.arange(IMG)
    d = r[:, None] - r[None, :] + 1                      # kernel index = in - out + 1
    valid = (d >= 0) & (d < kdim)                        # (in, out)
    k = jnp.clip(d, 0, kdim - 1)
    # g[co, ci, ih, oh, iw, ow] = w[co, ci, k[ih,oh], k[iw,ow]]
    g = w[:, :, k[:, :, None, None], k[None, None, :, :]]
    mask = (valid[:, :, None, None] & valid[None, None, :, :]).astype(w.dtype)
    g = g * mask
    # M[ci*256 + ih*16 + iw, co*256 + oh*16 + ow]
    return jnp.transpose(g, (1, 2, 4, 0, 3, 5)).reshape(HIDDEN, HIDDEN)


# ---------------------------------------------------------------------------
# Fused kernel:  relu(x @ Wfc + bfc) @ Mc1 + bc1 -> relu -> @ Mc2 + bc2 -> tanh
# ---------------------------------------------------------------------------
def _decoder_kernel(x_ref, wfc_ref, bfc_ref, wc1_ref, bc1_ref, wc2_ref, bc2_ref,
                    o_ref):
    # fc1 + ReLU : bf16 MXU operands, f32 accumulation.
    x = x_ref[...].astype(jnp.bfloat16)
    h = jnp.dot(x, wfc_ref[...], preferred_element_type=jnp.float32) + bfc_ref[...]
    h = jnp.maximum(h, 0.0)
    # conv1 (as 768x768 matmul) + ReLU : f32 operands for accuracy.
    h = jnp.dot(h, wc1_ref[...], preferred_element_type=jnp.float32) + bc1_ref[...]
    h = jnp.maximum(h, 0.0)
    # conv2 (as matmul) + tanh : tanh goes to the EUP.
    y = jnp.dot(h, wc2_ref[...], preferred_element_type=jnp.float32) + bc2_ref[...]
    o_ref[...] = jnp.tanh(y)


def _decoder_rows(rows, w_fc_bf16, b_fc, m_c1, b_c1, m_c2, b_c2):
    n, h = rows.shape
    tm = _pick_row_tile(n)

    def resident(shape):
        # Grid-invariant operand (weights / biases): same block at every grid step,
        # so Pallas fetches it once and keeps it in VMEM.
        return pl.BlockSpec(shape, lambda i: (0, 0))

    cost = pl.CostEstimate(
        flops=3 * 2 * n * h * h + 6 * n * h,
        transcendentals=n * h,
        bytes_accessed=2 * n * h * 4 + h * h * 2 + 2 * h * h * 4 + 3 * h * 4,
    )
    return pl.pallas_call(
        _decoder_kernel,
        out_shape=jax.ShapeDtypeStruct((n, h), jnp.float32),
        grid_spec=pltpu.PrefetchScalarGridSpec(
            num_scalar_prefetch=0,
            grid=(n // tm,),
            in_specs=[
                pl.BlockSpec((tm, h), lambda i: (i, 0)),   # x rows
                resident((h, h)),                          # fc1 weight (bf16)
                resident((1, h)),                          # fc1 bias
                resident((h, h)),                          # conv1 as matrix (f32)
                resident((1, h)),                          # conv1 bias (flattened)
                resident((h, h)),                          # conv2 as matrix (f32)
                resident((1, h)),                          # conv2 bias (flattened)
            ],
            out_specs=pl.BlockSpec((tm, h), lambda i: (i, 0)),
        ),
        compiler_params=pltpu.CompilerParams(
            dimension_semantics=("parallel",),
            vmem_limit_bytes=48 * 1024 * 1024,
        ),
        cost_estimate=cost,
    )(rows, w_fc_bf16, b_fc, m_c1, b_c1, m_c2, b_c2)


# ---------------------------------------------------------------------------
# Full Decoder forward
# ---------------------------------------------------------------------------
def _decoder_forward(x, params):
    b, p, h = x.shape
    assert h == HIDDEN, "Decoder requires hidden_size == 3*16*16 = 768"
    rows = x.reshape(b * p, h)
    n = rows.shape[0]
    n_pad = -(-n // 8) * 8                                # round up to multiple of 8
    if n_pad != n:
        rows = jnp.pad(rows, ((0, n_pad - n), (0, 0)))

    w_fc = params["w_fc"].astype(jnp.bfloat16)            # (in, out): x @ w_fc == torch x @ W.T
    b_fc = params["b_fc"].reshape(1, h).astype(jnp.float32)
    m_c1 = _conv3x3_as_matrix(params["w_c1"].astype(jnp.float32))
    b_c1 = jnp.repeat(params["b_c1"].astype(jnp.float32), IMG * IMG).reshape(1, h)
    m_c2 = _conv3x3_as_matrix(params["w_c2"].astype(jnp.float32))
    b_c2 = jnp.repeat(params["b_c2"].astype(jnp.float32), IMG * IMG).reshape(1, h)

    y = _decoder_rows(rows, w_fc, b_fc, m_c1, b_c1, m_c2, b_c2)
    if n_pad != n:
        y = y[:n]
    # Contiguous reshapes (free): (B*P, 768) -> (B, P, 3, 16, 16), same layout as torch .view
    return y.reshape(b, p, C_IMG, IMG, IMG)


decoder_forward = jax.jit(_decoder_forward)


# ---------------------------------------------------------------------------
# Pure-JAX (f32) reference mirroring the PyTorch forward
# ---------------------------------------------------------------------------
def decoder_reference(x, params):
    b, p, h = x.shape
    rows = x.reshape(b * p, h)
    hid = jax.nn.relu(rows @ params["w_fc"] + params["b_fc"])
    imgs = hid.reshape(b * p, C_IMG, IMG, IMG)

    def conv(z, w, bias):
        outz = jax.lax.conv_general_dilated(
            z, w, window_strides=(1, 1), padding=((1, 1), (1, 1)),
            dimension_numbers=("NCHW", "OIHW", "NCHW"))
        return outz + bias.reshape(1, C_IMG, 1, 1)

    hc = jax.nn.relu(conv(imgs, params["w_c1"], params["b_c1"]))
    y = jnp.tanh(conv(hc, params["w_c2"], params["b_c2"]))
    return y.reshape(b, p, C_IMG, IMG, IMG)


def init_params(key, hidden):
    """Deterministic synthetic parameters (shapes per Decoder.__init__).

    w_fc is stored as (in, out) so x @ w_fc == torch's x @ weight.T.
    conv weights are torch layout (out_ch, in_ch, kh, kw).
    """
    ks = jax.random.split(key, 6)
    w_fc = jax.random.normal(ks[0], (hidden, hidden), jnp.float32) / math.sqrt(hidden)
    b_fc = 0.02 * jax.random.normal(ks[1], (hidden,), jnp.float32)
    w_c1 = 0.2 * jax.random.normal(ks[2], (C_IMG, C_IMG, 3, 3), jnp.float32)
    b_c1 = 0.02 * jax.random.normal(ks[3], (C_IMG,), jnp.float32)
    w_c2 = 0.2 * jax.random.normal(ks[4], (C_IMG, C_IMG, 3, 3), jnp.float32)
    b_c2 = 0.02 * jax.random.normal(ks[5], (C_IMG,), jnp.float32)
    return {"w_fc": w_fc, "b_fc": b_fc,
            "w_c1": w_c1, "b_c1": b_c1,
            "w_c2": w_c2, "b_c2": b_c2}


if __name__ == "__main__":
    B, P = 2, 4                     # batch_size, patch_size (small demo shapes)
    key = jax.random.PRNGKey(0)
    kx, kp = jax.random.split(key)
    x = jax.random.normal(kx, (B, P, HIDDEN), jnp.float32)
    params = init_params(kp, HIDDEN)

    out = decoder_forward(x, params)
    out = jax.block_until_ready(out)

    ref = decoder_reference(x, params)
    assert out.shape == (B, P, C_IMG, IMG, IMG) and out.dtype == jnp.float32
    err = float(jnp.max(jnp.abs(out - ref)))
    # fc1 uses bf16 MXU operands with f32 accumulation -> small deviation vs f32 ref.
    assert err < 5e-2, f"max abs error {err}"
    print("KERNEL_OK")
</pallas_src>

<mosaic_0001>
module attributes {stable_mosaic.version = 11 : i64} {
  func.func @_decoder_kernel(%arg0: i32, %arg1: memref<8x768xf32, #tpu.memory_space<vmem>>, %arg2: memref<768x768xbf16, #tpu.memory_space<vmem>>, %arg3: memref<1x768xf32, #tpu.memory_space<vmem>>, %arg4: memref<768x768xf32, #tpu.memory_space<vmem>>, %arg5: memref<1x768xf32, #tpu.memory_space<vmem>>, %arg6: memref<768x768xf32, #tpu.memory_space<vmem>>, %arg7: memref<1x768xf32, #tpu.memory_space<vmem>>, %arg8: memref<8x768xf32, #tpu.memory_space<vmem>>) attributes {dimension_semantics = [#tpu.dimension_semantics<parallel>], iteration_bounds = array<i64: 1>, scalar_prefetch = 0 : i64, scratch_operands = 0 : i64, tpu.core_type = #tpu.core_type<tc>, window_params = [{transform_indices = @transform_0, window_bounds = array<i64: 8, 768>}, {pipeline_mode = #tpu.pipeline_mode<synchronous>, transform_indices = @transform_1, window_bounds = array<i64: 768, 768>}, {pipeline_mode = #tpu.pipeline_mode<synchronous>, transform_indices = @transform_2, window_bounds = array<i64: 1, 768>}, {pipeline_mode = #tpu.pipeline_mode<synchronous>, transform_indices = @transform_3, window_bounds = array<i64: 768, 768>}, {pipeline_mode = #tpu.pipeline_mode<synchronous>, transform_indices = @transform_4, window_bounds = array<i64: 1, 768>}, {pipeline_mode = #tpu.pipeline_mode<synchronous>, transform_indices = @transform_5, window_bounds = array<i64: 768, 768>}, {pipeline_mode = #tpu.pipeline_mode<synchronous>, transform_indices = @transform_6, window_bounds = array<i64: 1, 768>}, {transform_indices = @transform_7, window_bounds = array<i64: 8, 768>}]} {
    %c0 = arith.constant 0 : index
    %c0_0 = arith.constant 0 : index
    %0 = vector.load %arg1[%c0, %c0_0] : memref<8x768xf32, #tpu.memory_space<vmem>>, vector<8x768xf32>
    %1 = arith.truncf %0 : vector<8x768xf32> to vector<8x768xbf16>
    %c0_1 = arith.constant 0 : index
    %c0_2 = arith.constant 0 : index
    %2 = vector.load %arg2[%c0_1, %c0_2] : memref<768x768xbf16, #tpu.memory_space<vmem>>, vector<768x768xbf16>
    %cst = arith.constant dense<0.000000e+00> : vector<8x768xf32>
    %3 = tpu.matmul %1, %2, %cst {dimension_numbers = #tpu.dot_dimension_numbers<[1], [0], [0], [1], [0, 0, 1, 1], [], []>} : vector<8x768xbf16>, vector<768x768xbf16>, vector<8x768xf32> -> vector<8x768xf32>
    %c0_3 = arith.constant 0 : index
    %c0_4 = arith.constant 0 : index
    %4 = vector.load %arg3[%c0_3, %c0_4] : memref<1x768xf32, #tpu.memory_space<vmem>>, vector<1x768xf32>
    %5 = vector.broadcast %4 : vector<1x768xf32> to vector<8x768xf32>
    %6 = arith.addf %3, %5 : vector<8x768xf32>
    %cst_5 = arith.constant 0.000000e+00 : f32
    %7 = vector.broadcast %cst_5 : f32 to vector<8x768xf32>
    %8 = arith.maximumf %6, %7 : vector<8x768xf32>
    %c0_6 = arith.constant 0 : index
    %c0_7 = arith.constant 0 : index
    %9 = vector.load %arg4[%c0_6, %c0_7] : memref<768x768xf32, #tpu.memory_space<vmem>>, vector<768x768xf32>
    %cst_8 = arith.constant dense<0.000000e+00> : vector<8x768xf32>
    %10 = tpu.matmul %8, %9, %cst_8 {dimension_numbers = #tpu.dot_dimension_numbers<[1], [0], [0], [1], [0, 0, 1, 1], [], []>} : vector<8x768xf32>, vector<768x768xf32>, vector<8x768xf32> -> vector<8x768xf32>
    %c0_9 = arith.constant 0 : index
    %c0_10 = arith.constant 0 : index
    %11 = vector.load %arg5[%c0_9, %c0_10] : memref<1x768xf32, #tpu.memory_space<vmem>>, vector<1x768xf32>
    %12 = vector.broadcast %11 : vector<1x768xf32> to vector<8x768xf32>
    %13 = arith.addf %10, %12 : vector<8x768xf32>
    %cst_11 = arith.constant 0.000000e+00 : f32
    %14 = vector.broadcast %cst_11 : f32 to vector<8x768xf32>
    %15 = arith.maximumf %13, %14 : vector<8x768xf32>
    %c0_12 = arith.constant 0 : index
    %c0_13 = arith.constant 0 : index
    %16 = vector.load %arg6[%c0_12, %c0_13] : memref<768x768xf32, #tpu.memory_space<vmem>>, vector<768x768xf32>
    %cst_14 = arith.constant dense<0.000000e+00> : vector<8x768xf32>
    %17 = tpu.matmul %15, %16, %cst_14 {dimension_numbers = #tpu.dot_dimension_numbers<[1], [0], [0], [1], [0, 0, 1, 1], [], []>} : vector<8x768xf32>, vector<768x768xf32>, vector<8x768xf32> -> vector<8x768xf32>
    %c0_15 = arith.constant 0 : index
    %c0_16 = arith.constant 0 : index
    %18 = vector.load %arg7[%c0_15, %c0_16] : memref<1x768xf32, #tpu.memory_space<vmem>>, vector<1x768xf32>
    %19 = vector.broadcast %18 : vector<1x768xf32> to vector<8x768xf32>
    %20 = arith.addf %17, %19 : vector<8x768xf32>
    %21 = math.tanh %20 : vector<8x768xf32>
    %c0_17 = arith.constant 0 : index
    %c0_18 = arith.constant 0 : index
    %22 = vector.load %arg8[%c0_17, %c0_18] : memref<8x768xf32, #tpu.memory_space<vmem>>, vector<8x768xf32>
    tpu.vector_store %arg8[%c0_17, %c0_18], %21 {strides = array<i32>} : memref<8x768xf32, #tpu.memory_space<vmem>>, vector<8x768xf32>,
    return
  }
  func.func @transform_0(%arg0: i32) -> (i32, i32) {
    %c0_i32 = arith.constant 0 : i32
    %c0_i32_0 = arith.constant 0 : i32
    return %arg0, %c0_i32 : i32, i32
  }
  func.func @transform_1(%arg0: i32) -> (i32, i32) {
    %c0_i32 = arith.constant 0 : i32
    %c0_i32_0 = arith.constant 0 : i32
    %c0_i32_1 = arith.constant 0 : i32
    return %c0_i32, %c0_i32_0 : i32, i32
  }
  func.func @transform_2(%arg0: i32) -> (i32, i32) {
    %c0_i32 = arith.constant 0 : i32
    %c0_i32_0 = arith.constant 0 : i32
    %c0_i32_1 = arith.constant 0 : i32
    return %c0_i32, %c0_i32_0 : i32, i32
  }
  func.func @transform_3(%arg0: i32) -> (i32, i32) {
    %c0_i32 = arith.constant 0 : i32
    %c0_i32_0 = arith.constant 0 : i32
    %c0_i32_1 = arith.constant 0 : i32
    return %c0_i32, %c0_i32_0 : i32, i32
  }
  func.func @transform_4(%arg0: i32) -> (i32, i32) {
    %c0_i32 = arith.constant 0 : i32
    %c0_i32_0 = arith.constant 0 : i32
    %c0_i32_1 = arith.constant 0 : i32
    return %c0_i32, %c0_i32_0 : i32, i32
  }
  func.func @transform_5(%arg0: i32) -> (i32, i32) {
    %c0_i32 = arith.constant 0 : i32
    %c0_i32_0 = arith.constant 0 : i32
    %c0_i32_1 = arith.constant 0 : i32
    return %c0_i32, %c0_i32_0 : i32, i32
  }
  func.func @transform_6(%arg0: i32) -> (i32, i32) {
    %c0_i32 = arith.constant 0 : i32
    %c0_i32_0 = arith.constant 0 : i32
    %c0_i32_1 = arith.constant 0 : i32
    return %c0_i32, %c0_i32_0 : i32, i32
  }
  func.func @transform_7(%arg0: i32) -> (i32, i32) {
    %c0_i32 = arith.constant 0 : i32
    %c0_i32_0 = arith.constant 0 : i32
    return %arg0, %c0_i32 : i32, i32
  }
}

</mosaic_0001>

<llo_original>
// kernel: _decoder_forward.1
$region0: #{_decoder_forward.1}
  #allocation0 [shape = 'u32[]', space=smem, size = 0x4, offset = 0x4, fixed_abs, tag = 'smem constant byte address 0x4 - core index']
  #allocation1 [shape = 'u32[144,128]{1,0:T(1,128)}', space=vmem, size = 0x12000, scoped, tag = 'internal scratch']
  %s0 = inlined_call_operand.vmem [shape: f32[8,768], index: 0, kind: input, shape index: {}]
  %s1 = inlined_call_operand.vmem [shape: bf16[768,768], index: 1, kind: input, shape index: {}]
  %s2 = inlined_call_operand.vmem [shape: f32[1,768], index: 2, kind: input, shape index: {}]
  %s3 = inlined_call_operand.vmem [shape: f32[768,768], index: 3, kind: input, shape index: {}]
  %s4 = inlined_call_operand.vmem [shape: f32[1,768], index: 4, kind: input, shape index: {}]
  %s5 = inlined_call_operand.vmem [shape: f32[768,768], index: 5, kind: input, shape index: {}]
  %s6 = inlined_call_operand.vmem [shape: f32[1,768], index: 6, kind: input, shape index: {}]
  %s7 = inlined_call_operand.vmem [shape: f32[8,768], index: 7, kind: output, shape index: {}]
  %s8 = sld [smem:[#allocation0]]
  $region38: #{_decoder_forward.1} parent=0
    _
  %s10 = ssub.s32 1, %s8
  %s11 = scalar_select 0, %s10, %s8
  // Predicated region
  $region2: #{_decoder_forward.1} parent=0 // pred_check
    _
  $region3: #{_decoder_forward.1} parent=0 // pred_check_branch
    %13 = sbr.rel (0) target = $region5
  $region4: #{_decoder_forward.1} parent=0 // pred_region
    _
  $region5: #{_decoder_forward.1} parent=0 // pred_fallthru
    _
  // Predicated region
  $region6: #{_decoder_forward.1} parent=0 // pred_check
    _
  $region7: #{_decoder_forward.1} parent=0 // pred_check_branch
    %15 = sbr.rel (0) target = $region9
  $region8: #{_decoder_forward.1} parent=0 // pred_region
    _
  $region9: #{_decoder_forward.1} parent=0 // pred_fallthru
    _
  // Predicated region
  $region10: #{_decoder_forward.1} parent=0 // pred_check
    _
  $region11: #{_decoder_forward.1} parent=0 // pred_check_branch
    %17 = sbr.rel (0) target = $region13
  $region12: #{_decoder_forward.1} parent=0 // pred_region
    _
  $region13: #{_decoder_forward.1} parent=0 // pred_fallthru
    _
  // Predicated region
  $region14: #{_decoder_forward.1} parent=0 // pred_check
    _
  $region15: #{_decoder_forward.1} parent=0 // pred_check_branch
    %19 = sbr.rel (0) target = $region17
  $region16: #{_decoder_forward.1} parent=0 // pred_region
    _
  $region17: #{_decoder_forward.1} parent=0 // pred_fallthru
    _
  // Predicated region
  $region18: #{_decoder_forward.1} parent=0 // pred_check
    _
  $region19: #{_decoder_forward.1} parent=0 // pred_check_branch
    %21 = sbr.rel (0) target = $region21
  $region20: #{_decoder_forward.1} parent=0 // pred_region
    _
  $region21: #{_decoder_forward.1} parent=0 // pred_fallthru
    _
  // Predicated region
  $region22: #{_decoder_forward.1} parent=0 // pred_check
    _
  $region23: #{_decoder_forward.1} parent=0 // pred_check_branch
    %23 = sbr.rel (0) target = $region25
  $region24: #{_decoder_forward.1} parent=0 // pred_region
    _
  $region25: #{_decoder_forward.1} parent=0 // pred_fallthru
    _
  // Predicated region
  $region26: #{_decoder_forward.1} parent=0 // pred_check
    _
  $region27: #{_decoder_forward.1} parent=0 // pred_check_branch
    %25 = sbr.rel (0) target = $region29
  $region28: #{_decoder_forward.1} parent=0 // pred_region
    _
  $region29: #{_decoder_forward.1} parent=0 // pred_fallthru
    _
  %v26 = vld [vmem:[%s0] sm:$0xff]
  %v27 = vld [vmem:[%s0 + $0x8] sm:$0xff]
  %v28 = vld [vmem:[%s0 + $0x10] sm:$0xff]
  %v29 = vld [vmem:[%s0 + $0x18] sm:$0xff]
  %v30 = vld [vmem:[%s0 + $0x20] sm:$0xff]
  %v31 = vld [vmem:[%s0 + $0x28] sm:$0xff]
  %v32 = vpack.c.bf16 %v26, %v26
  %v33 = vpack.c.bf16 %v27, %v27
  %v34 = vpack.c.bf16 %v28, %v28
  %v35 = vpack.c.bf16 %v29, %v29
  %v36 = vpack.c.bf16 %v30, %v30
  %v37 = vpack.c.bf16 %v31, %v31
  %v38 = vld [vmem:[%s1] sm:$0xff]
  %v39 = vld [vmem:[%s1 + $0x8] sm:$0xff]
  %v40 = vld [vmem:[%s1 + $0x10] sm:$0xff]
  %v41 = vld [vmem:[%s1 + $0x18] sm:$0xff]
  %v42 = vld [vmem:[%s1 + $0x20] sm:$0xff]
  %v43 = vld [vmem:[%s1 + $0x28] sm:$0xff]
  %v44 = vld [vmem:[%s1 + $0x30] sm:$0xff]
  %v45 = vld [vmem:[%s1 + $0x38] sm:$0xff]
  %v46 = vld [vmem:[%s1 + $0x40] sm:$0xff]
  %v47 = vld [vmem:[%s1 + $0x48] sm:$0xff]
  %v48 = vld [vmem:[%s1 + $0x50] sm:$0xff]
  %v49 = vld [vmem:[%s1 + $0x58] sm:$0xff]
  %v50 = vld [vmem:[%s1 + $0x60] sm:$0xff]
  %v51 = vld [vmem:[%s1 + $0x68] sm:$0xff]
  %v52 = vld [vmem:[%s1 + $0x70] sm:$0xff]
  %v53 = vld [vmem:[%s1 + $0x78] sm:$0xff]
  %v54 = vld [vmem:[%s1 + $0x80] sm:$0xff]
  %v55 = vld [vmem:[%s1 + $0x88] sm:$0xff]
  %v56 = vld [vmem:[%s1 + $0x90] sm:$0xff]
  %v57 = vld [vmem:[%s1 + $0x98] sm:$0xff]
  %v58 = vld [vmem:[%s1 + $0xa0] sm:$0xff]
  %v59 = vld [vmem:[%s1 + $0xa8] sm:$0xff]
  %v60 = vld [vmem:[%s1 + $0xb0] sm:$0xff]
  %v61 = vld [vmem:[%s1 + $0xb8] sm:$0xff]
  %v62 = vld [vmem:[%s1 + $0xc0] sm:$0xff]
  %v63 = vld [vmem:[%s1 + $0xc8] sm:$0xff]
  %v64 = vld [vmem:[%s1 + $0xd0] sm:$0xff]
  %v65 = vld [vmem:[%s1 + $0xd8] sm:$0xff]
  %v66 = vld [vmem:[%s1 + $0xe0] sm:$0xff]
  %v67 = vld [vmem:[%s1 + $0xe8] sm:$0xff]
  %v68 = vld [vmem:[%s1 + $0xf0] sm:$0xff]
  %v69 = vld [vmem:[%s1 + $0xf8] sm:$0xff]
  %v70 = vld [vmem:[%s1 + $0x100] sm:$0xff]
  %v71 = vld [vmem:[%s1 + $0x108] sm:$0xff]
  %v72 = vld [vmem:[%s1 + $0x110] sm:$0xff]
  %v73 = vld [vmem:[%s1 + $0x118] sm:$0xff]
  %v74 = vld [vmem:[%s1 + $0x120] sm:$0xff]
  %v75 = vld [vmem:[%s1 + $0x128] sm:$0xff]
  %v76 = vld [vmem:[%s1 + $0x130] sm:$0xff]
  %v77 = vld [vmem:[%s1 + $0x138] sm:$0xff]
  %v78 = vld [vmem:[%s1 + $0x140] sm:$0xff]
  %v79 = vld [vmem:[%s1 + $0x148] sm:$0xff]
  %v80 = vld [vmem:[%s1 + $0x150] sm:$0xff]
  %v81 = vld [vmem:[%s1 + $0x158] sm:$0xff]
  %v82 = vld [vmem:[%s1 + $0x160] sm:$0xff]
  %v83 = vld [vmem:[%s1 + $0x168] sm:$0xff]
  %v84 = vld [vmem:[%s1 + $0x170] sm:$0xff]
  %v85 = vld [vmem:[%s1 + $0x178] sm:$0xff]
  %v86 = vld [vmem:[%s1 + $0x180] sm:$0xff]
  %v87 = vld [vmem:[%s1 + $0x188] sm:$0xff]
  %v88 = vld [vmem:[%s1 + $0x190] sm:$0xff]
  %v89 = vld [vmem:[%s1 + $0x198] sm:$0xff]
  %v90 = vld [vmem:[%s1 + $0x1a0] sm:$0xff]
  %v91 = vld [vmem:[%s1 + $0x1a8] sm:$0xff]
  %v92 = vld [vmem:[%s1 + $0x1b0] sm:$0xff]
  %v93 = vld [vmem:[%s1 + $0x1b8] sm:$0xff]
  %v94 = vld [vmem:[%s1 + $0x1c0] sm:$0xff]
  %v95 = vld [vmem:[%s1 + $0x1c8] sm:$0xff]
  %v96 = vld [vmem:[%s1 + $0x1d0] sm:$0xff]
  %v97 = vld [vmem:[%s1 + $0x1d8] sm:$0xff]
  %v98 = vld [vmem:[%s1 + $0x1e0] sm:$0xff]
  %v99 = vld [vmem:[%s1 + $0x1e8] sm:$0xff]
  %v100 = vld [vmem:[%s1 + $0x1f0] sm:$0xff]
  %v101 = vld [vmem:[%s1 + $0x1f8] sm:$0xff]
  %v102 = vld [vmem:[%s1 + $0x200] sm:$0xff]
  %v103 = vld [vmem:[%s1 + $0x208] sm:$0xff]
  %v104 = vld [vmem:[%s1 + $0x210] sm:$0xff]
  %v105 = vld [vmem:[%s1 + $0x218] sm:$0xff]
  %v106 = vld [vmem:[%s1 + $0x220] sm:$0xff]
  %v107 = vld [vmem:[%s1 + $0x228] sm:$0xff]
  %v108 = vld [vmem:[%s1 + $0x230] sm:$0xff]
  %v109 = vld [vmem:[%s1 + $0x238] sm:$0xff]
  %v110 = vld [vmem:[%s1 + $0x240] sm:$0xff]
  %v111 = vld [vmem:[%s1 + $0x248] sm:$0xff]
  %v112 = vld [vmem:[%s1 + $0x250] sm:$0xff]
  %v113 = vld [vmem:[%s1 + $0x258] sm:$0xff]
  %v114 = vld [vmem:[%s1 + $0x260] sm:$0xff]
  %v115 = vld [vmem:[%s1 + $0x268] sm:$0xff]
  %v116 = vld [vmem:[%s1 + $0x270] sm:$0xff]
  %v117 = vld [vmem:[%s1 + $0x278] sm:$0xff]
  %v118 = vld [vmem:[%s1 + $0x280] sm:$0xff]
  %v119 = vld [vmem:[%s1 + $0x288] sm:$0xff]
  %v120 = vld [vmem:[%s1 + $0x290] sm:$0xff]
  %v121 = vld [vmem:[%s1 + $0x298] sm:$0xff]
  %v122 = vld [vmem:[%s1 + $0x2a0] sm:$0xff]
  %v123 = vld [vmem:[%s1 + $0x2a8] sm:$0xff]
  %v124 = vld [vmem:[%s1 + $0x2b0] sm:$0xff]
  %v125 = vld [vmem:[%s1 + $0x2b8] sm:$0xff]
  %v126 = vld [vmem:[%s1 + $0x2c0] sm:$0xff]
  %v127 = vld [vmem:[%s1 + $0x2c8] sm:$0xff]
  %v128 = vld [vmem:[%s1 + $0x2d0] sm:$0xff]
  %v129 = vld [vmem:[%s1 + $0x2d8] sm:$0xff]
  %v130 = vld [vmem:[%s1 + $0x2e0] sm:$0xff]
  %v131 = vld [vmem:[%s1 + $0x2e8] sm:$0xff]
  %v132 = vld [vmem:[%s1 + $0x2f0] sm:$0xff]
  %v133 = vld [vmem:[%s1 + $0x2f8] sm:$0xff]
  %v134 = vld [vmem:[%s1 + $0x300] sm:$0xff]
  %v135 = vld [vmem:[%s1 + $0x308] sm:$0xff]
  %v136 = vld [vmem:[%s1 + $0x310] sm:$0xff]
  %v137 = vld [vmem:[%s1 + $0x318] sm:$0xff]
  %v138 = vld [vmem:[%s1 + $0x320] sm:$0xff]
  %v139 = vld [vmem:[%s1 + $0x328] sm:$0xff]
  %v140 = vld [vmem:[%s1 + $0x330] sm:$0xff]
  %v141 = vld [vmem:[%s1 + $0x338] sm:$0xff]
  %v142 = vld [vmem:[%s1 + $0x340] sm:$0xff]
  %v143 = vld [vmem:[%s1 + $0x348] sm:$0xff]
  %v144 = vld [vmem:[%s1 + $0x350] sm:$0xff]
  %v145 = vld [vmem:[%s1 + $0x358] sm:$0xff]
  %v146 = vld [vmem:[%s1 + $0x360] sm:$0xff]
  %v147 = vld [vmem:[%s1 + $0x368] sm:$0xff]
  %v148 = vld [vmem:[%s1 + $0x370] sm:$0xff]
  %v149 = vld [vmem:[%s1 + $0x378] sm:$0xff]
  %v150 = vld [vmem:[%s1 + $0x380] sm:$0xff]
  %v151 = vld [vmem:[%s1 + $0x388] sm:$0xff]
  %v152 = vld [vmem:[%s1 + $0x390] sm:$0xff]
  %v153 = vld [vmem:[%s1 + $0x398] sm:$0xff]
  %v154 = vld [vmem:[%s1 + $0x3a0] sm:$0xff]
  %v155 = vld [vmem:[%s1 + $0x3a8] sm:$0xff]
  %v156 = vld [vmem:[%s1 + $0x3b0] sm:$0xff]
  %v157 = vld [vmem:[%s1 + $0x3b8] sm:$0xff]
  %v158 = vld [vmem:[%s1 + $0x3c0] sm:$0xff]
  %v159 = vld [vmem:[%s1 + $0x3c8] sm:$0xff]
  %v160 = vld [vmem:[%s1 + $0x3d0] sm:$0xff]
  %v161 = vld [vmem:[%s1 + $0x3d8] sm:$0xff]
  %v162 = vld [vmem:[%s1 + $0x3e0] sm:$0xff]
  %v163 = vld [vmem:[%s1 + $0x3e8] sm:$0xff]
  %v164 = vld [vmem:[%s1 + $0x3f0] sm:$0xff]
  %v165 = vld [vmem:[%s1 + $0x3f8] sm:$0xff]
  %v166 = vld [vmem:[%s1 + $0x400] sm:$0xff]
  %v167 = vld [vmem:[%s1 + $0x408] sm:$0xff]
  %v168 = vld [vmem:[%s1 + $0x410] sm:$0xff]
  %v169 = vld [vmem:[%s1 + $0x418] sm:$0xff]
  %v170 = vld [vmem:[%s1 + $0x420] sm:$0xff]
  %v171 = vld [vmem:[%s1 + $0x428] sm:$0xff]
  %v172 = vld [vmem:[%s1 + $0x430] sm:$0xff]
  %v173 = vld [vmem:[%s1 + $0x438] sm:$0xff]
  %v174 = vld [vmem:[%s1 + $0x440] sm:$0xff]
  %v175 = vld [vmem:[%s1 + $0x448] sm:$0xff]
  %v176 = vld [vmem:[%s1 + $0x450] sm:$0xff]
  %v177 = vld [vmem:[%s1 + $0x458] sm:$0xff]
  %v178 = vld [vmem:[%s1 + $0x460] sm:$0xff]
  %v179 = vld [vmem:[%s1 + $0x468] sm:$0xff]
  %v180 = vld [vmem:[%s1 + $0x470] sm:$0xff]
  %v181 = vld [vmem:[%s1 + $0x478] sm:$0xff]
  %v182 = vld [vmem:[%s1 + $0x480] sm:$0xff]
  %v183 = vld [vmem:[%s1 + $0x488] sm:$0xff]
  %v184 = vld [vmem:[%s1 + $0x490] sm:$0xff]
  %v185 = vld [vmem:[%s1 + $0x498] sm:$0xff]
  %v186 = vld [vmem:[%s1 + $0x4a0] sm:$0xff]
  %v187 = vld [vmem:[%s1 + $0x4a8] sm:$0xff]
  %v188 = vld [vmem:[%s1 + $0x4b0] sm:$0xff]
  %v189 = vld [vmem:[%s1 + $0x4b8] sm:$0xff]
  %v190 = vld [vmem:[%s1 + $0x4c0] sm:$0xff]
  %v191 = vld [vmem:[%s1 + $0x4c8] sm:$0xff]
  %v192 = vld [vmem:[%s1 + $0x4d0] sm:$0xff]
  %v193 = vld [vmem:[%s1 + $0x4d8] sm:$0xff]
  %v194 = vld [vmem:[%s1 + $0x4e0] sm:$0xff]
  %v195 = vld [vmem:[%s1 + $0x4e8] sm:$0xff]
  %v196 = vld [vmem:[%s1 + $0x4f0] sm:$0xff]
  %v197 = vld [vmem:[%s1 + $0x4f8] sm:$0xff]
  %v198 = vld [vmem:[%s1 + $0x500] sm:$0xff]
  %v199 = vld [vmem:[%s1 + $0x508] sm:$0xff]
  %v200 = vld [vmem:[%s1 + $0x510] sm:$0xff]
  %v201 = vld [vmem:[%s1 + $0x518] sm:$0xff]
  %v202 = vld [vmem:[%s1 + $0x520] sm:$0xff]
  %v203 = vld [vmem:[%s1 + $0x528] sm:$0xff]
  %v204 = vld [vmem:[%s1 + $0x530] sm:$0xff]
  %v205 = vld [vmem:[%s1 + $0x538] sm:$0xff]
  %v206 = vld [vmem:[%s1 + $0x540] sm:$0xff]
  %v207 = vld [vmem:[%s1 + $0x548] sm:$0xff]
  %v208 = vld [vmem:[%s1 + $0x550] sm:$0xff]
  %v209 = vld [vmem:[%s1 + $0x558] sm:$0xff]
  %v210 = vld [vmem:[%s1 + $0x560] sm:$0xff]
  %v211 = vld [vmem:[%s1 + $0x568] sm:$0xff]
  %v212 = vld [vmem:[%s1 + $0x570] sm:$0xff]
  %v213 = vld [vmem:[%s1 + $0x578] sm:$0xff]
  %v214 = vld [vmem:[%s1 + $0x580] sm:$0xff]
  %v215 = vld [vmem:[%s1 + $0x588] sm:$0xff]
  %v216 = vld [vmem:[%s1 + $0x590] sm:$0xff]
  %v217 = vld [vmem:[%s1 + $0x598] sm:$0xff]
  %v218 = vld [vmem:[%s1 + $0x5a0] sm:$0xff]
  %v219 = vld [vmem:[%s1 + $0x5a8] sm:$0xff]
  %v220 = vld [vmem:[%s1 + $0x5b0] sm:$0xff]
  %v221 = vld [vmem:[%s1 + $0x5b8] sm:$0xff]
  %v222 = vld [vmem:[%s1 + $0x5c0] sm:$0xff]
  %v223 = vld [vmem:[%s1 + $0x5c8] sm:$0xff]
  %v224 = vld [vmem:[%s1 + $0x5d0] sm:$0xff]
  %v225 = vld [vmem:[%s1 + $0x5d8] sm:$0xff]
  %v226 = vld [vmem:[%s1 + $0x5e0] sm:$0xff]
  %v227 = vld [vmem:[%s1 + $0x5e8] sm:$0xff]
  %v228 = vld [vmem:[%s1 + $0x5f0] sm:$0xff]
  %v229 = vld [vmem:[%s1 + $0x5f8] sm:$0xff]
  %v230 = vld [vmem:[%s1 + $0x600] sm:$0xff]
  %v231 = vld [vmem:[%s1 + $0x608] sm:$0xff]
  %v232 = vld [vmem:[%s1 + $0x610] sm:$0xff]
  %v233 = vld [vmem:[%s1 + $0x618] sm:$0xff]
  %v234 = vld [vmem:[%s1 + $0x620] sm:$0xff]
  %v235 = vld [vmem:[%s1 + $0x628] sm:$0xff]
  %v236 = vld [vmem:[%s1 + $0x630] sm:$0xff]
  %v237 = vld [vmem:[%s1 + $0x638] sm:$0xff]
  %v238 = vld [vmem:[%s1 + $0x640] sm:$0xff]
  %v239 = vld [vmem:[%s1 + $0x648] sm:$0xff]
  %v240 = vld [vmem:[%s1 + $0x650] sm:$0xff]
  %v241 = vld [vmem:[%s1 + $0x658] sm:$0xff]
  %v242 = vld [vmem:[%s1 + $0x660] sm:$0xff]
  %v243 = vld [vmem:[%s1 + $0x668] sm:$0xff]
  %v244 = vld [vmem:[%s1 + $0x670] sm:$0xff]
  %v245 = vld [vmem:[%s1 + $0x678] sm:$0xff]
  %v246 = vld [vmem:[%s1 + $0x680] sm:$0xff]
  %v247 = vld [vmem:[%s1 + $0x688] sm:$0xff]
  %v248 = vld [vmem:[%s1 + $0x690] sm:$0xff]
  %v249 = vld [vmem:[%s1 + $0x698] sm:$0xff]
  %v250 = vld [vmem:[%s1 + $0x6a0] sm:$0xff]
  %v251 = vld [vmem:[%s1 + $0x6a8] sm:$0xff]
  %v252 = vld [vmem:[%s1 + $0x6b0] sm:$0xff]
  %v253 = vld [vmem:[%s1 + $0x6b8] sm:$0xff]
  %v254 = vld [vmem:[%s1 + $0x6c0] sm:$0xff]
  %v255 = vld [vmem:[%s1 + $0x6c8] sm:$0xff]
  %v256 = vld [vmem:[%s1 + $0x6d0] sm:$0xff]
  %v257 = vld [vmem:[%s1 + $0x6d8] sm:$0xff]
  %v258 = vld [vmem:[%s1 + $0x6e0] sm:$0xff]
  %v259 = vld [vmem:[%s1 + $0x6e8] sm:$0xff]
  %v260 = vld [vmem:[%s1 + $0x6f0] sm:$0xff]
  %v261 = vld [vmem:[%s1 + $0x6f8] sm:$0xff]
  %v262 = vld [vmem:[%s1 + $0x700] sm:$0xff]
  %v263 = vld [vmem:[%s1 + $0x708] sm:$0xff]
  %v264 = vld [vmem:[%s1 + $0x710] sm:$0xff]
  %v265 = vld [vmem:[%s1 + $0x718] sm:$0xff]
  %v266 = vld [vmem:[%s1 + $0x720] sm:$0xff]
  %v267 = vld [vmem:[%s1 + $0x728] sm:$0xff]
  %v268 = vld [vmem:[%s1 + $0x730] sm:$0xff]
  %v269 = vld [vmem:[%s1 + $0x738] sm:$0xff]
  %v270 = vld [vmem:[%s1 + $0x740] sm:$0xff]
  %v271 = vld [vmem:[%s1 + $0x748] sm:$0xff]
  %v272 = vld [vmem:[%s1 + $0x750] sm:$0xff]
  %v273 = vld [vmem:[%s1 + $0x758] sm:$0xff]
  %v274 = vld [vmem:[%s1 + $0x760] sm:$0xff]
  %v275 = vld [vmem:[%s1 + $0x768] sm:$0xff]
  %v276 = vld [vmem:[%s1 + $0x770] sm:$0xff]
  %v277 = vld [vmem:[%s1 + $0x778] sm:$0xff]
  %v278 = vld [vmem:[%s1 + $0x780] sm:$0xff]
  %v279 = vld [vmem:[%s1 + $0x788] sm:$0xff]
  %v280 = vld [vmem:[%s1 + $0x790] sm:$0xff]
  %v281 = vld [vmem:[%s1 + $0x798] sm:$0xff]
  %v282 = vld [vmem:[%s1 + $0x7a0] sm:$0xff]
  %v283 = vld [vmem:[%s1 + $0x7a8] sm:$0xff]
  %v284 = vld [vmem:[%s1 + $0x7b0] sm:$0xff]
  %v285 = vld [vmem:[%s1 + $0x7b8] sm:$0xff]
  %v286 = vld [vmem:[%s1 + $0x7c0] sm:$0xff]
  %v287 = vld [vmem:[%s1 + $0x7c8] sm:$0xff]
  %v288 = vld [vmem:[%s1 + $0x7d0] sm:$0xff]
  %v289 = vld [vmem:[%s1 + $0x7d8] sm:$0xff]
  %v290 = vld [vmem:[%s1 + $0x7e0] sm:$0xff]
  %v291 = vld [vmem:[%s1 + $0x7e8] sm:$0xff]
  %v292 = vld [vmem:[%s1 + $0x7f0] sm:$0xff]
  %v293 = vld [vmem:[%s1 + $0x7f8] sm:$0xff]
  %v294 = vld [vmem:[%s1 + $0x800] sm:$0xff]
  %v295 = vld [vmem:[%s1 + $0x808] sm:$0xff]
  %v296 = vld [vmem:[%s1 + $0x810] sm:$0xff]
  %v297 = vld [vmem:[%s1 + $0x818] sm:$0xff]
  %v298 = vld [vmem:[%s1 + $0x820] sm:$0xff]
  %v299 = vld [vmem:[%s1 + $0x828] sm:$0xff]
  %v300 = vld [vmem:[%s1 + $0x830] sm:$0xff]
  %v301 = vld [vmem:[%s1 + $0x838] sm:$0xff]
  %v302 = vld [vmem:[%s1 + $0x840] sm:$0xff]
  %v303 = vld [vmem:[%s1 + $0x848] sm:$0xff]
  %v304 = vld [vmem:[%s1 + $0x850] sm:$0xff]
  %v305 = vld [vmem:[%s1 + $0x858] sm:$0xff]
  %v306 = vld [vmem:[%s1 + $0x860] sm:$0xff]
  %v307 = vld [vmem:[%s1 + $0x868] sm:$0xff]
  %v308 = vld [vmem:[%s1 + $0x870] sm:$0xff]
  %v309 = vld [vmem:[%s1 + $0x878] sm:$0xff]
  %v310 = vld [vmem:[%s1 + $0x880] sm:$0xff]
  %v311 = vld [vmem:[%s1 + $0x888] sm:$0xff]
  %v312 = vld [vmem:[%s1 + $0x890] sm:$0xff]
  %v313 = vld [vmem:[%s1 + $0x898] sm:$0xff]
  %v314 = vld [vmem:[%s1 + $0x8a0] sm:$0xff]
  %v315 = vld [vmem:[%s1 + $0x8a8] sm:$0xff]
  %v316 = vld [vmem:[%s1 + $0x8b0] sm:$0xff]
  %v317 = vld [vmem:[%s1 + $0x8b8] sm:$0xff]
  %v318 = vld [vmem:[%s1 + $0x8c0] sm:$0xff]
  %v319 = vld [vmem:[%s1 + $0x8c8] sm:$0xff]
  %v320 = vld [vmem:[%s1 + $0x8d0] sm:$0xff]
  %v321 = vld [vmem:[%s1 + $0x8d8] sm:$0xff]
  %v322 = vld [vmem:[%s1 + $0x8e0] sm:$0xff]
  %v323 = vld [vmem:[%s1 + $0x8e8] sm:$0xff]
  %v324 = vld [vmem:[%s1 + $0x8f0] sm:$0xff]
  %v325 = vld [vmem:[%s1 + $0x8f8] sm:$0xff]
  %v326 = vld [vmem:[%s2] sm:$0x3f]
  %v328 = vlaneseq
  %v329 = vshrl.u32 %v328, 7
  %v330 = vsub.s32 0, %v329
  %v331 = vrot.slane %v326, %v330
  %v332 = vlaneseq
  %v333 = vshrl.u32 %v332, 7
  %v334 = vsub.s32 1, %v333
  %v335 = vrot.slane %v326, %v334
  %v336 = vlaneseq
  %v337 = vshrl.u32 %v336, 7
  %v338 = vsub.s32 2, %v337
  %v339 = vrot.slane %v326, %v338
  %v340 = vlaneseq
  %v341 = vshrl.u32 %v340, 7
  %v342 = vsub.s32 3, %v341
  %v343 = vrot.slane %v326, %v342
  %v344 = vlaneseq
  %v345 = vshrl.u32 %v344, 7
  %v346 = vsub.s32 4, %v345
  %v347 = vrot.slane %v326, %v346
  %v348 = vlaneseq
  %v349 = vshrl.u32 %v348, 7
  %v350 = vsub.s32 5, %v349
  %v351 = vrot.slane %v326, %v350
  %v646 = vunpack.c.l.b16 %v38
  %v647 = vunpack.c.h.b16 %v38
  %v648 = vunpack.c.l.b16 %v39
  %v649 = vunpack.c.h.b16 %v39
  %v650 = vunpack.c.l.b16 %v40
  %v651 = vunpack.c.h.b16 %v40
  %v652 = vunpack.c.l.b16 %v41
  %v653 = vunpack.c.h.b16 %v41
  %v654 = vunpack.c.l.b16 %v42
  %v655 = vunpack.c.h.b16 %v42
  %v656 = vunpack.c.l.b16 %v43
  %v657 = vunpack.c.h.b16 %v43
  %v658 = vunpack.c.l.b16 %v44
  %v659 = vunpack.c.h.b16 %v44
  %v660 = vunpack.c.l.b16 %v45
  %v661 = vunpack.c.h.b16 %v45
  %v662 = vunpack.c.l.b16 %v46
  %v663 = vunpack.c.h.b16 %v46
  %v664 = vunpack.c.l.b16 %v47
  %v665 = vunpack.c.h.b16 %v47
  %v666 = vunpack.c.l.b16 %v48
  %v667 = vunpack.c.h.b16 %v48
  %v668 = vunpack.c.l.b16 %v49
  %v669 = vunpack.c.h.b16 %v49
  %v670 = vunpack.c.l.b16 %v50
  %v671 = vunpack.c.h.b16 %v50
  %v672 = vunpack.c.l.b16 %v51
  %v673 = vunpack.c.h.b16 %v51
  %v674 = vunpack.c.l.b16 %v52
  %v675 = vunpack.c.h.b16 %v52
  %v676 = vunpack.c.l.b16 %v53
  %v677 = vunpack.c.h.b16 %v53
  %v678 = vunpack.c.l.b16 %v54
  %v679 = vunpack.c.h.b16 %v54
  %v680 = vunpack.c.l.b16 %v55
  %v681 = vunpack.c.h.b16 %v55
  %v682 = vunpack.c.l.b16 %v56
  %v683 = vunpack.c.h.b16 %v56
  %v684 = vunpack.c.l.b16 %v57
  %v685 = vunpack.c.h.b16 %v57
  %v686 = vunpack.c.l.b16 %v58
  %v687 = vunpack.c.h.b16 %v58
  %v688 = vunpack.c.l.b16 %v59
  %v689 = vunpack.c.h.b16 %v59
  %v690 = vunpack.c.l.b16 %v60
  %v691 = vunpack.c.h.b16 %v60
  %v692 = vunpack.c.l.b16 %v61
  %v693 = vunpack.c.h.b16 %v61
  %v694 = vunpack.c.l.b16 %v62
  %v695 = vunpack.c.h.b16 %v62
  %v696 = vunpack.c.l.b16 %v63
  %v697 = vunpack.c.h.b16 %v63
  %v698 = vunpack.c.l.b16 %v64
  %v699 = vunpack.c.h.b16 %v64
  %v700 = vunpack.c.l.b16 %v65
  %v701 = vunpack.c.h.b16 %v65
  %v702 = vunpack.c.l.b16 %v66
  %v703 = vunpack.c.h.b16 %v66
  %v704 = vunpack.c.l.b16 %v67
  %v705 = vunpack.c.h.b16 %v67
  %v706 = vunpack.c.l.b16 %v68
  %v707 = vunpack.c.h.b16 %v68
  %v708 = vunpack.c.l.b16 %v69
  %v709 = vunpack.c.h.b16 %v69
  %v710 = vunpack.c.l.b16 %v70
  %v711 = vunpack.c.h.b16 %v70
  %v712 = vunpack.c.l.b16 %v71
  %v713 = vunpack.c.h.b16 %v71
  %v714 = vunpack.c.l.b16 %v72
  %v715 = vunpack.c.h.b16 %v72
  %v716 = vunpack.c.l.b16 %v73
  %v717 = vunpack.c.h.b16 %v73
  %v718 = vunpack.c.l.b16 %v74
  %v719 = vunpack.c.h.b16 %v74
  %v720 = vunpack.c.l.b16 %v75
  %v721 = vunpack.c.h.b16 %v75
  %v722 = vunpack.c.l.b16 %v76
  %v723 = vunpack.c.h.b16 %v76
  %v724 = vunpack.c.l.b16 %v77
  %v725 = vunpack.c.h.b16 %v77
  %v726 = vunpack.c.l.b16 %v78
  %v727 = vunpack.c.h.b16 %v78
  %v728 = vunpack.c.l.b16 %v79
  %v729 = vunpack.c.h.b16 %v79
  %v730 = vunpack.c.l.b16 %v80
  %v731 = vunpack.c.h.b16 %v80
  %v732 = vunpack.c.l.b16 %v81
  %v733 = vunpack.c.h.b16 %v81
  %v734 = vunpack.c.l.b16 %v82
  %v735 = vunpack.c.h.b16 %v82
  %v736 = vunpack.c.l.b16 %v83
  %v737 = vunpack.c.h.b16 %v83
  %v738 = vunpack.c.l.b16 %v84
  %v739 = vunpack.c.h.b16 %v84
  %v740 = vunpack.c.l.b16 %v85
  %v741 = vunpack.c.h.b16 %v85
  %v742 = vunpack.c.l.b16 %v86
  %v743 = vunpack.c.h.b16 %v86
  %v744 = vunpack.c.l.b16 %v87
  %v745 = vunpack.c.h.b16 %v87
  %v746 = vunpack.c.l.b16 %v88
  %v747 = vunpack.c.h.b16 %v88
  %v748 = vunpack.c.l.b16 %v89
  %v749 = vunpack.c.h.b16 %v89
  %v750 = vunpack.c.l.b16 %v90
  %v751 = vunpack.c.h.b16 %v90
  %v752 = vunpack.c.l.b16 %v91
  %v753 = vunpack.c.h.b16 %v91
  %v754 = vunpack.c.l.b16 %v92
  %v755 = vunpack.c.h.b16 %v92
  %v756 = vunpack.c.l.b16 %v93
  %v757 = vunpack.c.h.b16 %v93
  %v758 = vunpack.c.l.b16 %v94
  %v759 = vunpack.c.h.b16 %v94
  %v760 = vunpack.c.l.b16 %v95
  %v761 = vunpack.c.h.b16 %v95
  %v762 = vunpack.c.l.b16 %v96
  %v763 = vunpack.c.h.b16 %v96
  %v764 = vunpack.c.l.b16 %v97
  %v765 = vunpack.c.h.b16 %v97
  %v766 = vunpack.c.l.b16 %v98
  %v767 = vunpack.c.h.b16 %v98
  %v768 = vunpack.c.l.b16 %v99
  %v769 = vunpack.c.h.b16 %v99
  %v770 = vunpack.c.l.b16 %v100
  %v771 = vunpack.c.h.b16 %v100
  %v772 = vunpack.c.l.b16 %v101
  %v773 = vunpack.c.h.b16 %v101
  %v774 = vunpack.c.l.b16 %v102
  %v775 = vunpack.c.h.b16 %v102
  %v776 = vunpack.c.l.b16 %v103
  %v777 = vunpack.c.h.b16 %v103
  %v778 = vunpack.c.l.b16 %v104
  %v779 = vunpack.c.h.b16 %v104
  %v780 = vunpack.c.l.b16 %v105
  %v781 = vunpack.c.h.b16 %v105
  %v782 = vunpack.c.l.b16 %v106
  %v783 = vunpack.c.h.b16 %v106
  %v784 = vunpack.c.l.b16 %v107
  %v785 = vunpack.c.h.b16 %v107
  %v786 = vunpack.c.l.b16 %v108
  %v787 = vunpack.c.h.b16 %v108
  %v788 = vunpack.c.l.b16 %v109
  %v789 = vunpack.c.h.b16 %v109
  %v790 = vunpack.c.l.b16 %v110
  %v791 = vunpack.c.h.b16 %v110
  %v792 = vunpack.c.l.b16 %v111
  %v793 = vunpack.c.h.b16 %v111
  %v794 = vunpack.c.l.b16 %v112
  %v795 = vunpack.c.h.b16 %v112
  %v796 = vunpack.c.l.b16 %v113
  %v797 = vunpack.c.h.b16 %v113
  %v798 = vunpack.c.l.b16 %v114
  %v799 = vunpack.c.h.b16 %v114
  %v800 = vunpack.c.l.b16 %v115
  %v801 = vunpack.c.h.b16 %v115
  %v802 = vunpack.c.l.b16 %v116
  %v803 = vunpack.c.h.b16 %v116
  %v804 = vunpack.c.l.b16 %v117
  %v805 = vunpack.c.h.b16 %v117
  %v806 = vunpack.c.l.b16 %v118
  %v807 = vunpack.c.h.b16 %v118
  %v808 = vunpack.c.l.b16 %v119
  %v809 = vunpack.c.h.b16 %v119
  %v810 = vunpack.c.l.b16 %v120
  %v811 = vunpack.c.h.b16 %v120
  %v812 = vunpack.c.l.b16 %v121
  %v813 = vunpack.c.h.b16 %v121
  %v814 = vunpack.c.l.b16 %v122
  %v815 = vunpack.c.h.b16 %v122
  %v816 = vunpack.c.l.b16 %v123
  %v817 = vunpack.c.h.b16 %v123
  %v818 = vunpack.c.l.b16 %v124
  %v819 = vunpack.c.h.b16 %v124
  %v820 = vunpack.c.l.b16 %v125
  %v821 = vunpack.c.h.b16 %v125
  %v822 = vunpack.c.l.b16 %v126
  %v823 = vunpack.c.h.b16 %v126
  %v824 = vunpack.c.l.b16 %v127
  %v825 = vunpack.c.h.b16 %v127
  %v826 = vunpack.c.l.b16 %v128
  %v827 = vunpack.c.h.b16 %v128
  %v828 = vunpack.c.l.b16 %v129
  %v829 = vunpack.c.h.b16 %v129
  %v830 = vunpack.c.l.b16 %v130
  %v831 = vunpack.c.h.b16 %v130
  %v832 = vunpack.c.l.b16 %v131
  %v833 = vunpack.c.h.b16 %v131
  %v834 = vunpack.c.l.b16 %v132
  %v835 = vunpack.c.h.b16 %v132
  %v836 = vunpack.c.l.b16 %v133
  %v837 = vunpack.c.h.b16 %v133
  %v838 = vunpack.c.l.b16 %v134
  %v839 = vunpack.c.h.b16 %v134
  %v840 = vunpack.c.l.b16 %v135
  %v841 = vunpack.c.h.b16 %v135
  %v842 = vunpack.c.l.b16 %v136
  %v843 = vunpack.c.h.b16 %v136
  %v844 = vunpack.c.l.b16 %v137
  %v845 = vunpack.c.h.b16 %v137
  %v846 = vunpack.c.l.b16 %v138
  %v847 = vunpack.c.h.b16 %v138
  %v848 = vunpack.c.l.b16 %v139
  %v849 = vunpack.c.h.b16 %v139
  %v850 = vunpack.c.l.b16 %v140
  %v851 = vunpack.c.h.b16 %v140
  %v852 = vunpack.c.l.b16 %v141
  %v853 = vunpack.c.h.b16 %v141
  %v854 = vunpack.c.l.b16 %v142
  %v855 = vunpack.c.h.b16 %v142
  %v856 = vunpack.c.l.b16 %v143
  %v857 = vunpack.c.h.b16 %v143
  %v858 = vunpack.c.l.b16 %v144
  %v859 = vunpack.c.h.b16 %v144
  %v860 = vunpack.c.l.b16 %v145
  %v861 = vunpack.c.h.b16 %v145
  %v862 = vunpack.c.l.b16 %v146
  %v863 = vunpack.c.h.b16 %v146
  %v864 = vunpack.c.l.b16 %v147
  %v865 = vunpack.c.h.b16 %v147
  %v866 = vunpack.c.l.b16 %v148
  %v867 = vunpack.c.h.b16 %v148
  %v868 = vunpack.c.l.b16 %v149
  %v869 = vunpack.c.h.b16 %v149
  %v870 = vunpack.c.l.b16 %v150
  %v871 = vunpack.c.h.b16 %v150
  %v872 = vunpack.c.l.b16 %v151
  %v873 = vunpack.c.h.b16 %v151
  %v874 = vunpack.c.l.b16 %v152
  %v875 = vunpack.c.h.b16 %v152
  %v876 = vunpack.c.l.b16 %v153
  %v877 = vunpack.c.h.b16 %v153
  %v878 = vunpack.c.l.b16 %v154
  %v879 = vunpack.c.h.b16 %v154
  %v880 = vunpack.c.l.b16 %v155
  %v881 = vunpack.c.h.b16 %v155
  %v882 = vunpack.c.l.b16 %v156
  %v883 = vunpack.c.h.b16 %v156
  %v884 = vunpack.c.l.b16 %v157
  %v885 = vunpack.c.h.b16 %v157
  %v886 = vunpack.c.l.b16 %v158
  %v887 = vunpack.c.h.b16 %v158
  %v888 = vunpack.c.l.b16 %v159
  %v889 = vunpack.c.h.b16 %v159
  %v890 = vunpack.c.l.b16 %v160
  %v891 = vunpack.c.h.b16 %v160
  %v892 = vunpack.c.l.b16 %v161
  %v893 = vunpack.c.h.b16 %v161
  %v894 = vunpack.c.l.b16 %v162
  %v895 = vunpack.c.h.b16 %v162
  %v896 = vunpack.c.l.b16 %v163
  %v897 = vunpack.c.h.b16 %v163
  %v898 = vunpack.c.l.b16 %v164
  %v899 = vunpack.c.h.b16 %v164
  %v900 = vunpack.c.l.b16 %v165
  %v901 = vunpack.c.h.b16 %v165
  %v902 = vunpack.c.l.b16 %v166
  %v903 = vunpack.c.h.b16 %v166
  %v904 = vunpack.c.l.b16 %v167
  %v905 = vunpack.c.h.b16 %v167
  %v906 = vunpack.c.l.b16 %v168
  %v907 = vunpack.c.h.b16 %v168
  %v908 = vunpack.c.l.b16 %v169
  %v909 = vunpack.c.h.b16 %v169
  %v910 = vunpack.c.l.b16 %v170
  %v911 = vunpack.c.h.b16 %v170
  %v912 = vunpack.c.l.b16 %v171
  %v913 = vunpack.c.h.b16 %v171
  %v914 = vunpack.c.l.b16 %v172
  %v915 = vunpack.c.h.b16 %v172
  %v916 = vunpack.c.l.b16 %v173
  %v917 = vunpack.c.h.b16 %v173
  %v918 = vunpack.c.l.b16 %v174
  %v919 = vunpack.c.h.b16 %v174
  %v920 = vunpack.c.l.b16 %v175
  %v921 = vunpack.c.h.b16 %v175
  %v922 = vunpack.c.l.b16 %v176
  %v923 = vunpack.c.h.b16 %v176
  %v924 = vunpack.c.l.b16 %v177
  %v925 = vunpack.c.h.b16 %v177
  %v926 = vunpack.c.l.b16 %v178
  %v927 = vunpack.c.h.b16 %v178
  %v928 = vunpack.c.l.b16 %v179
  %v929 = vunpack.c.h.b16 %v179
  %v930 = vunpack.c.l.b16 %v180
  %v931 = vunpack.c.h.b16 %v180
  %v932 = vunpack.c.l.b16 %v181
  %v933 = vunpack.c.h.b16 %v181
  %v934 = vunpack.c.l.b16 %v182
  %v935 = vunpack.c.h.b16 %v182
  %v936 = vunpack.c.l.b16 %v183
  %v937 = vunpack.c.h.b16 %v183
  %v938 = vunpack.c.l.b16 %v184
  %v939 = vunpack.c.h.b16 %v184
  %v940 = vunpack.c.l.b16 %v185
  %v941 = vunpack.c.h.b16 %v185
  %v942 = vunpack.c.l.b16 %v186
  %v943 = vunpack.c.h.b16 %v186
  %v944 = vunpack.c.l.b16 %v187
  %v945 = vunpack.c.h.b16 %v187
  %v946 = vunpack.c.l.b16 %v188
  %v947 = vunpack.c.h.b16 %v188
  %v948 = vunpack.c.l.b16 %v189
  %v949 = vunpack.c.h.b16 %v189
  %v950 = vunpack.c.l.b16 %v190
  %v951 = vunpack.c.h.b16 %v190
  %v952 = vunpack.c.l.b16 %v191
  %v953 = vunpack.c.h.b16 %v191
  %v954 = vunpack.c.l.b16 %v192
  %v955 = vunpack.c.h.b16 %v192
  %v956 = vunpack.c.l.b16 %v193
  %v957 = vunpack.c.h.b16 %v193
  %v958 = vunpack.c.l.b16 %v194
  %v959 = vunpack.c.h.b16 %v194
  %v960 = vunpack.c.l.b16 %v195
  %v961 = vunpack.c.h.b16 %v195
  %v962 = vunpack.c.l.b16 %v196
  %v963 = vunpack.c.h.b16 %v196
  %v964 = vunpack.c.l.b16 %v197
  %v965 = vunpack.c.h.b16 %v197
  %v966 = vunpack.c.l.b16 %v198
  %v967 = vunpack.c.h.b16 %v198
  %v968 = vunpack.c.l.b16 %v199
  %v969 = vunpack.c.h.b16 %v199
  %v970 = vunpack.c.l.b16 %v200
  %v971 = vunpack.c.h.b16 %v200
  %v972 = vunpack.c.l.b16 %v201
  %v973 = vunpack.c.h.b16 %v201
  %v974 = vunpack.c.l.b16 %v202
  %v975 = vunpack.c.h.b16 %v202
  %v976 = vunpack.c.l.b16 %v203
  %v977 = vunpack.c.h.b16 %v203
  %v978 = vunpack.c.l.b16 %v204
  %v979 = vunpack.c.h.b16 %v204
  %v980 = vunpack.c.l.b16 %v205
  %v981 = vunpack.c.h.b16 %v205
  %v982 = vunpack.c.l.b16 %v206
  %v983 = vunpack.c.h.b16 %v206
  %v984 = vunpack.c.l.b16 %v207
  %v985 = vunpack.c.h.b16 %v207
  %v986 = vunpack.c.l.b16 %v208
  %v987 = vunpack.c.h.b16 %v208
  %v988 = vunpack.c.l.b16 %v209
  %v989 = vunpack.c.h.b16 %v209
  %v990 = vunpack.c.l.b16 %v210
  %v991 = vunpack.c.h.b16 %v210
  %v992 = vunpack.c.l.b16 %v211
  %v993 = vunpack.c.h.b16 %v211
  %v994 = vunpack.c.l.b16 %v212
  %v995 = vunpack.c.h.b16 %v212
  %v996 = vunpack.c.l.b16 %v213
  %v997 = vunpack.c.h.b16 %v213
  %v998 = vunpack.c.l.b16 %v214
  %v999 = vunpack.c.h.b16 %v214
  %v1000 = vunpack.c.l.b16 %v215
  %v1001 = vunpack.c.h.b16 %v215
  %v1002 = vunpack.c.l.b16 %v216
  %v1003 = vunpack.c.h.b16 %v216
  %v1004 = vunpack.c.l.b16 %v217
  %v1005 = vunpack.c.h.b16 %v217
  %v1006 = vunpack.c.l.b16 %v218
  %v1007 = vunpack.c.h.b16 %v218
  %v1008 = vunpack.c.l.b16 %v219
  %v1009 = vunpack.c.h.b16 %v219
  %v1010 = vunpack.c.l.b16 %v220
  %v1011 = vunpack.c.h.b16 %v220
  %v1012 = vunpack.c.l.b16 %v221
  %v1013 = vunpack.c.h.b16 %v221
  %v1014 = vunpack.c.l.b16 %v222
  %v1015 = vunpack.c.h.b16 %v222
  %v1016 = vunpack.c.l.b16 %v223
  %v1017 = vunpack.c.h.b16 %v223
  %v1018 = vunpack.c.l.b16 %v224
  %v1019 = vunpack.c.h.b16 %v224
  %v1020 = vunpack.c.l.b16 %v225
  %v1021 = vunpack.c.h.b16 %v225
  %v1022 = vunpack.c.l.b16 %v226
  %v1023 = vunpack.c.h.b16 %v226
  %v1024 = vunpack.c.l.b16 %v227
  %v1025 = vunpack.c.h.b16 %v227
  %v1026 = vunpack.c.l.b16 %v228
  %v1027 = vunpack.c.h.b16 %v228
  %v1028 = vunpack.c.l.b16 %v229
  %v1029 = vunpack.c.h.b16 %v229
  %v1030 = vunpack.c.l.b16 %v230
  %v1031 = vunpack.c.h.b16 %v230
  %v1032 = vunpack.c.l.b16 %v231
  %v1033 = vunpack.c.h.b16 %v231
  %v1034 = vunpack.c.l.b16 %v232
  %v1035 = vunpack.c.h.b16 %v232
  %v1036 = vunpack.c.l.b16 %v233
  %v1037 = vunpack.c.h.b16 %v233
  %v1038 = vunpack.c.l.b16 %v234
  %v1039 = vunpack.c.h.b16 %v234
  %v1040 = vunpack.c.l.b16 %v235
  %v1041 = vunpack.c.h.b16 %v235
  %v1042 = vunpack.c.l.b16 %v236
  %v1043 = vunpack.c.h.b16 %v236
  %v1044 = vunpack.c.l.b16 %v237
  %v1045 = vunpack.c.h.b16 %v237
  %v1046 = vunpack.c.l.b16 %v238
  %v1047 = vunpack.c.h.b16 %v238
  %v1048 = vunpack.c.l.b16 %v239
  %v1049 = vunpack.c.h.b16 %v239
  %v1050 = vunpack.c.l.b16 %v240
  %v1051 = vunpack.c.h.b16 %v240
  %v1052 = vunpack.c.l.b16 %v241
  %v1053 = vunpack.c.h.b16 %v241
  %v1054 = vunpack.c.l.b16 %v242
  %v1055 = vunpack.c.h.b16 %v242
  %v1056 = vunpack.c.l.b16 %v243
  %v1057 = vunpack.c.h.b16 %v243
  %v1058 = vunpack.c.l.b16 %v244
  %v1059 = vunpack.c.h.b16 %v244
  %v1060 = vunpack.c.l.b16 %v245
  %v1061 = vunpack.c.h.b16 %v245
  %v1062 = vunpack.c.l.b16 %v246
  %v1063 = vunpack.c.h.b16 %v246
  %v1064 = vunpack.c.l.b16 %v247
  %v1065 = vunpack.c.h.b16 %v247
  %v1066 = vunpack.c.l.b16 %v248
  %v1067 = vunpack.c.h.b16 %v248
  %v1068 = vunpack.c.l.b16 %v249
  %v1069 = vunpack.c.h.b16 %v249
  %v1070 = vunpack.c.l.b16 %v250
  %v1071 = vunpack.c.h.b16 %v250
  %v1072 = vunpack.c.l.b16 %v251
  %v1073 = vunpack.c.h.b16 %v251
  %v1074 = vunpack.c.l.b16 %v252
  %v1075 = vunpack.c.h.b16 %v252
  %v1076 = vunpack.c.l.b16 %v253
  %v1077 = vunpack.c.h.b16 %v253
  %v1078 = vunpack.c.l.b16 %v254
  %v1079 = vunpack.c.h.b16 %v254
  %v1080 = vunpack.c.l.b16 %v255
  %v1081 = vunpack.c.h.b16 %v255
  %v1082 = vunpack.c.l.b16 %v256
  %v1083 = vunpack.c.h.b16 %v256
  %v1084 = vunpack.c.l.b16 %v257
  %v1085 = vunpack.c.h.b16 %v257
  %v1086 = vunpack.c.l.b16 %v258
  %v1087 = vunpack.c.h.b16 %v258
  %v1088 = vunpack.c.l.b16 %v259
  %v1089 = vunpack.c.h.b16 %v259
  %v1090 = vunpack.c.l.b16 %v260
  %v1091 = vunpack.c.h.b16 %v260
  %v1092 = vunpack.c.l.b16 %v261
  %v1093 = vunpack.c.h.b16 %v261
  %v1094 = vunpack.c.l.b16 %v262
  %v1095 = vunpack.c.h.b16 %v262
  %v1096 = vunpack.c.l.b16 %v263
  %v1097 = vunpack.c.h.b16 %v263
  %v1098 = vunpack.c.l.b16 %v264
  %v1099 = vunpack.c.h.b16 %v264
  %v1100 = vunpack.c.l.b16 %v265
  %v1101 = vunpack.c.h.b16 %v265
  %v1102 = vunpack.c.l.b16 %v266
  %v1103 = vunpack.c.h.b16 %v266
  %v1104 = vunpack.c.l.b16 %v267
  %v1105 = vunpack.c.h.b16 %v267
  %v1106 = vunpack.c.l.b16 %v268
  %v1107 = vunpack.c.h.b16 %v268
  %v1108 = vunpack.c.l.b16 %v269
  %v1109 = vunpack.c.h.b16 %v269
  %v1110 = vunpack.c.l.b16 %v270
  %v1111 = vunpack.c.h.b16 %v270
  %v1112 = vunpack.c.l.b16 %v271
  %v1113 = vunpack.c.h.b16 %v271
  %v1114 = vunpack.c.l.b16 %v272
  %v1115 = vunpack.c.h.b16 %v272
  %v1116 = vunpack.c.l.b16 %v273
  %v1117 = vunpack.c.h.b16 %v273
  %v1118 = vunpack.c.l.b16 %v274
  %v1119 = vunpack.c.h.b16 %v274
  %v1120 = vunpack.c.l.b16 %v275
  %v1121 = vunpack.c.h.b16 %v275
  %v1122 = vunpack.c.l.b16 %v276
  %v1123 = vunpack.c.h.b16 %v276
  %v1124 = vunpack.c.l.b16 %v277
  %v1125 = vunpack.c.h.b16 %v277
  %v1126 = vunpack.c.l.b16 %v278
  %v1127 = vunpack.c.h.b16 %v278
  %v1128 = vunpack.c.l.b16 %v279
  %v1129 = vunpack.c.h.b16 %v279
  %v1130 = vunpack.c.l.b16 %v280
  %v1131 = vunpack.c.h.b16 %v280
  %v1132 = vunpack.c.l.b16 %v281
  %v1133 = vunpack.c.h.b16 %v281
  %v1134 = vunpack.c.l.b16 %v282
  %v1135 = vunpack.c.h.b16 %v282
  %v1136 = vunpack.c.l.b16 %v283
  %v1137 = vunpack.c.h.b16 %v283
  %v1138 = vunpack.c.l.b16 %v284
  %v1139 = vunpack.c.h.b16 %v284
  %v1140 = vunpack.c.l.b16 %v285
  %v1141 = vunpack.c.h.b16 %v285
  %v1142 = vunpack.c.l.b16 %v286
  %v1143 = vunpack.c.h.b16 %v286
  %v1144 = vunpack.c.l.b16 %v287
  %v1145 = vunpack.c.h.b16 %v287
  %v1146 = vunpack.c.l.b16 %v288
  %v1147 = vunpack.c.h.b16 %v288
  %v1148 = vunpack.c.l.b16 %v289
  %v1149 = vunpack.c.h.b16 %v289
  %v1150 = vunpack.c.l.b16 %v290
  %v1151 = vunpack.c.h.b16 %v290
  %v1152 = vunpack.c.l.b16 %v291
  %v1153 = vunpack.c.h.b16 %v291
  %v1154 = vunpack.c.l.b16 %v292
  %v1155 = vunpack.c.h.b16 %v292
  %v1156 = vunpack.c.l.b16 %v293
  %v1157 = vunpack.c.h.b16 %v293
  %v1158 = vunpack.c.l.b16 %v294
  %v1159 = vunpack.c.h.b16 %v294
  %v1160 = vunpack.c.l.b16 %v295
  %v1161 = vunpack.c.h.b16 %v295
  %v1162 = vunpack.c.l.b16 %v296
  %v1163 = vunpack.c.h.b16 %v296
  %v1164 = vunpack.c.l.b16 %v297
  %v1165 = vunpack.c.h.b16 %v297
  %v1166 = vunpack.c.l.b16 %v298
  %v1167 = vunpack.c.h.b16 %v298
  %v1168 = vunpack.c.l.b16 %v299
  %v1169 = vunpack.c.h.b16 %v299
  %v1170 = vunpack.c.l.b16 %v300
  %v1171 = vunpack.c.h.b16 %v300
  %v1172 = vunpack.c.l.b16 %v301
  %v1173 = vunpack.c.h.b16 %v301
  %v1174 = vunpack.c.l.b16 %v302
  %v1175 = vunpack.c.h.b16 %v302
  %v1176 = vunpack.c.l.b16 %v303
  %v1177 = vunpack.c.h.b16 %v303
  %v1178 = vunpack.c.l.b16 %v304
  %v1179 = vunpack.c.h.b16 %v304
  %v1180 = vunpack.c.l.b16 %v305
  %v1181 = vunpack.c.h.b16 %v305
  %v1182 = vunpack.c.l.b16 %v306
  %v1183 = vunpack.c.h.b16 %v306
  %v1184 = vunpack.c.l.b16 %v307
  %v1185 = vunpack.c.h.b16 %v307
  %v1186 = vunpack.c.l.b16 %v308
  %v1187 = vunpack.c.h.b16 %v308
  %v1188 = vunpack.c.l.b16 %v309
  %v1189 = vunpack.c.h.b16 %v309
  %v1190 = vunpack.c.l.b16 %v310
  %v1191 = vunpack.c.h.b16 %v310
  %v1192 = vunpack.c.l.b16 %v311
  %v1193 = vunpack.c.h.b16 %v311
  %v1194 = vunpack.c.l.b16 %v312
  %v1195 = vunpack.c.h.b16 %v312
  %v1196 = vunpack.c.l.b16 %v313
  %v1197 = vunpack.c.h.b16 %v313
  %v1198 = vunpack.c.l.b16 %v314
  %v1199 = vunpack.c.h.b16 %v314
  %v1200 = vunpack.c.l.b16 %v315
  %v1201 = vunpack.c.h.b16 %v315
  %v1202 = vunpack.c.l.b16 %v316
  %v1203 = vunpack.c.h.b16 %v316
  %v1204 = vunpack.c.l.b16 %v317
  %v1205 = vunpack.c.h.b16 %v317
  %v1206 = vunpack.c.l.b16 %v318
  %v1207 = vunpack.c.h.b16 %v318
  %v1208 = vunpack.c.l.b16 %v319
  %v1209 = vunpack.c.h.b16 %v319
  %v1210 = vunpack.c.l.b16 %v320
  %v1211 = vunpack.c.h.b16 %v320
  %v1212 = vunpack.c.l.b16 %v321
  %v1213 = vunpack.c.h.b16 %v321
  %v1214 = vunpack.c.l.b16 %v322
  %v1215 = vunpack.c.h.b16 %v322
  %v1216 = vunpack.c.l.b16 %v323
  %v1217 = vunpack.c.h.b16 %v323
  %v1218 = vunpack.c.l.b16 %v324
  %v1219 = vunpack.c.h.b16 %v324
  %v1220 = vunpack.c.l.b16 %v325
  %v1221 = vunpack.c.h.b16 %v325
  %v1222 = vpack.c.b16 %v652, %v646
  %v1223 = vpack.c.b16 %v653, %v647
  %v1224 = vpack.c.b16 %v654, %v648
  %v1225 = vpack.c.b16 %v655, %v649
  %v1226 = vpack.c.b16 %v656, %v650
  %v1227 = vpack.c.b16 %v657, %v651
  %v1228 = vpack.c.b16 %v664, %v658
  %v1229 = vpack.c.b16 %v665, %v659
  %v1230 = vpack.c.b16 %v666, %v660
  %v1231 = vpack.c.b16 %v667, %v661
  %v1232 = vpack.c.b16 %v668, %v662
  %v1233 = vpack.c.b16 %v669, %v663
  %v1234 = vpack.c.b16 %v676, %v670
  %v1235 = vpack.c.b16 %v677, %v671
  %v1236 = vpack.c.b16 %v678, %v672
  %v1237 = vpack.c.b16 %v679, %v673
  %v1238 = vpack.c.b16 %v680, %v674
  %v1239 = vpack.c.b16 %v681, %v675
  %v1240 = vpack.c.b16 %v688, %v682
  %v1241 = vpack.c.b16 %v689, %v683
  %v1242 = vpack.c.b16 %v690, %v684
  %v1243 = vpack.c.b16 %v691, %v685
  %v1244 = vpack.c.b16 %v692, %v686
  %v1245 = vpack.c.b16 %v693, %v687
  %v1246 = vpack.c.b16 %v700, %v694
  %v1247 = vpack.c.b16 %v701, %v695
  %v1248 = vpack.c.b16 %v702, %v696
  %v1249 = vpack.c.b16 %v703, %v697
  %v1250 = vpack.c.b16 %v704, %v698
  %v1251 = vpack.c.b16 %v705, %v699
  %v1252 = vpack.c.b16 %v712, %v706
  %v1253 = vpack.c.b16 %v713, %v707
  %v1254 = vpack.c.b16 %v714, %v708
  %v1255 = vpack.c.b16 %v715, %v709
  %v1256 = vpack.c.b16 %v716, %v710
  %v1257 = vpack.c.b16 %v717, %v711
  %v1258 = vpack.c.b16 %v724, %v718
  %v1259 = vpack.c.b16 %v725, %v719
  %v1260 = vpack.c.b16 %v726, %v720
  %v1261 = vpack.c.b16 %v727, %v721
  %v1262 = vpack.c.b16 %v728, %v722
  %v1263 = vpack.c.b16 %v729, %v723
  %v1264 = vpack.c.b16 %v736, %v730
  %v1265 = vpack.c.b16 %v737, %v731
  %v1266 = vpack.c.b16 %v738, %v732
  %v1267 = vpack.c.b16 %v739, %v733
  %v1268 = vpack.c.b16 %v740, %v734
  %v1269 = vpack.c.b16 %v741, %v735
  %v1270 = vpack.c.b16 %v748, %v742
  %v1271 = vpack.c.b16 %v749, %v743
  %v1272 = vpack.c.b16 %v750, %v744
  %v1273 = vpack.c.b16 %v751, %v745
  %v1274 = vpack.c.b16 %v752, %v746
  %v1275 = vpack.c.b16 %v753, %v747
  %v1276 = vpack.c.b16 %v760, %v754
  %v1277 = vpack.c.b16 %v761, %v755
  %v1278 = vpack.c.b16 %v762, %v756
  %v1279 = vpack.c.b16 %v763, %v757
  %v1280 = vpack.c.b16 %v764, %v758
  %v1281 = vpack.c.b16 %v765, %v759
  %v1282 = vpack.c.b16 %v772, %v766
  %v1283 = vpack.c.b16 %v773, %v767
  %v1284 = vpack.c.b16 %v774, %v768
  %v1285 = vpack.c.b16 %v775, %v769
  %v1286 = vpack.c.b16 %v776, %v770
  %v1287 = vpack.c.b16 %v777, %v771
  %v1288 = vpack.c.b16 %v784, %v778
  %v1289 = vpack.c.b16 %v785, %v779
  %v1290 = vpack.c.b16 %v786, %v780
  %v1291 = vpack.c.b16 %v787, %v781
  %v1292 = vpack.c.b16 %v788, %v782
  %v1293 = vpack.c.b16 %v789, %v783
  %v1294 = vpack.c.b16 %v796, %v790
  %v1295 = vpack.c.b16 %v797, %v791
  %v1296 = vpack.c.b16 %v798, %v792
  %v1297 = vpack.c.b16 %v799, %v793
  %v1298 = vpack.c.b16 %v800, %v794
  %v1299 = vpack.c.b16 %v801, %v795
  %v1300 = vpack.c.b16 %v808, %v802
  %v1301 = vpack.c.b16 %v809, %v803
  %v1302 = vpack.c.b16 %v810, %v804
  %v1303 = vpack.c.b16 %v811, %v805
  %v1304 = vpack.c.b16 %v812, %v806
  %v1305 = vpack.c.b16 %v813, %v807
  %v1306 = vpack.c.b16 %v820, %v814
  %v1307 = vpack.c.b16 %v821, %v815
  %v1308 = vpack.c.b16 %v822, %v816
  %v1309 = vpack.c.b16 %v823, %v817
  %v1310 = vpack.c.b16 %v824, %v818
  %v1311 = vpack.c.b16 %v825, %v819
  %v1312 = vpack.c.b16 %v832, %v826
  %v1313 = vpack.c.b16 %v833, %v827
  %v1314 = vpack.c.b16 %v834, %v828
  %v1315 = vpack.c.b16 %v835, %v829
  %v1316 = vpack.c.b16 %v836, %v830
  %v1317 = vpack.c.b16 %v837, %v831
  %v1318 = vpack.c.b16 %v844, %v838
  %v1319 = vpack.c.b16 %v845, %v839
  %v1320 = vpack.c.b16 %v846, %v840
  %v1321 = vpack.c.b16 %v847, %v841
  %v1322 = vpack.c.b16 %v848, %v842
  %v1323 = vpack.c.b16 %v849, %v843
  %v1324 = vpack.c.b16 %v856, %v850
  %v1325 = vpack.c.b16 %v857, %v851
  %v1326 = vpack.c.b16 %v858, %v852
  %v1327 = vpack.c.b16 %v859, %v853
  %v1328 = vpack.c.b16 %v860, %v854
  %v1329 = vpack.c.b16 %v861, %v855
  %v1330 = vpack.c.b16 %v868, %v862
  %v1331 = vpack.c.b16 %v869, %v863
  %v1332 = vpack.c.b16 %v870, %v864
  %v1333 = vpack.c.b16 %v871, %v865
  %v1334 = vpack.c.b16 %v872, %v866
  %v1335 = vpack.c.b16 %v873, %v867
  %v1336 = vpack.c.b16 %v880, %v874
  %v1337 = vpack.c.b16 %v881, %v875
  %v1338 = vpack.c.b16 %v882, %v876
  %v1339 = vpack.c.b16 %v883, %v877
  %v1340 = vpack.c.b16 %v884, %v878
  %v1341 = vpack.c.b16 %v885, %v879
  %v1342 = vpack.c.b16 %v892, %v886
  %v1343 = vpack.c.b16 %v893, %v887
  %v1344 = vpack.c.b16 %v894, %v888
  %v1345 = vpack.c.b16 %v895, %v889
  %v1346 = vpack.c.b16 %v896, %v890
  %v1347 = vpack.c.b16 %v897, %v891
  %v1348 = vpack.c.b16 %v904, %v898
  %v1349 = vpack.c.b16 %v905, %v899
  %v1350 = vpack.c.b16 %v906, %v900
  %v1351 = vpack.c.b16 %v907, %v901
  %v1352 = vpack.c.b16 %v908, %v902
  %v1353 = vpack.c.b16 %v909, %v903
  %v1354 = vpack.c.b16 %v916, %v910
  %v1355 = vpack.c.b16 %v917, %v911
  %v1356 = vpack.c.b16 %v918, %v912
  %v1357 = vpack.c.b16 %v919, %v913
  %v1358 = vpack.c.b16 %v920, %v914
  %v1359 = vpack.c.b16 %v921, %v915
  %v1360 = vpack.c.b16 %v928, %v922
  %v1361 = vpack.c.b16 %v929, %v923
  %v1362 = vpack.c.b16 %v930, %v924
  %v1363 = vpack.c.b16 %v931, %v925
  %v1364 = vpack.c.b16 %v932, %v926
  %v1365 = vpack.c.b16 %v933, %v927
  %v1366 = vpack.c.b16 %v940, %v934
  %v1367 = vpack.c.b16 %v941, %v935
  %v1368 = vpack.c.b16 %v942, %v936
  %v1369 = vpack.c.b16 %v943, %v937
  %v1370 = vpack.c.b16 %v944, %v938
  %v1371 = vpack.c.b16 %v945, %v939
  %v1372 = vpack.c.b16 %v952, %v946
  %v1373 = vpack.c.b16 %v953, %v947
  %v1374 = vpack.c.b16 %v954, %v948
  %v1375 = vpack.c.b16 %v955, %v949
  %v1376 = vpack.c.b16 %v956, %v950
  %v1377 = vpack.c.b16 %v957, %v951
  %v1378 = vpack.c.b16 %v964, %v958
  %v1379 = vpack.c.b16 %v965, %v959
  %v1380 = vpack.c.b16 %v966, %v960
  %v1381 = vpack.c.b16 %v967, %v961
  %v1382 = vpack.c.b16 %v968, %v962
  %v1383 = vpack.c.b16 %v969, %v963
  %v1384 = vpack.c.b16 %v976, %v970
  %v1385 = vpack.c.b16 %v977, %v971
  %v1386 = vpack.c.b16 %v978, %v972
  %v1387 = vpack.c.b16 %v979, %v973
  %v1388 = vpack.c.b16 %v980, %v974
  %v1389 = vpack.c.b16 %v981, %v975
  %v1390 = vpack.c.b16 %v988, %v982
  %v1391 = vpack.c.b16 %v989, %v983
  %v1392 = vpack.c.b16 %v990, %v984
  %v1393 = vpack.c.b16 %v991, %v985
  %v1394 = vpack.c.b16 %v992, %v986
  %v1395 = vpack.c.b16 %v993, %v987
  %v1396 = vpack.c.b16 %v1000, %v994
  %v1397 = vpack.c.b16 %v1001, %v995
  %v1398 = vpack.c.b16 %v1002, %v996
  %v1399 = vpack.c.b16 %v1003, %v997
  %v1400 = vpack.c.b16 %v1004, %v998
  %v1401 = vpack.c.b16 %v1005, %v999
  %v1402 = vpack.c.b16 %v1012, %v1006
  %v1403 = vpack.c.b16 %v1013, %v1007
  %v1404 = vpack.c.b16 %v1014, %v1008
  %v1405 = vpack.c.b16 %v1015, %v1009
  %v1406 = vpack.c.b16 %v1016, %v1010
  %v1407 = vpack.c.b16 %v1017, %v1011
  %v1408 = vpack.c.b16 %v1024, %v1018
  %v1409 = vpack.c.b16 %v1025, %v1019
  %v1410 = vpack.c.b16 %v1026, %v1020
  %v1411 = vpack.c.b16 %v1027, %v1021
  %v1412 = vpack.c.b16 %v1028, %v1022
  %v1413 = vpack.c.b16 %v1029, %v1023
  %v1414 = vpack.c.b16 %v1036, %v1030
  %v1415 = vpack.c.b16 %v1037, %v1031
  %v1416 = vpack.c.b16 %v1038, %v1032
  %v1417 = vpack.c.b16 %v1039, %v1033
  %v1418 = vpack.c.b16 %v1040, %v1034
  %v1419 = vpack.c.b16 %v1041, %v1035
  %v1420 = vpack.c.b16 %v1048, %v1042
  %v1421 = vpack.c.b16 %v1049, %v1043
  %v1422 = vpack.c.b16 %v1050, %v1044
  %v1423 = vpack.c.b16 %v1051, %v1045
  %v1424 = vpack.c.b16 %v1052, %v1046
  %v1425 = vpack.c.b16 %v1053, %v1047
  %v1426 = vpack.c.b16 %v1060, %v1054
  %v1427 = vpack.c.b16 %v1061, %v1055
  %v1428 = vpack.c.b16 %v1062, %v1056
  %v1429 = vpack.c.b16 %v1063, %v1057
  %v1430 = vpack.c.b16 %v1064, %v1058
  %v1431 = vpack.c.b16 %v1065, %v1059
  %v1432 = vpack.c.b16 %v1072, %v1066
  %v1433 = vpack.c.b16 %v1073, %v1067
  %v1434 = vpack.c.b16 %v1074, %v1068
  %v1435 = vpack.c.b16 %v1075, %v1069
  %v1436 = vpack.c.b16 %v1076, %v1070
  %v1437 = vpack.c.b16 %v1077, %v1071
  %v1438 = vpack.c.b16 %v1084, %v1078
  %v1439 = vpack.c.b16 %v1085, %v1079
  %v1440 = vpack.c.b16 %v1086, %v1080
  %v1441 = vpack.c.b16 %v1087, %v1081
  %v1442 = vpack.c.b16 %v1088, %v1082
  %v1443 = vpack.c.b16 %v1089, %v1083
  %v1444 = vpack.c.b16 %v1096, %v1090
  %v1445 = vpack.c.b16 %v1097, %v1091
  %v1446 = vpack.c.b16 %v1098, %v1092
  %v1447 = vpack.c.b16 %v1099, %v1093
  %v1448 = vpack.c.b16 %v1100, %v1094
  %v1449 = vpack.c.b16 %v1101, %v1095
  %v1450 = vpack.c.b16 %v1108, %v1102
  %v1451 = vpack.c.b16 %v1109, %v1103
  %v1452 = vpack.c.b16 %v1110, %v1104
  %v1453 = vpack.c.b16 %v1111, %v1105
  %v1454 = vpack.c.b16 %v1112, %v1106
  %v1455 = vpack.c.b16 %v1113, %v1107
  %v1456 = vpack.c.b16 %v1120, %v1114
  %v1457 = vpack.c.b16 %v1121, %v1115
  %v1458 = vpack.c.b16 %v1122, %v1116
  %v1459 = vpack.c.b16 %v1123, %v1117
  %v1460 = vpack.c.b16 %v1124, %v1118
  %v1461 = vpack.c.b16 %v1125, %v1119
  %v1462 = vpack.c.b16 %v1132, %v1126
  %v1463 = vpack.c.b16 %v1133, %v1127
  %v1464 = vpack.c.b16 %v1134, %v1128
  %v1465 = vpack.c.b16 %v1135, %v1129
  %v1466 = vpack.c.b16 %v1136, %v1130
  %v1467 = vpack.c.b16 %v1137, %v1131
  %v1468 = vpack.c.b16 %v1144, %v1138
  %v1469 = vpack.c.b16 %v1145, %v1139
  %v1470 = vpack.c.b16 %v1146, %v1140
  %v1471 = vpack.c.b16 %v1147, %v1141
  %v1472 = vpack.c.b16 %v1148, %v1142
  %v1473 = vpack.c.b16 %v1149, %v1143
  %v1474 = vpack.c.b16 %v1156, %v1150
  %v1475 = vpack.c.b16 %v1157, %v1151
  %v1476 = vpack.c.b16 %v1158, %v1152
  %v1477 = vpack.c.b16 %v1159, %v1153
  %v1478 = vpack.c.b16 %v1160, %v1154
  %v1479 = vpack.c.b16 %v1161, %v1155
  %v1480 = vpack.c.b16 %v1168, %v1162
  %v1481 = vpack.c.b16 %v1169, %v1163
  %v1482 = vpack.c.b16 %v1170, %v1164
  %v1483 = vpack.c.b16 %v1171, %v1165
  %v1484 = vpack.c.b16 %v1172, %v1166
  %v1485 = vpack.c.b16 %v1173, %v1167
  %v1486 = vpack.c.b16 %v1180, %v1174
  %v1487 = vpack.c.b16 %v1181, %v1175
  %v1488 = vpack.c.b16 %v1182, %v1176
  %v1489 = vpack.c.b16 %v1183, %v1177
  %v1490 = vpack.c.b16 %v1184, %v1178
  %v1491 = vpack.c.b16 %v1185, %v1179
  %v1492 = vpack.c.b16 %v1192, %v1186
  %v1493 = vpack.c.b16 %v1193, %v1187
  %v1494 = vpack.c.b16 %v1194, %v1188
  %v1495 = vpack.c.b16 %v1195, %v1189
  %v1496 = vpack.c.b16 %v1196, %v1190
  %v1497 = vpack.c.b16 %v1197, %v1191
  %v1498 = vpack.c.b16 %v1204, %v1198
  %v1499 = vpack.c.b16 %v1205, %v1199
  %v1500 = vpack.c.b16 %v1206, %v1200
  %v1501 = vpack.c.b16 %v1207, %v1201
  %v1502 = vpack.c.b16 %v1208, %v1202
  %v1503 = vpack.c.b16 %v1209, %v1203
  %v1504 = vpack.c.b16 %v1216, %v1210
  %v1505 = vpack.c.b16 %v1217, %v1211
  %v1506 = vpack.c.b16 %v1218, %v1212
  %v1507 = vpack.c.b16 %v1219, %v1213
  %v1508 = vpack.c.b16 %v1220, %v1214
  %v1509 = vpack.c.b16 %v1221, %v1215
  %1798 = vmatprep.subr.bf16.mxu0 %v1265
  %1799 = vmatpush1.bf16.msra.mxu0 %v1264
  %1800 = vmatprep.subr.bf16.mxu0 %v1259
  %1801 = vmatpush1.bf16.msra.mxu0 %v1258
  %1802 = vmatprep.subr.bf16.mxu0 %v1253
  %1803 = vmatpush1.bf16.msra.mxu0 %v1252
  %1804 = vmatprep.subr.bf16.mxu0 %v1247
  %1805 = vmatpush1.bf16.msra.mxu0 %v1246
  %1806 = vmatprep.subr.bf16.mxu0 %v1241
  %1807 = vmatpush1.bf16.msra.mxu0 %v1240
  %1808 = vmatprep.subr.bf16.mxu0 %v1235
  %1809 = vmatpush1.bf16.msra.mxu0 %v1234
  %1810 = vmatprep.subr.bf16.mxu0 %v1229
  %1811 = vmatpush1.bf16.msra.mxu0 %v1228
  %1812 = vmatprep.subr.bf16.mxu0 %v1223
  %1813 = vmatpush1.bf16.msra.mxu0 %v1222
  %1814 = vmatprep.subr.bf16.mxu0 %v1313
  %1815 = vmatpush2.bf16.msra.mxu0 %v1312
  %1816 = vmatprep.subr.bf16.mxu0 %v1307
  %1817 = vmatpush2.bf16.msra.mxu0 %v1306
  %1818 = vmatprep.subr.bf16.mxu0 %v1301
  %1819 = vmatpush2.bf16.msra.mxu0 %v1300
  %1820 = vmatprep.subr.bf16.mxu0 %v1295
  %1821 = vmatpush2.bf16.msra.mxu0 %v1294
  %1822 = vmatprep.subr.bf16.mxu0 %v1289
  %1823 = vmatpush2.bf16.msra.mxu0 %v1288
  %1824 = vmatprep.subr.bf16.mxu0 %v1283
  %1825 = vmatpush2.bf16.msra.mxu0 %v1282
  %1826 = vmatprep.subr.bf16.mxu0 %v1277
  %1827 = vmatpush2.bf16.msra.mxu0 %v1276
  %1828 = vmatprep.subr.bf16.mxu0 %v1271
  %1829 = vmatpush2.bf16.msra.mxu0 %v1270
  %1830 = vmatprep.mubr.bf16.mxu0 %v33
  %1831 = vmatmul.mubr.bf16.gmra.mxu0 %v32
  %v1832 = vpop.f32.mrf.mxu0
  %v1833 = vadd.f32 %v331, %v1832
  %v1834 = vpop.f32.mrf.mxu0
  %v1835 = vadd.f32 %v335, %v1834
  %v1836 = vpop.f32.mrf.mxu0
  %v1837 = vpop.f32.mrf.mxu0
  %1838 = vdwg.mxu0
  %1839 = vmatprep.subr.bf16.mxu0 %v1361
  %1840 = vmatpush1.bf16.msra.mxu0 %v1360
  %1841 = vmatprep.subr.bf16.mxu0 %v1355
  %1842 = vmatpush1.bf16.msra.mxu0 %v1354
  %1843 = vmatprep.subr.bf16.mxu0 %v1349
  %1844 = vmatpush1.bf16.msra.mxu0 %v1348
  %1845 = vmatprep.subr.bf16.mxu0 %v1343
  %1846 = vmatpush1.bf16.msra.mxu0 %v1342
  %1847 = vmatprep.subr.bf16.mxu0 %v1337
  %1848 = vmatpush1.bf16.msra.mxu0 %v1336
  %1849 = vmatprep.subr.bf16.mxu0 %v1331
  %1850 = vmatpush1.bf16.msra.mxu0 %v1330
  %1851 = vmatprep.subr.bf16.mxu0 %v1325
  %1852 = vmatpush1.bf16.msra.mxu0 %v1324
  %1853 = vmatprep.subr.bf16.mxu0 %v1319
  %1854 = vmatpush1.bf16.msra.mxu0 %v1318
  %1855 = vmatprep.subr.bf16.mxu0 %v1409
  %1856 = vmatpush2.bf16.msra.mxu0 %v1408
  %1857 = vmatprep.subr.bf16.mxu0 %v1403
  %1858 = vmatpush2.bf16.msra.mxu0 %v1402
  %1859 = vmatprep.subr.bf16.mxu0 %v1397
  %1860 = vmatpush2.bf16.msra.mxu0 %v1396
  %1861 = vmatprep.subr.bf16.mxu0 %v1391
  %1862 = vmatpush2.bf16.msra.mxu0 %v1390
  %1863 = vmatprep.subr.bf16.mxu0 %v1385
  %1864 = vmatpush2.bf16.msra.mxu0 %v1384
  %1865 = vmatprep.subr.bf16.mxu0 %v1379
  %1866 = vmatpush2.bf16.msra.mxu0 %v1378
  %1867 = vmatprep.subr.bf16.mxu0 %v1373
  %1868 = vmatpush2.bf16.msra.mxu0 %v1372
  %1869 = vmatprep.subr.bf16.mxu0 %v1367
  %1870 = vmatpush2.bf16.msra.mxu0 %v1366
  %1871 = vmatprep.mubr.bf16.mxu0 %v35
  %1872 = vmatmul.mubr.bf16.gmra.mxu0 %v34
  %v1873 = vpop.f32.mrf.mxu0
  %v1874 = vadd.f32 %v1833, %v1873
  %v1875 = vpop.f32.mrf.mxu0
  %v1876 = vadd.f32 %v1835, %v1875
  %v1877 = vpop.f32.mrf.mxu0
  %v1878 = vpop.f32.mrf.mxu0
  %1879 = vdwg.mxu0
  %1880 = vmatprep.subr.bf16.mxu0 %v1457
  %1881 = vmatpush1.bf16.msra.mxu0 %v1456
  %1882 = vmatprep.subr.bf16.mxu0 %v1451
  %1883 = vmatpush1.bf16.msra.mxu0 %v1450
  %1884 = vmatprep.subr.bf16.mxu0 %v1445
  %1885 = vmatpush1.bf16.msra.mxu0 %v1444
  %1886 = vmatprep.subr.bf16.mxu0 %v1439
  %1887 = vmatpush1.bf16.msra.mxu0 %v1438
  %1888 = vmatprep.subr.bf16.mxu0 %v1433
  %1889 = vmatpush1.bf16.msra.mxu0 %v1432
  %1890 = vmatprep.subr.bf16.mxu0 %v1427
  %1891 = vmatpush1.bf16.msra.mxu0 %v1426
  %1892 = vmatprep.subr.bf16.mxu0 %v1421
  %1893 = vmatpush1.bf16.msra.mxu0 %v1420
  %1894 = vmatprep.subr.bf16.mxu0 %v1415
  %1895 = vmatpush1.bf16.msra.mxu0 %v1414
  %1896 = vmatprep.subr.bf16.mxu0 %v1505
  %1897 = vmatpush2.bf16.msra.mxu0 %v1504
  %1898 = vmatprep.subr.bf16.mxu0 %v1499
  %1899 = vmatpush2.bf16.msra.mxu0 %v1498
  %1900 = vmatprep.subr.bf16.mxu0 %v1493
  %1901 = vmatpush2.bf16.msra.mxu0 %v1492
  %1902 = vmatprep.subr.bf16.mxu0 %v1487
  %1903 = vmatpush2.bf16.msra.mxu0 %v1486
  %1904 = vmatprep.subr.bf16.mxu0 %v1481
  %1905 = vmatpush2.bf16.msra.mxu0 %v1480
  %1906 = vmatprep.subr.bf16.mxu0 %v1475
  %1907 = vmatpush2.bf16.msra.mxu0 %v1474
  %1908 = vmatprep.subr.bf16.mxu0 %v1469
  %1909 = vmatpush2.bf16.msra.mxu0 %v1468
  %1910 = vmatprep.subr.bf16.mxu0 %v1463
  %1911 = vmatpush2.bf16.msra.mxu0 %v1462
  %1912 = vmatprep.mubr.bf16.mxu0 %v37
  %1913 = vmatmul.mubr.bf16.gmra.mxu0 %v36
  %v1914 = vpop.f32.mrf.mxu0
  %v1915 = vadd.f32 %v1874, %v1914
  %v1916 = vpop.f32.mrf.mxu0
  %v1917 = vadd.f32 %v1876, %v1916
  %v1918 = vpop.f32.mrf.mxu0
  %v1919 = vpop.f32.mrf.mxu0
  %1920 = vdwg.mxu0
  %1921 = vmatprep.subr.bf16.mxu0 %v1267
  %1922 = vmatpush1.bf16.msra.mxu0 %v1266
  %1923 = vmatprep.subr.bf16.mxu0 %v1261
  %1924 = vmatpush1.bf16.msra.mxu0 %v1260
  %1925 = vmatprep.subr.bf16.mxu0 %v1255
  %1926 = vmatpush1.bf16.msra.mxu0 %v1254
  %1927 = vmatprep.subr.bf16.mxu0 %v1249
  %1928 = vmatpush1.bf16.msra.mxu0 %v1248
  %1929 = vmatprep.subr.bf16.mxu0 %v1243
  %1930 = vmatpush1.bf16.msra.mxu0 %v1242
  %1931 = vmatprep.subr.bf16.mxu0 %v1237
  %1932 = vmatpush1.bf16.msra.mxu0 %v1236
  %1933 = vmatprep.subr.bf16.mxu0 %v1231
  %1934 = vmatpush1.bf16.msra.mxu0 %v1230
  %1935 = vmatprep.subr.bf16.mxu0 %v1225
  %1936 = vmatpush1.bf16.msra.mxu0 %v1224
  %1937 = vmatprep.subr.bf16.mxu0 %v1315
  %1938 = vmatpush2.bf16.msra.mxu0 %v1314
  %1939 = vmatprep.subr.bf16.mxu0 %v1309
  %1940 = vmatpush2.bf16.msra.mxu0 %v1308
  %1941 = vmatprep.subr.bf16.mxu0 %v1303
  %1942 = vmatpush2.bf16.msra.mxu0 %v1302
  %1943 = vmatprep.subr.bf16.mxu0 %v1297
  %1944 = vmatpush2.bf16.msra.mxu0 %v1296
  %1945 = vmatprep.subr.bf16.mxu0 %v1291
  %1946 = vmatpush2.bf16.msra.mxu0 %v1290
  %1947 = vmatprep.subr.bf16.mxu0 %v1285
  %1948 = vmatpush2.bf16.msra.mxu0 %v1284
  %1949 = vmatprep.subr.bf16.mxu0 %v1279
  %1950 = vmatpush2.bf16.msra.mxu0 %v1278
  %1951 = vmatprep.subr.bf16.mxu0 %v1273
  %1952 = vmatpush2.bf16.msra.mxu0 %v1272
  %1953 = vmatprep.mubr.bf16.mxu0 %v33
  %1954 = vmatmul.mubr.bf16.gmra.mxu0 %v32
  %v1955 = vpop.f32.mrf.mxu0
  %v1956 = vadd.f32 %v339, %v1955
  %v1957 = vpop.f32.mrf.mxu0
  %v1958 = vadd.f32 %v343, %v1957
  %v1959 = vpop.f32.mrf.mxu0
  %v1960 = vpop.f32.mrf.mxu0
  %1961 = vdwg.mxu0
  %1962 = vmatprep.subr.bf16.mxu0 %v1363
  %1963 = vmatpush1.bf16.msra.mxu0 %v1362
  %1964 = vmatprep.subr.bf16.mxu0 %v1357
  %1965 = vmatpush1.bf16.msra.mxu0 %v1356
  %1966 = vmatprep.subr.bf16.mxu0 %v1351
  %1967 = vmatpush1.bf16.msra.mxu0 %v1350
  %1968 = vmatprep.subr.bf16.mxu0 %v1345
  %1969 = vmatpush1.bf16.msra.mxu0 %v1344
  %1970 = vmatprep.subr.bf16.mxu0 %v1339
  %1971 = vmatpush1.bf16.msra.mxu0 %v1338
  %1972 = vmatprep.subr.bf16.mxu0 %v1333
  %1973 = vmatpush1.bf16.msra.mxu0 %v1332
  %1974 = vmatprep.subr.bf16.mxu0 %v1327
  %1975 = vmatpush1.bf16.msra.mxu0 %v1326
  %1976 = vmatprep.subr.bf16.mxu0 %v1321
  %1977 = vmatpush1.bf16.msra.mxu0 %v1320
  %1978 = vmatprep.subr.bf16.mxu0 %v1411
  %1979 = vmatpush2.bf16.msra.mxu0 %v1410
  %1980 = vmatprep.subr.bf16.mxu0 %v1405
  %1981 = vmatpush2.bf16.msra.mxu0 %v1404
  %1982 = vmatprep.subr.bf16.mxu0 %v1399
  %1983 = vmatpush2.bf16.msra.mxu0 %v1398
  %1984 = vmatprep.subr.bf16.mxu0 %v1393
  %1985 = vmatpush2.bf16.msra.mxu0 %v1392
  %1986 = vmatprep.subr.bf16.mxu0 %v1387
  %1987 = vmatpush2.bf16.msra.mxu0 %v1386
  %1988 = vmatprep.subr.bf16.mxu0 %v1381
  %1989 = vmatpush2.bf16.msra.mxu0 %v1380
  %1990 = vmatprep.subr.bf16.mxu0 %v1375
  %1991 = vmatpush2.bf16.msra.mxu0 %v1374
  %1992 = vmatprep.subr.bf16.mxu0 %v1369
  %1993 = vmatpush2.bf16.msra.mxu0 %v1368
  %1994 = vmatprep.mubr.bf16.mxu0 %v35
  %1995 = vmatmul.mubr.bf16.gmra.mxu0 %v34
  %v1996 = vpop.f32.mrf.mxu0
  %v1997 = vadd.f32 %v1956, %v1996
  %v1998 = vpop.f32.mrf.mxu0
  %v1999 = vadd.f32 %v1958, %v1998
  %v2000 = vpop.f32.mrf.mxu0
  %v2001 = vpop.f32.mrf.mxu0
  %2002 = vdwg.mxu0
  %2003 = vmatprep.subr.bf16.mxu0 %v1459
  %2004 = vmatpush1.bf16.msra.mxu0 %v1458
  %2005 = vmatprep.subr.bf16.mxu0 %v1453
  %2006 = vmatpush1.bf16.msra.mxu0 %v1452
  %2007 = vmatprep.subr.bf16.mxu0 %v1447
  %2008 = vmatpush1.bf16.msra.mxu0 %v1446
  %2009 = vmatprep.subr.bf16.mxu0 %v1441
  %2010 = vmatpush1.bf16.msra.mxu0 %v1440
  %2011 = vmatprep.subr.bf16.mxu0 %v1435
  %2012 = vmatpush1.bf16.msra.mxu0 %v1434
  %2013 = vmatprep.subr.bf16.mxu0 %v1429
  %2014 = vmatpush1.bf16.msra.mxu0 %v1428
  %2015 = vmatprep.subr.bf16.mxu0 %v1423
  %2016 = vmatpush1.bf16.msra.mxu0 %v1422
  %2017 = vmatprep.subr.bf16.mxu0 %v1417
  %2018 = vmatpush1.bf16.msra.mxu0 %v1416
  %2019 = vmatprep.subr.bf16.mxu0 %v1507
  %2020 = vmatpush2.bf16.msra.mxu0 %v1506
  %2021 = vmatprep.subr.bf16.mxu0 %v1501
  %2022 = vmatpush2.bf16.msra.mxu0 %v1500
  %2023 = vmatprep.subr.bf16.mxu0 %v1495
  %2024 = vmatpush2.bf16.msra.mxu0 %v1494
  %2025 = vmatprep.subr.bf16.mxu0 %v1489
  %2026 = vmatpush2.bf16.msra.mxu0 %v1488
  %2027 = vmatprep.subr.bf16.mxu0 %v1483
  %2028 = vmatpush2.bf16.msra.mxu0 %v1482
  %2029 = vmatprep.subr.bf16.mxu0 %v1477
  %2030 = vmatpush2.bf16.msra.mxu0 %v1476
  %2031 = vmatprep.subr.bf16.mxu0 %v1471
  %2032 = vmatpush2.bf16.msra.mxu0 %v1470
  %2033 = vmatprep.subr.bf16.mxu0 %v1465
  %2034 = vmatpush2.bf16.msra.mxu0 %v1464
  %2035 = vmatprep.mubr.bf16.mxu0 %v37
  %2036 = vmatmul.mubr.bf16.gmra.mxu0 %v36
  %v2037 = vpop.f32.mrf.mxu0
  %v2038 = vadd.f32 %v1997, %v2037
  %v2039 = vpop.f32.mrf.mxu0
  %v2040 = vadd.f32 %v1999, %v2039
  %v2041 = vpop.f32.mrf.mxu0
  %v2042 = vpop.f32.mrf.mxu0
  %2043 = vdwg.mxu0
  %2044 = vmatprep.subr.bf16.mxu0 %v1269
  %2045 = vmatpush1.bf16.msra.mxu0 %v1268
  %2046 = vmatprep.subr.bf16.mxu0 %v1263
  %2047 = vmatpush1.bf16.msra.mxu0 %v1262
  %2048 = vmatprep.subr.bf16.mxu0 %v1257
  %2049 = vmatpush1.bf16.msra.mxu0 %v1256
  %2050 = vmatprep.subr.bf16.mxu0 %v1251
  %2051 = vmatpush1.bf16.msra.mxu0 %v1250
  %2052 = vmatprep.subr.bf16.mxu0 %v1245
  %2053 = vmatpush1.bf16.msra.mxu0 %v1244
  %2054 = vmatprep.subr.bf16.mxu0 %v1239
  %2055 = vmatpush1.bf16.msra.mxu0 %v1238
  %2056 = vmatprep.subr.bf16.mxu0 %v1233
  %2057 = vmatpush1.bf16.msra.mxu0 %v1232
  %2058 = vmatprep.subr.bf16.mxu0 %v1227
  %2059 = vmatpush1.bf16.msra.mxu0 %v1226
  %2060 = vmatprep.subr.bf16.mxu0 %v1317
  %2061 = vmatpush2.bf16.msra.mxu0 %v1316
  %2062 = vmatprep.subr.bf16.mxu0 %v1311
  %2063 = vmatpush2.bf16.msra.mxu0 %v1310
  %2064 = vmatprep.subr.bf16.mxu0 %v1305
  %2065 = vmatpush2.bf16.msra.mxu0 %v1304
  %2066 = vmatprep.subr.bf16.mxu0 %v1299
  %2067 = vmatpush2.bf16.msra.mxu0 %v1298
  %2068 = vmatprep.subr.bf16.mxu0 %v1293
  %2069 = vmatpush2.bf16.msra.mxu0 %v1292
  %2070 = vmatprep.subr.bf16.mxu0 %v1287
  %2071 = vmatpush2.bf16.msra.mxu0 %v1286
  %2072 = vmatprep.subr.bf16.mxu0 %v1281
  %2073 = vmatpush2.bf16.msra.mxu0 %v1280
  %2074 = vmatprep.subr.bf16.mxu0 %v1275
  %2075 = vmatpush2.bf16.msra.mxu0 %v1274
  %2076 = vmatprep.mubr.bf16.mxu0 %v33
  %2077 = vmatmul.mubr.bf16.gmra.mxu0 %v32
  %v2078 = vpop.f32.mrf.mxu0
  %v2079 = vadd.f32 %v347, %v2078
  %v2080 = vpop.f32.mrf.mxu0
  %v2081 = vadd.f32 %v351, %v2080
  %v2082 = vpop.f32.mrf.mxu0
  %v2083 = vpop.f32.mrf.mxu0
  %2084 = vdwg.mxu0
  %2085 = vmatprep.subr.bf16.mxu0 %v1365
  %2086 = vmatpush1.bf16.msra.mxu0 %v1364
  %2087 = vmatprep.subr.bf16.mxu0 %v1359
  %2088 = vmatpush1.bf16.msra.mxu0 %v1358
  %2089 = vmatprep.subr.bf16.mxu0 %v1353
  %2090 = vmatpush1.bf16.msra.mxu0 %v1352
  %2091 = vmatprep.subr.bf16.mxu0 %v1347
  %2092 = vmatpush1.bf16.msra.mxu0 %v1346
  %2093 = vmatprep.subr.bf16.mxu0 %v1341
  %2094 = vmatpush1.bf16.msra.mxu0 %v1340
  %2095 = vmatprep.subr.bf16.mxu0 %v1335
  %2096 = vmatpush1.bf16.msra.mxu0 %v1334
  %2097 = vmatprep.subr.bf16.mxu0 %v1329
  %2098 = vmatpush1.bf16.msra.mxu0 %v1328
  %2099 = vmatprep.subr.bf16.mxu0 %v1323
  %2100 = vmatpush1.bf16.msra.mxu0 %v1322
  %2101 = vmatprep.subr.bf16.mxu0 %v1413
  %2102 = vmatpush2.bf16.msra.mxu0 %v1412
  %2103 = vmatprep.subr.bf16.mxu0 %v1407
  %2104 = vmatpush2.bf16.msra.mxu0 %v1406
  %2105 = vmatprep.subr.bf16.mxu0 %v1401
  %2106 = vmatpush2.bf16.msra.mxu0 %v1400
  %2107 = vmatprep.subr.bf16.mxu0 %v1395
  %2108 = vmatpush2.bf16.msra.mxu0 %v1394
  %2109 = vmatprep.subr.bf16.mxu0 %v1389
  %2110 = vmatpush2.bf16.msra.mxu0 %v1388
  %2111 = vmatprep.subr.bf16.mxu0 %v1383
  %2112 = vmatpush2.bf16.msra.mxu0 %v1382
  %2113 = vmatprep.subr.bf16.mxu0 %v1377
  %2114 = vmatpush2.bf16.msra.mxu0 %v1376
  %2115 = vmatprep.subr.bf16.mxu0 %v1371
  %2116 = vmatpush2.bf16.msra.mxu0 %v1370
  %2117 = vmatprep.mubr.bf16.mxu0 %v35
  %2118 = vmatmul.mubr.bf16.gmra.mxu0 %v34
  %v2119 = vpop.f32.mrf.mxu0
  %v2120 = vadd.f32 %v2079, %v2119
  %v2121 = vpop.f32.mrf.mxu0
  %v2122 = vadd.f32 %v2081, %v2121
  %v2123 = vpop.f32.mrf.mxu0
  %v2124 = vpop.f32.mrf.mxu0
  %2125 = vdwg.mxu0
  %2126 = vmatprep.subr.bf16.mxu0 %v1461
  %2127 = vmatpush1.bf16.msra.mxu0 %v1460
  %2128 = vmatprep.subr.bf16.mxu0 %v1455
  %2129 = vmatpush1.bf16.msra.mxu0 %v1454
  %2130 = vmatprep.subr.bf16.mxu0 %v1449
  %2131 = vmatpush1.bf16.msra.mxu0 %v1448
  %2132 = vmatprep.subr.bf16.mxu0 %v1443
  %2133 = vmatpush1.bf16.msra.mxu0 %v1442
  %2134 = vmatprep.subr.bf16.mxu0 %v1437
  %2135 = vmatpush1.bf16.msra.mxu0 %v1436
  %2136 = vmatprep.subr.bf16.mxu0 %v1431
  %2137 = vmatpush1.bf16.msra.mxu0 %v1430
  %2138 = vmatprep.subr.bf16.mxu0 %v1425
  %2139 = vmatpush1.bf16.msra.mxu0 %v1424
  %2140 = vmatprep.subr.bf16.mxu0 %v1419
  %2141 = vmatpush1.bf16.msra.mxu0 %v1418
  %2142 = vmatprep.subr.bf16.mxu0 %v1509
  %2143 = vmatpush2.bf16.msra.mxu0 %v1508
  %2144 = vmatprep.subr.bf16.mxu0 %v1503
  %2145 = vmatpush2.bf16.msra.mxu0 %v1502
  %2146 = vmatprep.subr.bf16.mxu0 %v1497
  %2147 = vmatpush2.bf16.msra.mxu0 %v1496
  %2148 = vmatprep.subr.bf16.mxu0 %v1491
  %2149 = vmatpush2.bf16.msra.mxu0 %v1490
  %2150 = vmatprep.subr.bf16.mxu0 %v1485
  %2151 = vmatpush2.bf16.msra.mxu0 %v1484
  %2152 = vmatprep.subr.bf16.mxu0 %v1479
  %2153 = vmatpush2.bf16.msra.mxu0 %v1478
  %2154 = vmatprep.subr.bf16.mxu0 %v1473
  %2155 = vmatpush2.bf16.msra.mxu0 %v1472
  %2156 = vmatprep.subr.bf16.mxu0 %v1467
  %2157 = vmatpush2.bf16.msra.mxu0 %v1466
  %2158 = vmatprep.mubr.bf16.mxu0 %v37
  %2159 = vmatmul.mubr.bf16.gmra.mxu0 %v36
  %v2160 = vpop.f32.mrf.mxu0
  %v2161 = vadd.f32 %v2120, %v2160
  %v2162 = vpop.f32.mrf.mxu0
  %v2163 = vadd.f32 %v2122, %v2162
  %v2164 = vpop.f32.mrf.mxu0
  %v2165 = vpop.f32.mrf.mxu0
  %2166 = vdwg.mxu0
  %v2167 = vmax.f32 %v1915, 0.0
  %v2168 = vmax.f32 %v1917, 0.0
  %v2169 = vmax.f32 %v2038, 0.0
  %v2170 = vmax.f32 %v2040, 0.0
  %v2171 = vmax.f32 %v2161, 0.0
  %v2172 = vmax.f32 %v2163, 0.0
  %v2173 = vld [vmem:[%s3] sm:$0xff]
  %v2174 = vld [vmem:[%s3 + $0x8] sm:$0xff]
  %v2175 = vld [vmem:[%s3 + $0x10] sm:$0xff]
  %v2176 = vld [vmem:[%s3 + $0x18] sm:$0xff]
  %v2177 = vld [vmem:[%s3 + $0x20] sm:$0xff]
  %v2178 = vld [vmem:[%s3 + $0x28] sm:$0xff]
  %v2179 = vld [vmem:[%s3 + $0x30] sm:$0xff]
  %v2180 = vld [vmem:[%s3 + $0x38] sm:$0xff]
  %v2181 = vld [vmem:[%s3 + $0x40] sm:$0xff]
  %v2182 = vld [vmem:[%s3 + $0x48] sm:$0xff]
  %v2183 = vld [vmem:[%s3 + $0x50] sm:$0xff]
  %v2184 = vld [vmem:[%s3 + $0x58] sm:$0xff]
  %v2185 = vld [vmem:[%s3 + $0x60] sm:$0xff]
  %v2186 = vld [vmem:[%s3 + $0x68] sm:$0xff]
  %v2187 = vld [vmem:[%s3 + $0x70] sm:$0xff]
  %v2188 = vld [vmem:[%s3 + $0x78] sm:$0xff]
  %v2189 = vld [vmem:[%s3 + $0x80] sm:$0xff]
  %v2190 = vld [vmem:[%s3 + $0x88] sm:$0xff]
  %v2191 = vld [vmem:[%s3 + $0x90] sm:$0xff]
  %v2192 = vld [vmem:[%s3 + $0x98] sm:$0xff]
  %v2193 = vld [vmem:[%s3 + $0xa0] sm:$0xff]
  %v2194 = vld [vmem:[%s3 + $0xa8] sm:$0xff]
  %v2195 = vld [vmem:[%s3 + $0xb0] sm:$0xff]
  %v2196 = vld [vmem:[%s3 + $0xb8] sm:$0xff]
  %v2197 = vld [vmem:[%s3 + $0xc0] sm:$0xff]
  %v2198 = vld [vmem:[%s3 + $0xc8] sm:$0xff]
  %v2199 = vld [vmem:[%s3 + $0xd0] sm:$0xff]
  %v2200 = vld [vmem:[%s3 + $0xd8] sm:$0xff]
  %v2201 = vld [vmem:[%s3 + $0xe0] sm:$0xff]
  %v2202 = vld [vmem:[%s3 + $0xe8] sm:$0xff]
  %v2203 = vld [vmem:[%s3 + $0xf0] sm:$0xff]
  %v2204 = vld [vmem:[%s3 + $0xf8] sm:$0xff]
  %v2205 = vld [vmem:[%s3 + $0x100] sm:$0xff]
  %v2206 = vld [vmem:[%s3 + $0x108] sm:$0xff]
  %v2207 = vld [vmem:[%s3 + $0x110] sm:$0xff]
  %v2208 = vld [vmem:[%s3 + $0x118] sm:$0xff]
  %v2209 = vld [vmem:[%s3 + $0x120] sm:$0xff]
  %v2210 = vld [vmem:[%s3 + $0x128] sm:$0xff]
  %v2211 = vld [vmem:[%s3 + $0x130] sm:$0xff]
  %v2212 = vld [vmem:[%s3 + $0x138] sm:$0xff]
  %v2213 = vld [vmem:[%s3 + $0x140] sm:$0xff]
  %v2214 = vld [vmem:[%s3 + $0x148] sm:$0xff]
  %v2215 = vld [vmem:[%s3 + $0x150] sm:$0xff]
  %v2216 = vld [vmem:[%s3 + $0x158] sm:$0xff]
  %v2217 = vld [vmem:[%s3 + $0x160] sm:$0xff]
  %v2218 = vld [vmem:[%s3 + $0x168] sm:$0xff]
  %v2219 = vld [vmem:[%s3 + $0x170] sm:$0xff]
  %v2220 = vld [vmem:[%s3 + $0x178] sm:$0xff]
  %v2221 = vld [vmem:[%s3 + $0x180] sm:$0xff]
  %v2222 = vld [vmem:[%s3 + $0x188] sm:$0xff]
  %v2223 = vld [vmem:[%s3 + $0x190] sm:$0xff]
  %v2224 = vld [vmem:[%s3 + $0x198] sm:$0xff]
  %v2225 = vld [vmem:[%s3 + $0x1a0] sm:$0xff]
  %v2226 = vld [vmem:[%s3 + $0x1a8] sm:$0xff]
  %v2227 = vld [vmem:[%s3 + $0x1b0] sm:$0xff]
  %v2228 = vld [vmem:[%s3 + $0x1b8] sm:$0xff]
  %v2229 = vld [vmem:[%s3 + $0x1c0] sm:$0xff]
  %v2230 = vld [vmem:[%s3 + $0x1c8] sm:$0xff]
  %v2231 = vld [vmem:[%s3 + $0x1d0] sm:$0xff]
  %v2232 = vld [vmem:[%s3 + $0x1d8] sm:$0xff]
  %v2233 = vld [vmem:[%s3 + $0x1e0] sm:$0xff]
  %v2234 = vld [vmem:[%s3 + $0x1e8] sm:$0xff]
  %v2235 = vld [vmem:[%s3 + $0x1f0] sm:$0xff]
  %v2236 = vld [vmem:[%s3 + $0x1f8] sm:$0xff]
  %v2237 = vld [vmem:[%s3 + $0x200] sm:$0xff]
  %v2238 = vld [vmem:[%s3 + $0x208] sm:$0xff]
  %v2239 = vld [vmem:[%s3 + $0x210] sm:$0xff]
  %v2240 = vld [vmem:[%s3 + $0x218] sm:$0xff]
  %v2241 = vld [vmem:[%s3 + $0x220] sm:$0xff]
  %v2242 = vld [vmem:[%s3 + $0x228] sm:$0xff]
  %v2243 = vld [vmem:[%s3 + $0x230] sm:$0xff]
  %v2244 = vld [vmem:[%s3 + $0x238] sm:$0xff]
  %v2245 = vld [vmem:[%s3 + $0x240] sm:$0xff]
  %v2246 = vld [vmem:[%s3 + $0x248] sm:$0xff]
  %v2247 = vld [vmem:[%s3 + $0x250] sm:$0xff]
  %v2248 = vld [vmem:[%s3 + $0x258] sm:$0xff]
  %v2249 = vld [vmem:[%s3 + $0x260] sm:$0xff]
  %v2250 = vld [vmem:[%s3 + $0x268] sm:$0xff]
  %v2251 = vld [vmem:[%s3 + $0x270] sm:$0xff]
  %v2252 = vld [vmem:[%s3 + $0x278] sm:$0xff]
  %v2253 = vld [vmem:[%s3 + $0x280] sm:$0xff]
  %v2254 = vld [vmem:[%s3 + $0x288] sm:$0xff]
  %v2255 = vld [vmem:[%s3 + $0x290] sm:$0xff]
  %v2256 = vld [vmem:[%s3 + $0x298] sm:$0xff]
  %v2257 = vld [vmem:[%s3 + $0x2a0] sm:$0xff]
  %v2258 = vld [vmem:[%s3 + $0x2a8] sm:$0xff]
  %v2259 = vld [vmem:[%s3 + $0x2b0] sm:$0xff]
  %v2260 = vld [vmem:[%s3 + $0x2b8] sm:$0xff]
  %v2261 = vld [vmem:[%s3 + $0x2c0] sm:$0xff]
  %v2262 = vld [vmem:[%s3 + $0x2c8] sm:$0xff]
  %v2263 = vld [vmem:[%s3 + $0x2d0] sm:$0xff]
  %v2264 = vld [vmem:[%s3 + $0x2d8] sm:$0xff]
  %v2265 = vld [vmem:[%s3 + $0x2e0] sm:$0xff]
  %v2266 = vld [vmem:[%s3 + $0x2e8] sm:$0xff]
  %v2267 = vld [vmem:[%s3 + $0x2f0] sm:$0xff]
  %v2268 = vld [vmem:[%s3 + $0x2f8] sm:$0xff]
  %v2269 = vld [vmem:[%s3 + $0x300] sm:$0xff]
  %v2270 = vld [vmem:[%s3 + $0x308] sm:$0xff]
  %v2271 = vld [vmem:[%s3 + $0x310] sm:$0xff]
  %v2272 = vld [vmem:[%s3 + $0x318] sm:$0xff]
  %v2273 = vld [vmem:[%s3 + $0x320] sm:$0xff]
  %v2274 = vld [vmem:[%s3 + $0x328] sm:$0xff]
  %v2275 = vld [vmem:[%s3 + $0x330] sm:$0xff]
  %v2276 = vld [vmem:[%s3 + $0x338] sm:$0xff]
  %v2277 = vld [vmem:[%s3 + $0x340] sm:$0xff]
  %v2278 = vld [vmem:[%s3 + $0x348] sm:$0xff]
  %v2279 = vld [vmem:[%s3 + $0x350] sm:$0xff]
  %v2280 = vld [vmem:[%s3 + $0x358] sm:$0xff]
  %v2281 = vld [vmem:[%s3 + $0x360] sm:$0xff]
  %v2282 = vld [vmem:[%s3 + $0x368] sm:$0xff]
  %v2283 = vld [vmem:[%s3 + $0x370] sm:$0xff]
  %v2284 = vld [vmem:[%s3 + $0x378] sm:$0xff]
  %v2285 = vld [vmem:[%s3 + $0x380] sm:$0xff]
  %v2286 = vld [vmem:[%s3 + $0x388] sm:$0xff]
  %v2287 = vld [vmem:[%s3 + $0x390] sm:$0xff]
  %v2288 = vld [vmem:[%s3 + $0x398] sm:$0xff]
  %v2289 = vld [vmem:[%s3 + $0x3a0] sm:$0xff]
  %v2290 = vld [vmem:[%s3 + $0x3a8] sm:$0xff]
  %v2291 = vld [vmem:[%s3 + $0x3b0] sm:$0xff]
  %v2292 = vld [vmem:[%s3 + $0x3b8] sm:$0xff]
  %v2293 = vld [vmem:[%s3 + $0x3c0] sm:$0xff]
  %v2294 = vld [vmem:[%s3 + $0x3c8] sm:$0xff]
  %v2295 = vld [vmem:[%s3 + $0x3d0] sm:$0xff]
  %v2296 = vld [vmem:[%s3 + $0x3d8] sm:$0xff]
  %v2297 = vld [vmem:[%s3 + $0x3e0] sm:$0xff]
  %v2298 = vld [vmem:[%s3 + $0x3e8] sm:$0xff]
  %v2299 = vld [vmem:[%s3 + $0x3f0] sm:$0xff]
  %v2300 = vld [vmem:[%s3 + $0x3f8] sm:$0xff]
  %v2301 = vld [vmem:[%s3 + $0x400] sm:$0xff]
  %v2302 = vld [vmem:[%s3 + $0x408] sm:$0xff]
  %v2303 = vld [vmem:[%s3 + $0x410] sm:$0xff]
  %v2304 = vld [vmem:[%s3 + $0x418] sm:$0xff]
  %v2305 = vld [vmem:[%s3 + $0x420] sm:$0xff]
  %v2306 = vld [vmem:[%s3 + $0x428] sm:$0xff]
  %v2307 = vld [vmem:[%s3 + $0x430] sm:$0xff]
  %v2308 = vld [vmem:[%s3 + $0x438] sm:$0xff]
  %v2309 = vld [vmem:[%s3 + $0x440] sm:$0xff]
  %v2310 = vld [vmem:[%s3 + $0x448] sm:$0xff]
  %v2311 = vld [vmem:[%s3 + $0x450] sm:$0xff]
  %v2312 = vld [vmem:[%s3 + $0x458] sm:$0xff]
  %v2313 = vld [vmem:[%s3 + $0x460] sm:$0xff]
  %v2314 = vld [vmem:[%s3 + $0x468] sm:$0xff]
  %v2315 = vld [vmem:[%s3 + $0x470] sm:$0xff]
  %v2316 = vld [vmem:[%s3 + $0x478] sm:$0xff]
  %v2317 = vld [vmem:[%s3 + $0x480] sm:$0xff]
  %v2318 = vld [vmem:[%s3 + $0x488] sm:$0xff]
  %v2319 = vld [vmem:[%s3 + $0x490] sm:$0xff]
  %v2320 = vld [vmem:[%s3 + $0x498] sm:$0xff]
  %v2321 = vld [vmem:[%s3 + $0x4a0] sm:$0xff]
  %v2322 = vld [vmem:[%s3 + $0x4a8] sm:$0xff]
  %v2323 = vld [vmem:[%s3 + $0x4b0] sm:$0xff]
  %v2324 = vld [vmem:[%s3 + $0x4b8] sm:$0xff]
  %v2325 = vld [vmem:[%s3 + $0x4c0] sm:$0xff]
  %v2326 = vld [vmem:[%s3 + $0x4c8] sm:$0xff]
  %v2327 = vld [vmem:[%s3 + $0x4d0] sm:$0xff]
  %v2328 = vld [vmem:[%s3 + $0x4d8] sm:$0xff]
  %v2329 = vld [vmem:[%s3 + $0x4e0] sm:$0xff]
  %v2330 = vld [vmem:[%s3 + $0x4e8] sm:$0xff]
  %v2331 = vld [vmem:[%s3 + $0x4f0] sm:$0xff]
  %v2332 = vld [vmem:[%s3 + $0x4f8] sm:$0xff]
  %v2333 = vld [vmem:[%s3 + $0x500] sm:$0xff]
  %v2334 = vld [vmem:[%s3 + $0x508] sm:$0xff]
  %v2335 = vld [vmem:[%s3 + $0x510] sm:$0xff]
  %v2336 = vld [vmem:[%s3 + $0x518] sm:$0xff]
  %v2337 = vld [vmem:[%s3 + $0x520] sm:$0xff]
  %v2338 = vld [vmem:[%s3 + $0x528] sm:$0xff]
  %v2339 = vld [vmem:[%s3 + $0x530] sm:$0xff]
  %v2340 = vld [vmem:[%s3 + $0x538] sm:$0xff]
  %v2341 = vld [vmem:[%s3 + $0x540] sm:$0xff]
  %v2342 = vld [vmem:[%s3 + $0x548] sm:$0xff]
  %v2343 = vld [vmem:[%s3 + $0x550] sm:$0xff]
  %v2344 = vld [vmem:[%s3 + $0x558] sm:$0xff]
  %v2345 = vld [vmem:[%s3 + $0x560] sm:$0xff]
  %v2346 = vld [vmem:[%s3 + $0x568] sm:$0xff]
  %v2347 = vld [vmem:[%s3 + $0x570] sm:$0xff]
  %v2348 = vld [vmem:[%s3 + $0x578] sm:$0xff]
  %v2349 = vld [vmem:[%s3 + $0x580] sm:$0xff]
  %v2350 = vld [vmem:[%s3 + $0x588] sm:$0xff]
  %v2351 = vld [vmem:[%s3 + $0x590] sm:$0xff]
  %v2352 = vld [vmem:[%s3 + $0x598] sm:$0xff]
  %v2353 = vld [vmem:[%s3 + $0x5a0] sm:$0xff]
  %v2354 = vld [vmem:[%s3 + $0x5a8] sm:$0xff]
  %v2355 = vld [vmem:[%s3 + $0x5b0] sm:$0xff]
  %v2356 = vld [vmem:[%s3 + $0x5b8] sm:$0xff]
  %v2357 = vld [vmem:[%s3 + $0x5c0] sm:$0xff]
  %v2358 = vld [vmem:[%s3 + $0x5c8] sm:$0xff]
  %v2359 = vld [vmem:[%s3 + $0x5d0] sm:$0xff]
  %v2360 = vld [vmem:[%s3 + $0x5d8] sm:$0xff]
  %v2361 = vld [vmem:[%s3 + $0x5e0] sm:$0xff]
  %v2362 = vld [vmem:[%s3 + $0x5e8] sm:$0xff]
  %v2363 = vld [vmem:[%s3 + $0x5f0] sm:$0xff]
  %v2364 = vld [vmem:[%s3 + $0x5f8] sm:$0xff]
  %v2365 = vld [vmem:[%s3 + $0x600] sm:$0xff]
  %v2366 = vld [vmem:[%s3 + $0x608] sm:$0xff]
  %v2367 = vld [vmem:[%s3 + $0x610] sm:$0xff]
  %v2368 = vld [vmem:[%s3 + $0x618] sm:$0xff]
  %v2369 = vld [vmem:[%s3 + $0x620] sm:$0xff]
  %v2370 = vld [vmem:[%s3 + $0x628] sm:$0xff]
  %v2371 = vld [vmem:[%s3 + $0x630] sm:$0xff]
  %v2372 = vld [vmem:[%s3 + $0x638] sm:$0xff]
  %v2373 = vld [vmem:[%s3 + $0x640] sm:$0xff]
  %v2374 = vld [vmem:[%s3 + $0x648] sm:$0xff]
  %v2375 = vld [vmem:[%s3 + $0x650] sm:$0xff]
  %v2376 = vld [vmem:[%s3 + $0x658] sm:$0xff]
  %v2377 = vld [vmem:[%s3 + $0x660] sm:$0xff]
  %v2378 = vld [vmem:[%s3 + $0x668] sm:$0xff]
  %v2379 = vld [vmem:[%s3 + $0x670] sm:$0xff]
  %v2380 = vld [vmem:[%s3 + $0x678] sm:$0xff]
  %v2381 = vld [vmem:[%s3 + $0x680] sm:$0xff]
  %v2382 = vld [vmem:[%s3 + $0x688] sm:$0xff]
  %v2383 = vld [vmem:[%s3 + $0x690] sm:$0xff]
  %v2384 = vld [vmem:[%s3 + $0x698] sm:$0xff]
  %v2385 = vld [vmem:[%s3 + $0x6a0] sm:$0xff]
  %v2386 = vld [vmem:[%s3 + $0x6a8] sm:$0xff]
  %v2387 = vld [vmem:[%s3 + $0x6b0] sm:$0xff]
  %v2388 = vld [vmem:[%s3 + $0x6b8] sm:$0xff]
  %v2389 = vld [vmem:[%s3 + $0x6c0] sm:$0xff]
  %v2390 = vld [vmem:[%s3 + $0x6c8] sm:$0xff]
  %v2391 = vld [vmem:[%s3 + $0x6d0] sm:$0xff]
  %v2392 = vld [vmem:[%s3 + $0x6d8] sm:$0xff]
  %v2393 = vld [vmem:[%s3 + $0x6e0] sm:$0xff]
  %v2394 = vld [vmem:[%s3 + $0x6e8] sm:$0xff]
  %v2395 = vld [vmem:[%s3 + $0x6f0] sm:$0xff]
  %v2396 = vld [vmem:[%s3 + $0x6f8] sm:$0xff]
  %v2397 = vld [vmem:[%s3 + $0x700] sm:$0xff]
  %v2398 = vld [vmem:[%s3 + $0x708] sm:$0xff]
  %v2399 = vld [vmem:[%s3 + $0x710] sm:$0xff]
  %v2400 = vld [vmem:[%s3 + $0x718] sm:$0xff]
  %v2401 = vld [vmem:[%s3 + $0x720] sm:$0xff]
  %v2402 = vld [vmem:[%s3 + $0x728] sm:$0xff]
  %v2403 = vld [vmem:[%s3 + $0x730] sm:$0xff]
  %v2404 = vld [vmem:[%s3 + $0x738] sm:$0xff]
  %v2405 = vld [vmem:[%s3 + $0x740] sm:$0xff]
  %v2406 = vld [vmem:[%s3 + $0x748] sm:$0xff]
  %v2407 = vld [vmem:[%s3 + $0x750] sm:$0xff]
  %v2408 = vld [vmem:[%s3 + $0x758] sm:$0xff]
  %v2409 = vld [vmem:[%s3 + $0x760] sm:$0xff]
  %v2410 = vld [vmem:[%s3 + $0x768] sm:$0xff]
  %v2411 = vld [vmem:[%s3 + $0x770] sm:$0xff]
  %v2412 = vld [vmem:[%s3 + $0x778] sm:$0xff]
  %v2413 = vld [vmem:[%s3 + $0x780] sm:$0xff]
  %v2414 = vld [vmem:[%s3 + $0x788] sm:$0xff]
  %v2415 = vld [vmem:[%s3 + $0x790] sm:$0xff]
  %v2416 = vld [vmem:[%s3 + $0x798] sm:$0xff]
  %v2417 = vld [vmem:[%s3 + $0x7a0] sm:$0xff]
  %v2418 = vld [vmem:[%s3 + $0x7a8] sm:$0xff]
  %v2419 = vld [vmem:[%s3 + $0x7b0] sm:$0xff]
  %v2420 = vld [vmem:[%s3 + $0x7b8] sm:$0xff]
  %v2421 = vld [vmem:[%s3 + $0x7c0] sm:$0xff]
  %v2422 = vld [vmem:[%s3 + $0x7c8] sm:$0xff]
  %v2423 = vld [vmem:[%s3 + $0x7d0] sm:$0xff]
  %v2424 = vld [vmem:[%s3 + $0x7d8] sm:$0xff]
  %v2425 = vld [vmem:[%s3 + $0x7e0] sm:$0xff]
  %v2426 = vld [vmem:[%s3 + $0x7e8] sm:$0xff]
  %v2427 = vld [vmem:[%s3 + $0x7f0] sm:$0xff]
  %v2428 = vld [vmem:[%s3 + $0x7f8] sm:$0xff]
  %v2429 = vld [vmem:[%s3 + $0x800] sm:$0xff]
  %v2430 = vld [vmem:[%s3 + $0x808] sm:$0xff]
  %v2431 = vld [vmem:[%s3 + $0x810] sm:$0xff]
  %v2432 = vld [vmem:[%s3 + $0x818] sm:$0xff]
  %v2433 = vld [vmem:[%s3 + $0x820] sm:$0xff]
  %v2434 = vld [vmem:[%s3 + $0x828] sm:$0xff]
  %v2435 = vld [vmem:[%s3 + $0x830] sm:$0xff]
  %v2436 = vld [vmem:[%s3 + $0x838] sm:$0xff]
  %v2437 = vld [vmem:[%s3 + $0x840] sm:$0xff]
  %v2438 = vld [vmem:[%s3 + $0x848] sm:$0xff]
  %v2439 = vld [vmem:[%s3 + $0x850] sm:$0xff]
  %v2440 = vld [vmem:[%s3 + $0x858] sm:$0xff]
  %v2441 = vld [vmem:[%s3 + $0x860] sm:$0xff]
  %v2442 = vld [vmem:[%s3 + $0x868] sm:$0xff]
  %v2443 = vld [vmem:[%s3 + $0x870] sm:$0xff]
  %v2444 = vld [vmem:[%s3 + $0x878] sm:$0xff]
  %v2445 = vld [vmem:[%s3 + $0x880] sm:$0xff]
  %v2446 = vld [vmem:[%s3 + $0x888] sm:$0xff]
  %v2447 = vld [vmem:[%s3 + $0x890] sm:$0xff]
  %v2448 = vld [vmem:[%s3 + $0x898] sm:$0xff]
  %v2449 = vld [vmem:[%s3 + $0x8a0] sm:$0xff]
  %v2450 = vld [vmem:[%s3 + $0x8a8] sm:$0xff]
  %v2451 = vld [vmem:[%s3 + $0x8b0] sm:$0xff]
  %v2452 = vld [vmem:[%s3 + $0x8b8] sm:$0xff]
  %v2453 = vld [vmem:[%s3 + $0x8c0] sm:$0xff]
  %v2454 = vld [vmem:[%s3 + $0x8c8] sm:$0xff]
  %v2455 = vld [vmem:[%s3 + $0x8d0] sm:$0xff]
  %v2456 = vld [vmem:[%s3 + $0x8d8] sm:$0xff]
  %v2457 = vld [vmem:[%s3 + $0x8e0] sm:$0xff]
  %v2458 = vld [vmem:[%s3 + $0x8e8] sm:$0xff]
  %v2459 = vld [vmem:[%s3 + $0x8f0] sm:$0xff]
  %v2460 = vld [vmem:[%s3 + $0x8f8] sm:$0xff]
  %v2461 = vld [vmem:[%s3 + $0x900] sm:$0xff]
  %v2462 = vld [vmem:[%s3 + $0x908] sm:$0xff]
  %v2463 = vld [vmem:[%s3 + $0x910] sm:$0xff]
  %v2464 = vld [vmem:[%s3 + $0x918] sm:$0xff]
  %v2465 = vld [vmem:[%s3 + $0x920] sm:$0xff]
  %v2466 = vld [vmem:[%s3 + $0x928] sm:$0xff]
  %v2467 = vld [vmem:[%s3 + $0x930] sm:$0xff]
  %v2468 = vld [vmem:[%s3 + $0x938] sm:$0xff]
  %v2469 = vld [vmem:[%s3 + $0x940] sm:$0xff]
  %v2470 = vld [vmem:[%s3 + $0x948] sm:$0xff]
  %v2471 = vld [vmem:[%s3 + $0x950] sm:$0xff]
  %v2472 = vld [vmem:[%s3 + $0x958] sm:$0xff]
  %v2473 = vld [vmem:[%s3 + $0x960] sm:$0xff]
  %v2474 = vld [vmem:[%s3 + $0x968] sm:$0xff]
  %v2475 = vld [vmem:[%s3 + $0x970] sm:$0xff]
  %v2476 = vld [vmem:[%s3 + $0x978] sm:$0xff]
  %v2477 = vld [vmem:[%s3 + $0x980] sm:$0xff]
  %v2478 = vld [vmem:[%s3 + $0x988] sm:$0xff]
  %v2479 = vld [vmem:[%s3 + $0x990] sm:$0xff]
  %v2480 = vld [vmem:[%s3 + $0x998] sm:$0xff]
  %v2481 = vld [vmem:[%s3 + $0x9a0] sm:$0xff]
  %v2482 = vld [vmem:[%s3 + $0x9a8] sm:$0xff]
  %v2483 = vld [vmem:[%s3 + $0x9b0] sm:$0xff]
  %v2484 = vld [vmem:[%s3 + $0x9b8] sm:$0xff]
  %v2485 = vld [vmem:[%s3 + $0x9c0] sm:$0xff]
  %v2486 = vld [vmem:[%s3 + $0x9c8] sm:$0xff]
  %v2487 = vld [vmem:[%s3 + $0x9d0] sm:$0xff]
  %v2488 = vld [vmem:[%s3 + $0x9d8] sm:$0xff]
  %v2489 = vld [vmem:[%s3 + $0x9e0] sm:$0xff]
  %v2490 = vld [vmem:[%s3 + $0x9e8] sm:$0xff]
  %v2491 = vld [vmem:[%s3 + $0x9f0] sm:$0xff]
  %v2492 = vld [vmem:[%s3 + $0x9f8] sm:$0xff]
  %v2493 = vld [vmem:[%s3 + $0xa00] sm:$0xff]
  %v2494 = vld [vmem:[%s3 + $0xa08] sm:$0xff]
  %v2495 = vld [vmem:[%s3 + $0xa10] sm:$0xff]
  %v2496 = vld [vmem:[%s3 + $0xa18] sm:$0xff]
  %v2497 = vld [vmem:[%s3 + $0xa20] sm:$0xff]
  %v2498 = vld [vmem:[%s3 + $0xa28] sm:$0xff]
  %v2499 = vld [vmem:[%s3 + $0xa30] sm:$0xff]
  %v2500 = vld [vmem:[%s3 + $0xa38] sm:$0xff]
  %v2501 = vld [vmem:[%s3 + $0xa40] sm:$0xff]
  %v2502 = vld [vmem:[%s3 + $0xa48] sm:$0xff]
  %v2503 = vld [vmem:[%s3 + $0xa50] sm:$0xff]
  %v2504 = vld [vmem:[%s3 + $0xa58] sm:$0xff]
  %v2505 = vld [vmem:[%s3 + $0xa60] sm:$0xff]
  %v2506 = vld [vmem:[%s3 + $0xa68] sm:$0xff]
  %v2507 = vld [vmem:[%s3 + $0xa70] sm:$0xff]
  %v2508 = vld [vmem:[%s3 + $0xa78] sm:$0xff]
  %v2509 = vld [vmem:[%s3 + $0xa80] sm:$0xff]
  %v2510 = vld [vmem:[%s3 + $0xa88] sm:$0xff]
  %v2511 = vld [vmem:[%s3 + $0xa90] sm:$0xff]
  %v2512 = vld [vmem:[%s3 + $0xa98] sm:$0xff]
  %v2513 = vld [vmem:[%s3 + $0xaa0] sm:$0xff]
  %v2514 = vld [vmem:[%s3 + $0xaa8] sm:$0xff]
  %v2515 = vld [vmem:[%s3 + $0xab0] sm:$0xff]
  %v2516 = vld [vmem:[%s3 + $0xab8] sm:$0xff]
  %v2517 = vld [vmem:[%s3 + $0xac0] sm:$0xff]
  %v2518 = vld [vmem:[%s3 + $0xac8] sm:$0xff]
  %v2519 = vld [vmem:[%s3 + $0xad0] sm:$0xff]
  %v2520 = vld [vmem:[%s3 + $0xad8] sm:$0xff]
  %v2521 = vld [vmem:[%s3 + $0xae0] sm:$0xff]
  %v2522 = vld [vmem:[%s3 + $0xae8] sm:$0xff]
  %v2523 = vld [vmem:[%s3 + $0xaf0] sm:$0xff]
  %v2524 = vld [vmem:[%s3 + $0xaf8] sm:$0xff]
  %v2525 = vld [vmem:[%s3 + $0xb00] sm:$0xff]
  %v2526 = vld [vmem:[%s3 + $0xb08] sm:$0xff]
  %v2527 = vld [vmem:[%s3 + $0xb10] sm:$0xff]
  %v2528 = vld [vmem:[%s3 + $0xb18] sm:$0xff]
  %v2529 = vld [vmem:[%s3 + $0xb20] sm:$0xff]
  %v2530 = vld [vmem:[%s3 + $0xb28] sm:$0xff]
  %v2531 = vld [vmem:[%s3 + $0xb30] sm:$0xff]
  %v2532 = vld [vmem:[%s3 + $0xb38] sm:$0xff]
  %v2533 = vld [vmem:[%s3 + $0xb40] sm:$0xff]
  %v2534 = vld [vmem:[%s3 + $0xb48] sm:$0xff]
  %v2535 = vld [vmem:[%s3 + $0xb50] sm:$0xff]
  %v2536 = vld [vmem:[%s3 + $0xb58] sm:$0xff]
  %v2537 = vld [vmem:[%s3 + $0xb60] sm:$0xff]
  %v2538 = vld [vmem:[%s3 + $0xb68] sm:$0xff]
  %v2539 = vld [vmem:[%s3 + $0xb70] sm:$0xff]
  %v2540 = vld [vmem:[%s3 + $0xb78] sm:$0xff]
  %v2541 = vld [vmem:[%s3 + $0xb80] sm:$0xff]
  %v2542 = vld [vmem:[%s3 + $0xb88] sm:$0xff]
  %v2543 = vld [vmem:[%s3 + $0xb90] sm:$0xff]
  %v2544 = vld [vmem:[%s3 + $0xb98] sm:$0xff]
  %v2545 = vld [vmem:[%s3 + $0xba0] sm:$0xff]
  %v2546 = vld [vmem:[%s3 + $0xba8] sm:$0xff]
  %v2547 = vld [vmem:[%s3 + $0xbb0] sm:$0xff]
  %v2548 = vld [vmem:[%s3 + $0xbb8] sm:$0xff]
  %v2549 = vld [vmem:[%s3 + $0xbc0] sm:$0xff]
  %v2550 = vld [vmem:[%s3 + $0xbc8] sm:$0xff]
  %v2551 = vld [vmem:[%s3 + $0xbd0] sm:$0xff]
  %v2552 = vld [vmem:[%s3 + $0xbd8] sm:$0xff]
  %v2553 = vld [vmem:[%s3 + $0xbe0] sm:$0xff]
  %v2554 = vld [vmem:[%s3 + $0xbe8] sm:$0xff]
  %v2555 = vld [vmem:[%s3 + $0xbf0] sm:$0xff]
  %v2556 = vld [vmem:[%s3 + $0xbf8] sm:$0xff]
  %v2557 = vld [vmem:[%s3 + $0xc00] sm:$0xff]
  %v2558 = vld [vmem:[%s3 + $0xc08] sm:$0xff]
  %v2559 = vld [vmem:[%s3 + $0xc10] sm:$0xff]
  %v2560 = vld [vmem:[%s3 + $0xc18] sm:$0xff]
  %v2561 = vld [vmem:[%s3 + $0xc20] sm:$0xff]
  %v2562 = vld [vmem:[%s3 + $0xc28] sm:$0xff]
  %v2563 = vld [vmem:[%s3 + $0xc30] sm:$0xff]
  %v2564 = vld [vmem:[%s3 + $0xc38] sm:$0xff]
  %v2565 = vld [vmem:[%s3 + $0xc40] sm:$0xff]
  %v2566 = vld [vmem:[%s3 + $0xc48] sm:$0xff]
  %v2567 = vld [vmem:[%s3 + $0xc50] sm:$0xff]
  %v2568 = vld [vmem:[%s3 + $0xc58] sm:$0xff]
  %v2569 = vld [vmem:[%s3 + $0xc60] sm:$0xff]
  %v2570 = vld [vmem:[%s3 + $0xc68] sm:$0xff]
  %v2571 = vld [vmem:[%s3 + $0xc70] sm:$0xff]
  %v2572 = vld [vmem:[%s3 + $0xc78] sm:$0xff]
  %v2573 = vld [vmem:[%s3 + $0xc80] sm:$0xff]
  %v2574 = vld [vmem:[%s3 + $0xc88] sm:$0xff]
  %v2575 = vld [vmem:[%s3 + $0xc90] sm:$0xff]
  %v2576 = vld [vmem:[%s3 + $0xc98] sm:$0xff]
  %v2577 = vld [vmem:[%s3 + $0xca0] sm:$0xff]
  %v2578 = vld [vmem:[%s3 + $0xca8] sm:$0xff]
  %v2579 = vld [vmem:[%s3 + $0xcb0] sm:$0xff]
  %v2580 = vld [vmem:[%s3 + $0xcb8] sm:$0xff]
  %v2581 = vld [vmem:[%s3 + $0xcc0] sm:$0xff]
  %v2582 = vld [vmem:[%s3 + $0xcc8] sm:$0xff]
  %v2583 = vld [vmem:[%s3 + $0xcd0] sm:$0xff]
  %v2584 = vld [vmem:[%s3 + $0xcd8] sm:$0xff]
  %v2585 = vld [vmem:[%s3 + $0xce0] sm:$0xff]
  %v2586 = vld [vmem:[%s3 + $0xce8] sm:$0xff]
  %v2587 = vld [vmem:[%s3 + $0xcf0] sm:$0xff]
  %v2588 = vld [vmem:[%s3 + $0xcf8] sm:$0xff]
  %v2589 = vld [vmem:[%s3 + $0xd00] sm:$0xff]
  %v2590 = vld [vmem:[%s3 + $0xd08] sm:$0xff]
  %v2591 = vld [vmem:[%s3 + $0xd10] sm:$0xff]
  %v2592 = vld [vmem:[%s3 + $0xd18] sm:$0xff]
  %v2593 = vld [vmem:[%s3 + $0xd20] sm:$0xff]
  %v2594 = vld [vmem:[%s3 + $0xd28] sm:$0xff]
  %v2595 = vld [vmem:[%s3 + $0xd30] sm:$0xff]
  %v2596 = vld [vmem:[%s3 + $0xd38] sm:$0xff]
  %v2597 = vld [vmem:[%s3 + $0xd40] sm:$0xff]
  %v2598 = vld [vmem:[%s3 + $0xd48] sm:$0xff]
  %v2599 = vld [vmem:[%s3 + $0xd50] sm:$0xff]
  %v2600 = vld [vmem:[%s3 + $0xd58] sm:$0xff]
  %v2601 = vld [vmem:[%s3 + $0xd60] sm:$0xff]
  %v2602 = vld [vmem:[%s3 + $0xd68] sm:$0xff]
  %v2603 = vld [vmem:[%s3 + $0xd70] sm:$0xff]
  %v2604 = vld [vmem:[%s3 + $0xd78] sm:$0xff]
  %v2605 = vld [vmem:[%s3 + $0xd80] sm:$0xff]
  %v2606 = vld [vmem:[%s3 + $0xd88] sm:$0xff]
  %v2607 = vld [vmem:[%s3 + $0xd90] sm:$0xff]
  %v2608 = vld [vmem:[%s3 + $0xd98] sm:$0xff]
  %v2609 = vld [vmem:[%s3 + $0xda0] sm:$0xff]
  %v2610 = vld [vmem:[%s3 + $0xda8] sm:$0xff]
  %v2611 = vld [vmem:[%s3 + $0xdb0] sm:$0xff]
  %v2612 = vld [vmem:[%s3 + $0xdb8] sm:$0xff]
  %v2613 = vld [vmem:[%s3 + $0xdc0] sm:$0xff]
  %v2614 = vld [vmem:[%s3 + $0xdc8] sm:$0xff]
  %v2615 = vld [vmem:[%s3 + $0xdd0] sm:$0xff]
  %v2616 = vld [vmem:[%s3 + $0xdd8] sm:$0xff]
  %v2617 = vld [vmem:[%s3 + $0xde0] sm:$0xff]
  %v2618 = vld [vmem:[%s3 + $0xde8] sm:$0xff]
  %v2619 = vld [vmem:[%s3 + $0xdf0] sm:$0xff]
  %v2620 = vld [vmem:[%s3 + $0xdf8] sm:$0xff]
  %v2621 = vld [vmem:[%s3 + $0xe00] sm:$0xff]
  %v2622 = vld [vmem:[%s3 + $0xe08] sm:$0xff]
  %v2623 = vld [vmem:[%s3 + $0xe10] sm:$0xff]
  %v2624 = vld [vmem:[%s3 + $0xe18] sm:$0xff]
  %v2625 = vld [vmem:[%s3 + $0xe20] sm:$0xff]
  %v2626 = vld [vmem:[%s3 + $0xe28] sm:$0xff]
  %v2627 = vld [vmem:[%s3 + $0xe30] sm:$0xff]
  %v2628 = vld [vmem:[%s3 + $0xe38] sm:$0xff]
  %v2629 = vld [vmem:[%s3 + $0xe40] sm:$0xff]
  %v2630 = vld [vmem:[%s3 + $0xe48] sm:$0xff]
  %v2631 = vld [vmem:[%s3 + $0xe50] sm:$0xff]
  %v2632 = vld [vmem:[%s3 + $0xe58] sm:$0xff]
  %v2633 = vld [vmem:[%s3 + $0xe60] sm:$0xff]
  %v2634 = vld [vmem:[%s3 + $0xe68] sm:$0xff]
  %v2635 = vld [vmem:[%s3 + $0xe70] sm:$0xff]
  %v2636 = vld [vmem:[%s3 + $0xe78] sm:$0xff]
  %v2637 = vld [vmem:[%s3 + $0xe80] sm:$0xff]
  %v2638 = vld [vmem:[%s3 + $0xe88] sm:$0xff]
  %v2639 = vld [vmem:[%s3 + $0xe90] sm:$0xff]
  %v2640 = vld [vmem:[%s3 + $0xe98] sm:$0xff]
  %v2641 = vld [vmem:[%s3 + $0xea0] sm:$0xff]
  %v2642 = vld [vmem:[%s3 + $0xea8] sm:$0xff]
  %v2643 = vld [vmem:[%s3 + $0xeb0] sm:$0xff]
  %v2644 = vld [vmem:[%s3 + $0xeb8] sm:$0xff]
  %v2645 = vld [vmem:[%s3 + $0xec0] sm:$0xff]
  %v2646 = vld [vmem:[%s3 + $0xec8] sm:$0xff]
  %v2647 = vld [vmem:[%s3 + $0xed0] sm:$0xff]
  %v2648 = vld [vmem:[%s3 + $0xed8] sm:$0xff]
  %v2649 = vld [vmem:[%s3 + $0xee0] sm:$0xff]
  %v2650 = vld [vmem:[%s3 + $0xee8] sm:$0xff]
  %v2651 = vld [vmem:[%s3 + $0xef0] sm:$0xff]
  %v2652 = vld [vmem:[%s3 + $0xef8] sm:$0xff]
  %v2653 = vld [vmem:[%s3 + $0xf00] sm:$0xff]
  %v2654 = vld [vmem:[%s3 + $0xf08] sm:$0xff]
  %v2655 = vld [vmem:[%s3 + $0xf10] sm:$0xff]
  %v2656 = vld [vmem:[%s3 + $0xf18] sm:$0xff]
  %v2657 = vld [vmem:[%s3 + $0xf20] sm:$0xff]
  %v2658 = vld [vmem:[%s3 + $0xf28] sm:$0xff]
  %v2659 = vld [vmem:[%s3 + $0xf30] sm:$0xff]
  %v2660 = vld [vmem:[%s3 + $0xf38] sm:$0xff]
  %v2661 = vld [vmem:[%s3 + $0xf40] sm:$0xff]
  %v2662 = vld [vmem:[%s3 + $0xf48] sm:$0xff]
  %v2663 = vld [vmem:[%s3 + $0xf50] sm:$0xff]
  %v2664 = vld [vmem:[%s3 + $0xf58] sm:$0xff]
  %v2665 = vld [vmem:[%s3 + $0xf60] sm:$0xff]
  %v2666 = vld [vmem:[%s3 + $0xf68] sm:$0xff]
  %v2667 = vld [vmem:[%s3 + $0xf70] sm:$0xff]
  %v2668 = vld [vmem:[%s3 + $0xf78] sm:$0xff]
  %v2669 = vld [vmem:[%s3 + $0xf80] sm:$0xff]
  %v2670 = vld [vmem:[%s3 + $0xf88] sm:$0xff]
  %v2671 = vld [vmem:[%s3 + $0xf90] sm:$0xff]
  %v2672 = vld [vmem:[%s3 + $0xf98] sm:$0xff]
  %v2673 = vld [vmem:[%s3 + $0xfa0] sm:$0xff]
  %v2674 = vld [vmem:[%s3 + $0xfa8] sm:$0xff]
  %v2675 = vld [vmem:[%s3 + $0xfb0] sm:$0xff]
  %v2676 = vld [vmem:[%s3 + $0xfb8] sm:$0xff]
  %v2677 = vld [vmem:[%s3 + $0xfc0] sm:$0xff]
  %v2678 = vld [vmem:[%s3 + $0xfc8] sm:$0xff]
  %v2679 = vld [vmem:[%s3 + $0xfd0] sm:$0xff]
  %v2680 = vld [vmem:[%s3 + $0xfd8] sm:$0xff]
  %v2681 = vld [vmem:[%s3 + $0xfe0] sm:$0xff]
  %v2682 = vld [vmem:[%s3 + $0xfe8] sm:$0xff]
  %v2683 = vld [vmem:[%s3 + $0xff0] sm:$0xff]
  %v2684 = vld [vmem:[%s3 + $0xff8] sm:$0xff]
  %v2685 = vld [vmem:[%s3 + $0x1000] sm:$0xff]
  %v2686 = vld [vmem:[%s3 + $0x1008] sm:$0xff]
  %v2687 = vld [vmem:[%s3 + $0x1010] sm:$0xff]
  %v2688 = vld [vmem:[%s3 + $0x1018] sm:$0xff]
  %v2689 = vld [vmem:[%s3 + $0x1020] sm:$0xff]
  %v2690 = vld [vmem:[%s3 + $0x1028] sm:$0xff]
  %v2691 = vld [vmem:[%s3 + $0x1030] sm:$0xff]
  %v2692 = vld [vmem:[%s3 + $0x1038] sm:$0xff]
  %v2693 = vld [vmem:[%s3 + $0x1040] sm:$0xff]
  %v2694 = vld [vmem:[%s3 + $0x1048] sm:$0xff]
  %v2695 = vld [vmem:[%s3 + $0x1050] sm:$0xff]
  %v2696 = vld [vmem:[%s3 + $0x1058] sm:$0xff]
  %v2697 = vld [vmem:[%s3 + $0x1060] sm:$0xff]
  %v2698 = vld [vmem:[%s3 + $0x1068] sm:$0xff]
  %v2699 = vld [vmem:[%s3 + $0x1070] sm:$0xff]
  %v2700 = vld [vmem:[%s3 + $0x1078] sm:$0xff]
  %v2701 = vld [vmem:[%s3 + $0x1080] sm:$0xff]
  %v2702 = vld [vmem:[%s3 + $0x1088] sm:$0xff]
  %v2703 = vld [vmem:[%s3 + $0x1090] sm:$0xff]
  %v2704 = vld [vmem:[%s3 + $0x1098] sm:$0xff]
  %v2705 = vld [vmem:[%s3 + $0x10a0] sm:$0xff]
  %v2706 = vld [vmem:[%s3 + $0x10a8] sm:$0xff]
  %v2707 = vld [vmem:[%s3 + $0x10b0] sm:$0xff]
  %v2708 = vld [vmem:[%s3 + $0x10b8] sm:$0xff]
  %v2709 = vld [vmem:[%s3 + $0x10c0] sm:$0xff]
  %v2710 = vld [vmem:[%s3 + $0x10c8] sm:$0xff]
  %v2711 = vld [vmem:[%s3 + $0x10d0] sm:$0xff]
  %v2712 = vld [vmem:[%s3 + $0x10d8] sm:$0xff]
  %v2713 = vld [vmem:[%s3 + $0x10e0] sm:$0xff]
  %v2714 = vld [vmem:[%s3 + $0x10e8] sm:$0xff]
  %v2715 = vld [vmem:[%s3 + $0x10f0] sm:$0xff]
  %v2716 = vld [vmem:[%s3 + $0x10f8] sm:$0xff]
  %v2717 = vld [vmem:[%s3 + $0x1100] sm:$0xff]
  %v2718 = vld [vmem:[%s3 + $0x1108] sm:$0xff]
  %v2719 = vld [vmem:[%s3 + $0x1110] sm:$0xff]
  %v2720 = vld [vmem:[%s3 + $0x1118] sm:$0xff]
  %v2721 = vld [vmem:[%s3 + $0x1120] sm:$0xff]
  %v2722 = vld [vmem:[%s3 + $0x1128] sm:$0xff]
  %v2723 = vld [vmem:[%s3 + $0x1130] sm:$0xff]
  %v2724 = vld [vmem:[%s3 + $0x1138] sm:$0xff]
  %v2725 = vld [vmem:[%s3 + $0x1140] sm:$0xff]
  %v2726 = vld [vmem:[%s3 + $0x1148] sm:$0xff]
  %v2727 = vld [vmem:[%s3 + $0x1150] sm:$0xff]
  %v2728 = vld [vmem:[%s3 + $0x1158] sm:$0xff]
  %v2729 = vld [vmem:[%s3 + $0x1160] sm:$0xff]
  %v2730 = vld [vmem:[%s3 + $0x1168] sm:$0xff]
  %v2731 = vld [vmem:[%s3 + $0x1170] sm:$0xff]
  %v2732 = vld [vmem:[%s3 + $0x1178] sm:$0xff]
  %v2733 = vld [vmem:[%s3 + $0x1180] sm:$0xff]
  %v2734 = vld [vmem:[%s3 + $0x1188] sm:$0xff]
  %v2735 = vld [vmem:[%s3 + $0x1190] sm:$0xff]
  %v2736 = vld [vmem:[%s3 + $0x1198] sm:$0xff]
  %v2737 = vld [vmem:[%s3 + $0x11a0] sm:$0xff]
  %v2738 = vld [vmem:[%s3 + $0x11a8] sm:$0xff]
  %v2739 = vld [vmem:[%s3 + $0x11b0] sm:$0xff]
  %v2740 = vld [vmem:[%s3 + $0x11b8] sm:$0xff]
  %v2741 = vld [vmem:[%s3 + $0x11c0] sm:$0xff]
  %v2742 = vld [vmem:[%s3 + $0x11c8] sm:$0xff]
  %v2743 = vld [vmem:[%s3 + $0x11d0] sm:$0xff]
  %v2744 = vld [vmem:[%s3 + $0x11d8] sm:$0xff]
  %v2745 = vld [vmem:[%s3 + $0x11e0] sm:$0xff]
  %v2746 = vld [vmem:[%s3 + $0x11e8] sm:$0xff]
  %v2747 = vld [vmem:[%s3 + $0x11f0] sm:$0xff]
  %v2748 = vld [vmem:[%s3 + $0x11f8] sm:$0xff]
  %v2749 = vld [vmem:[%s4] sm:$0x3f]
  %v2751 = vlaneseq
  %v2752 = vshrl.u32 %v2751, 7
  %v2753 = vsub.s32 0, %v2752
  %v2754 = vrot.slane %v2749, %v2753
  %v2755 = vlaneseq
  %v2756 = vshrl.u32 %v2755, 7
  %v2757 = vsub.s32 1, %v2756
  %v2758 = vrot.slane %v2749, %v2757
  %v2759 = vlaneseq
  %v2760 = vshrl.u32 %v2759, 7
  %v2761 = vsub.s32 2, %v2760
  %v2762 = vrot.slane %v2749, %v2761
  %v2763 = vlaneseq
  %v2764 = vshrl.u32 %v2763, 7
  %v2765 = vsub.s32 3, %v2764
  %v2766 = vrot.slane %v2749, %v2765
  %v2767 = vlaneseq
  %v2768 = vshrl.u32 %v2767, 7
  %v2769 = vsub.s32 4, %v2768
  %v2770 = vrot.slane %v2749, %v2769
  %v2771 = vlaneseq
  %v2772 = vshrl.u32 %v2771, 7
  %v2773 = vsub.s32 5, %v2772
  %v2774 = vrot.slane %v2749, %v2773
  %2781 = vmatprep.subr.mxu0 %v2264
  %2782 = vmatpush1.msra.mxu0 %v2263
  %2783 = vmatprep.subr.mxu0 %v2258
  %2784 = vmatpush1.msra.mxu0 %v2257
  %2785 = vmatprep.subr.mxu0 %v2252
  %2786 = vmatpush1.msra.mxu0 %v2251
  %2787 = vmatprep.subr.mxu0 %v2246
  %2788 = vmatpush1.msra.mxu0 %v2245
  %2789 = vmatprep.subr.mxu0 %v2240
  %2790 = vmatpush1.msra.mxu0 %v2239
  %2791 = vmatprep.subr.mxu0 %v2234
  %2792 = vmatpush1.msra.mxu0 %v2233
  %2793 = vmatprep.subr.mxu0 %v2228
  %2794 = vmatpush1.msra.mxu0 %v2227
  %2795 = vmatprep.subr.mxu0 %v2222
  %2796 = vmatpush1.msra.mxu0 %v2221
  %2797 = vmatprep.subr.mxu0 %v2216
  %2798 = vmatpush1.msra.mxu0 %v2215
  %2799 = vmatprep.subr.mxu0 %v2210
  %2800 = vmatpush1.msra.mxu0 %v2209
  %2801 = vmatprep.subr.mxu0 %v2204
  %2802 = vmatpush1.msra.mxu0 %v2203
  %2803 = vmatprep.subr.mxu0 %v2198
  %2804 = vmatpush1.msra.mxu0 %v2197
  %2805 = vmatprep.subr.mxu0 %v2192
  %2806 = vmatpush1.msra.mxu0 %v2191
  %2807 = vmatprep.subr.mxu0 %v2186
  %2808 = vmatpush1.msra.mxu0 %v2185
  %2809 = vmatprep.subr.mxu0 %v2180
  %2810 = vmatpush1.msra.mxu0 %v2179
  %2811 = vmatprep.subr.mxu0 %v2174
  %2812 = vmatpush1.msra.mxu0 %v2173
  %2813 = vmatprep.subr.mxu0 %v2360
  %2814 = vmatpush2.msra.mxu0 %v2359
  %2815 = vmatprep.subr.mxu0 %v2354
  %2816 = vmatpush2.msra.mxu0 %v2353
  %2817 = vmatprep.subr.mxu0 %v2348
  %2818 = vmatpush2.msra.mxu0 %v2347
  %2819 = vmatprep.subr.mxu0 %v2342
  %2820 = vmatpush2.msra.mxu0 %v2341
  %2821 = vmatprep.subr.mxu0 %v2336
  %2822 = vmatpush2.msra.mxu0 %v2335
  %2823 = vmatprep.subr.mxu0 %v2330
  %2824 = vmatpush2.msra.mxu0 %v2329
  %2825 = vmatprep.subr.mxu0 %v2324
  %2826 = vmatpush2.msra.mxu0 %v2323
  %2827 = vmatprep.subr.mxu0 %v2318
  %2828 = vmatpush2.msra.mxu0 %v2317
  %2829 = vmatprep.subr.mxu0 %v2312
  %2830 = vmatpush2.msra.mxu0 %v2311
  %2831 = vmatprep.subr.mxu0 %v2306
  %2832 = vmatpush2.msra.mxu0 %v2305
  %2833 = vmatprep.subr.mxu0 %v2300
  %2834 = vmatpush2.msra.mxu0 %v2299
  %2835 = vmatprep.subr.mxu0 %v2294
  %2836 = vmatpush2.msra.mxu0 %v2293
  %2837 = vmatprep.subr.mxu0 %v2288
  %2838 = vmatpush2.msra.mxu0 %v2287
  %2839 = vmatprep.subr.mxu0 %v2282
  %2840 = vmatpush2.msra.mxu0 %v2281
  %2841 = vmatprep.subr.mxu0 %v2276
  %2842 = vmatpush2.msra.mxu0 %v2275
  %2843 = vmatprep.subr.mxu0 %v2270
  %2844 = vmatpush2.msra.mxu0 %v2269
  %2845 = vmatprep.mubr.f32.mxu0 %v2168
  %2846 = vmatmul.mubr.f32.gmra.mxu0 %v2167
  %v2847 = vpop.f32.mrf.mxu0
  %v2848 = vadd.f32 %v2754, %v2847
  %v2849 = vpop.f32.mrf.mxu0
  %v2850 = vadd.f32 %v2758, %v2849
  %2851 = vdwg.mxu0
  %2852 = vmatprep.subr.mxu0 %v2456
  %2853 = vmatpush1.msra.mxu0 %v2455
  %2854 = vmatprep.subr.mxu0 %v2450
  %2855 = vmatpush1.msra.mxu0 %v2449
  %2856 = vmatprep.subr.mxu0 %v2444
  %2857 = vmatpush1.msra.mxu0 %v2443
  %2858 = vmatprep.subr.mxu0 %v2438
  %2859 = vmatpush1.msra.mxu0 %v2437
  %2860 = vmatprep.subr.mxu0 %v2432
  %2861 = vmatpush1.msra.mxu0 %v2431
  %2862 = vmatprep.subr.mxu0 %v2426
  %2863 = vmatpush1.msra.mxu0 %v2425
  %2864 = vmatprep.subr.mxu0 %v2420
  %2865 = vmatpush1.msra.mxu0 %v2419
  %2866 = vmatprep.subr.mxu0 %v2414
  %2867 = vmatpush1.msra.mxu0 %v2413
  %2868 = vmatprep.subr.mxu0 %v2408
  %2869 = vmatpush1.msra.mxu0 %v2407
  %2870 = vmatprep.subr.mxu0 %v2402
  %2871 = vmatpush1.msra.mxu0 %v2401
  %2872 = vmatprep.subr.mxu0 %v2396
  %2873 = vmatpush1.msra.mxu0 %v2395
  %2874 = vmatprep.subr.mxu0 %v2390
  %2875 = vmatpush1.msra.mxu0 %v2389
  %2876 = vmatprep.subr.mxu0 %v2384
  %2877 = vmatpush1.msra.mxu0 %v2383
  %2878 = vmatprep.subr.mxu0 %v2378
  %2879 = vmatpush1.msra.mxu0 %v2377
  %2880 = vmatprep.subr.mxu0 %v2372
  %2881 = vmatpush1.msra.mxu0 %v2371
  %2882 = vmatprep.subr.mxu0 %v2366
  %2883 = vmatpush1.msra.mxu0 %v2365
  %2884 = vmatprep.subr.mxu0 %v2552
  %2885 = vmatpush2.msra.mxu0 %v2551
  %2886 = vmatprep.subr.mxu0 %v2546
  %2887 = vmatpush2.msra.mxu0 %v2545
  %2888 = vmatprep.subr.mxu0 %v2540
  %2889 = vmatpush2.msra.mxu0 %v2539
  %2890 = vmatprep.subr.mxu0 %v2534
  %2891 = vmatpush2.msra.mxu0 %v2533
  %2892 = vmatprep.subr.mxu0 %v2528
  %2893 = vmatpush2.msra.mxu0 %v2527
  %2894 = vmatprep.subr.mxu0 %v2522
  %2895 = vmatpush2.msra.mxu0 %v2521
  %2896 = vmatprep.subr.mxu0 %v2516
  %2897 = vmatpush2.msra.mxu0 %v2515
  %2898 = vmatprep.subr.mxu0 %v2510
  %2899 = vmatpush2.msra.mxu0 %v2509
  %2900 = vmatprep.subr.mxu0 %v2504
  %2901 = vmatpush2.msra.mxu0 %v2503
  %2902 = vmatprep.subr.mxu0 %v2498
  %2903 = vmatpush2.msra.mxu0 %v2497
  %2904 = vmatprep.subr.mxu0 %v2492
  %2905 = vmatpush2.msra.mxu0 %v2491
  %2906 = vmatprep.subr.mxu0 %v2486
  %2907 = vmatpush2.msra.mxu0 %v2485
  %2908 = vmatprep.subr.mxu0 %v2480
  %2909 = vmatpush2.msra.mxu0 %v2479
  %2910 = vmatprep.subr.mxu0 %v2474
  %2911 = vmatpush2.msra.mxu0 %v2473
  %2912 = vmatprep.subr.mxu0 %v2468
  %2913 = vmatpush2.msra.mxu0 %v2467
  %2914 = vmatprep.subr.mxu0 %v2462
  %2915 = vmatpush2.msra.mxu0 %v2461
  %2916 = vmatprep.mubr.f32.mxu0 %v2170
  %2917 = vmatmul.mubr.f32.gmra.mxu0 %v2169
  %v2918 = vpop.f32.mrf.mxu0
  %v2919 = vadd.f32 %v2848, %v2918
  %v2920 = vpop.f32.mrf.mxu0
  %v2921 = vadd.f32 %v2850, %v2920
  %2922 = vdwg.mxu0
  %2923 = vmatprep.subr.mxu0 %v2648
  %2924 = vmatpush1.msra.mxu0 %v2647
  %2925 = vmatprep.subr.mxu0 %v2642
  %2926 = vmatpush1.msra.mxu0 %v2641
  %2927 = vmatprep.subr.mxu0 %v2636
  %2928 = vmatpush1.msra.mxu0 %v2635
  %2929 = vmatprep.subr.mxu0 %v2630
  %2930 = vmatpush1.msra.mxu0 %v2629
  %2931 = vmatprep.subr.mxu0 %v2624
  %2932 = vmatpush1.msra.mxu0 %v2623
  %2933 = vmatprep.subr.mxu0 %v2618
  %2934 = vmatpush1.msra.mxu0 %v2617
  %2935 = vmatprep.subr.mxu0 %v2612
  %2936 = vmatpush1.msra.mxu0 %v2611
  %2937 = vmatprep.subr.mxu0 %v2606
  %2938 = vmatpush1.msra.mxu0 %v2605
  %2939 = vmatprep.subr.mxu0 %v2600
  %2940 = vmatpush1.msra.mxu0 %v2599
  %2941 = vmatprep.subr.mxu0 %v2594
  %2942 = vmatpush1.msra.mxu0 %v2593
  %2943 = vmatprep.subr.mxu0 %v2588
  %2944 = vmatpush1.msra.mxu0 %v2587
  %2945 = vmatprep.subr.mxu0 %v2582
  %2946 = vmatpush1.msra.mxu0 %v2581
  %2947 = vmatprep.subr.mxu0 %v2576
  %2948 = vmatpush1.msra.mxu0 %v2575
  %2949 = vmatprep.subr.mxu0 %v2570
  %2950 = vmatpush1.msra.mxu0 %v2569
  %2951 = vmatprep.subr.mxu0 %v2564
  %2952 = vmatpush1.msra.mxu0 %v2563
  %2953 = vmatprep.subr.mxu0 %v2558
  %2954 = vmatpush1.msra.mxu0 %v2557
  %2955 = vmatprep.subr.mxu0 %v2744
  %2956 = vmatpush2.msra.mxu0 %v2743
  %2957 = vmatprep.subr.mxu0 %v2738
  %2958 = vmatpush2.msra.mxu0 %v2737
  %2959 = vmatprep.subr.mxu0 %v2732
  %2960 = vmatpush2.msra.mxu0 %v2731
  %2961 = vmatprep.subr.mxu0 %v2726
  %2962 = vmatpush2.msra.mxu0 %v2725
  %2963 = vmatprep.subr.mxu0 %v2720
  %2964 = vmatpush2.msra.mxu0 %v2719
  %2965 = vmatprep.subr.mxu0 %v2714
  %2966 = vmatpush2.msra.mxu0 %v2713
  %2967 = vmatprep.subr.mxu0 %v2708
  %2968 = vmatpush2.msra.mxu0 %v2707
  %2969 = vmatprep.subr.mxu0 %v2702
  %2970 = vmatpush2.msra.mxu0 %v2701
  %2971 = vmatprep.subr.mxu0 %v2696
  %2972 = vmatpush2.msra.mxu0 %v2695
  %2973 = vmatprep.subr.mxu0 %v2690
  %2974 = vmatpush2.msra.mxu0 %v2689
  %2975 = vmatprep.subr.mxu0 %v2684
  %2976 = vmatpush2.msra.mxu0 %v2683
  %2977 = vmatprep.subr.mxu0 %v2678
  %2978 = vmatpush2.msra.mxu0 %v2677
  %2979 = vmatprep.subr.mxu0 %v2672
  %2980 = vmatpush2.msra.mxu0 %v2671
  %2981 = vmatprep.subr.mxu0 %v2666
  %2982 = vmatpush2.msra.mxu0 %v2665
  %2983 = vmatprep.subr.mxu0 %v2660
  %2984 = vmatpush2.msra.mxu0 %v2659
  %2985 = vmatprep.subr.mxu0 %v2654
  %2986 = vmatpush2.msra.mxu0 %v2653
  %2987 = vmatprep.mubr.f32.mxu0 %v2172
  %2988 = vmatmul.mubr.f32.gmra.mxu0 %v2171
  %v2989 = vpop.f32.mrf.mxu0
  %v2990 = vadd.f32 %v2919, %v2989
  %v2991 = vpop.f32.mrf.mxu0
  %v2992 = vadd.f32 %v2921, %v2991
  %2993 = vdwg.mxu0
  %2994 = vmatprep.subr.mxu0 %v2266
  %2995 = vmatpush1.msra.mxu0 %v2265
  %2996 = vmatprep.subr.mxu0 %v2260
  %2997 = vmatpush1.msra.mxu0 %v2259
  %2998 = vmatprep.subr.mxu0 %v2254
  %2999 = vmatpush1.msra.mxu0 %v2253
  %3000 = vmatprep.subr.mxu0 %v2248
  %3001 = vmatpush1.msra.mxu0 %v2247
  %3002 = vmatprep.subr.mxu0 %v2242
  %3003 = vmatpush1.msra.mxu0 %v2241
  %3004 = vmatprep.subr.mxu0 %v2236
  %3005 = vmatpush1.msra.mxu0 %v2235
  %3006 = vmatprep.subr.mxu0 %v2230
  %3007 = vmatpush1.msra.mxu0 %v2229
  %3008 = vmatprep.subr.mxu0 %v2224
  %3009 = vmatpush1.msra.mxu0 %v2223
  %3010 = vmatprep.subr.mxu0 %v2218
  %3011 = vmatpush1.msra.mxu0 %v2217
  %3012 = vmatprep.subr.mxu0 %v2212
  %3013 = vmatpush1.msra.mxu0 %v2211
  %3014 = vmatprep.subr.mxu0 %v2206
  %3015 = vmatpush1.msra.mxu0 %v2205
  %3016 = vmatprep.subr.mxu0 %v2200
  %3017 = vmatpush1.msra.mxu0 %v2199
  %3018 = vmatprep.subr.mxu0 %v2194
  %3019 = vmatpush1.msra.mxu0 %v2193
  %3020 = vmatprep.subr.mxu0 %v2188
  %3021 = vmatpush1.msra.mxu0 %v2187
  %3022 = vmatprep.subr.mxu0 %v2182
  %3023 = vmatpush1.msra.mxu0 %v2181
  %3024 = vmatprep.subr.mxu0 %v2176
  %3025 = vmatpush1.msra.mxu0 %v2175
  %3026 = vmatprep.subr.mxu0 %v2362
  %3027 = vmatpush2.msra.mxu0 %v2361
  %3028 = vmatprep.subr.mxu0 %v2356
  %3029 = vmatpush2.msra.mxu0 %v2355
  %3030 = vmatprep.subr.mxu0 %v2350
  %3031 = vmatpush2.msra.mxu0 %v2349
  %3032 = vmatprep.subr.mxu0 %v2344
  %3033 = vmatpush2.msra.mxu0 %v2343
  %3034 = vmatprep.subr.mxu0 %v2338
  %3035 = vmatpush2.msra.mxu0 %v2337
  %3036 = vmatprep.subr.mxu0 %v2332
  %3037 = vmatpush2.msra.mxu0 %v2331
  %3038 = vmatprep.subr.mxu0 %v2326
  %3039 = vmatpush2.msra.mxu0 %v2325
  %3040 = vmatprep.subr.mxu0 %v2320
  %3041 = vmatpush2.msra.mxu0 %v2319
  %3042 = vmatprep.subr.mxu0 %v2314
  %3043 = vmatpush2.msra.mxu0 %v2313
  %3044 = vmatprep.subr.mxu0 %v2308
  %3045 = vmatpush2.msra.mxu0 %v2307
  %3046 = vmatprep.subr.mxu0 %v2302
  %3047 = vmatpush2.msra.mxu0 %v2301
  %3048 = vmatprep.subr.mxu0 %v2296
  %3049 = vmatpush2.msra.mxu0 %v2295
  %3050 = vmatprep.subr.mxu0 %v2290
  %3051 = vmatpush2.msra.mxu0 %v2289
  %3052 = vmatprep.subr.mxu0 %v2284
  %3053 = vmatpush2.msra.mxu0 %v2283
  %3054 = vmatprep.subr.mxu0 %v2278
  %3055 = vmatpush2.msra.mxu0 %v2277
  %3056 = vmatprep.subr.mxu0 %v2272
  %3057 = vmatpush2.msra.mxu0 %v2271
  %3058 = vmatprep.mubr.f32.mxu0 %v2168
  %3059 = vmatmul.mubr.f32.gmra.mxu0 %v2167
  %v3060 = vpop.f32.mrf.mxu0
  %v3061 = vadd.f32 %v2762, %v3060
  %v3062 = vpop.f32.mrf.mxu0
  %v3063 = vadd.f32 %v2766, %v3062
  %3064 = vdwg.mxu0
  %3065 = vmatprep.subr.mxu0 %v2458
  %3066 = vmatpush1.msra.mxu0 %v2457
  %3067 = vmatprep.subr.mxu0 %v2452
  %3068 = vmatpush1.msra.mxu0 %v2451
  %3069 = vmatprep.subr.mxu0 %v2446
  %3070 = vmatpush1.msra.mxu0 %v2445
  %3071 = vmatprep.subr.mxu0 %v2440
  %3072 = vmatpush1.msra.mxu0 %v2439
  %3073 = vmatprep.subr.mxu0 %v2434
  %3074 = vmatpush1.msra.mxu0 %v2433
  %3075 = vmatprep.subr.mxu0 %v2428
  %3076 = vmatpush1.msra.mxu0 %v2427
  %3077 = vmatprep.subr.mxu0 %v2422
  %3078 = vmatpush1.msra.mxu0 %v2421
  %3079 = vmatprep.subr.mxu0 %v2416
  %3080 = vmatpush1.msra.mxu0 %v2415
  %3081 = vmatprep.subr.mxu0 %v2410
  %3082 = vmatpush1.msra.mxu0 %v2409
  %3083 = vmatprep.subr.mxu0 %v2404
  %3084 = vmatpush1.msra.mxu0 %v2403
  %3085 = vmatprep.subr.mxu0 %v2398
  %3086 = vmatpush1.msra.mxu0 %v2397
  %3087 = vmatprep.subr.mxu0 %v2392
  %3088 = vmatpush1.msra.mxu0 %v2391
  %3089 = vmatprep.subr.mxu0 %v2386
  %3090 = vmatpush1.msra.mxu0 %v2385
  %3091 = vmatprep.subr.mxu0 %v2380
  %3092 = vmatpush1.msra.mxu0 %v2379
  %3093 = vmatprep.subr.mxu0 %v2374
  %3094 = vmatpush1.msra.mxu0 %v2373
  %3095 = vmatprep.subr.mxu0 %v2368
  %3096 = vmatpush1.msra.mxu0 %v2367
  %3097 = vmatprep.subr.mxu0 %v2554
  %3098 = vmatpush2.msra.mxu0 %v2553
  %3099 = vmatprep.subr.mxu0 %v2548
  %3100 = vmatpush2.msra.mxu0 %v2547
  %3101 = vmatprep.subr.mxu0 %v2542
  %3102 = vmatpush2.msra.mxu0 %v2541
  %3103 = vmatprep.subr.mxu0 %v2536
  %3104 = vmatpush2.msra.mxu0 %v2535
  %3105 = vmatprep.subr.mxu0 %v2530
  %3106 = vmatpush2.msra.mxu0 %v2529
  %3107 = vmatprep.subr.mxu0 %v2524
  %3108 = vmatpush2.msra.mxu0 %v2523
  %3109 = vmatprep.subr.mxu0 %v2518
  %3110 = vmatpush2.msra.mxu0 %v2517
  %3111 = vmatprep.subr.mxu0 %v2512
  %3112 = vmatpush2.msra.mxu0 %v2511
  %3113 = vmatprep.subr.mxu0 %v2506
  %3114 = vmatpush2.msra.mxu0 %v2505
  %3115 = vmatprep.subr.mxu0 %v2500
  %3116 = vmatpush2.msra.mxu0 %v2499
  %3117 = vmatprep.subr.mxu0 %v2494
  %3118 = vmatpush2.msra.mxu0 %v2493
  %3119 = vmatprep.subr.mxu0 %v2488
  %3120 = vmatpush2.msra.mxu0 %v2487
  %3121 = vmatprep.subr.mxu0 %v2482
  %3122 = vmatpush2.msra.mxu0 %v2481
  %3123 = vmatprep.subr.mxu0 %v2476
  %3124 = vmatpush2.msra.mxu0 %v2475
  %3125 = vmatprep.subr.mxu0 %v2470
  %3126 = vmatpush2.msra.mxu0 %v2469
  %3127 = vmatprep.subr.mxu0 %v2464
  %3128 = vmatpush2.msra.mxu0 %v2463
  %3129 = vmatprep.mubr.f32.mxu0 %v2170
  %3130 = vmatmul.mubr.f32.gmra.mxu0 %v2169
  %v3131 = vpop.f32.mrf.mxu0
  %v3132 = vadd.f32 %v3061, %v3131
  %v3133 = vpop.f32.mrf.mxu0
  %v3134 = vadd.f32 %v3063, %v3133
  %3135 = vdwg.mxu0
  %3136 = vmatprep.subr.mxu0 %v2650
  %3137 = vmatpush1.msra.mxu0 %v2649
  %3138 = vmatprep.subr.mxu0 %v2644
  %3139 = vmatpush1.msra.mxu0 %v2643
  %3140 = vmatprep.subr.mxu0 %v2638
  %3141 = vmatpush1.msra.mxu0 %v2637
  %3142 = vmatprep.subr.mxu0 %v2632
  %3143 = vmatpush1.msra.mxu0 %v2631
  %3144 = vmatprep.subr.mxu0 %v2626
  %3145 = vmatpush1.msra.mxu0 %v2625
  %3146 = vmatprep.subr.mxu0 %v2620
  %3147 = vmatpush1.msra.mxu0 %v2619
  %3148 = vmatprep.subr.mxu0 %v2614
  %3149 = vmatpush1.msra.mxu0 %v2613
  %3150 = vmatprep.subr.mxu0 %v2608
  %3151 = vmatpush1.msra.mxu0 %v2607
  %3152 = vmatprep.subr.mxu0 %v2602
  %3153 = vmatpush1.msra.mxu0 %v2601
  %3154 = vmatprep.subr.mxu0 %v2596
  %3155 = vmatpush1.msra.mxu0 %v2595
  %3156 = vmatprep.subr.mxu0 %v2590
  %3157 = vmatpush1.msra.mxu0 %v2589
  %3158 = vmatprep.subr.mxu0 %v2584
  %3159 = vmatpush1.msra.mxu0 %v2583
  %3160 = vmatprep.subr.mxu0 %v2578
  %3161 = vmatpush1.msra.mxu0 %v2577
  %3162 = vmatprep.subr.mxu0 %v2572
  %3163 = vmatpush1.msra.mxu0 %v2571
  %3164 = vmatprep.subr.mxu0 %v2566
  %3165 = vmatpush1.msra.mxu0 %v2565
  %3166 = vmatprep.subr.mxu0 %v2560
  %3167 = vmatpush1.msra.mxu0 %v2559
  %3168 = vmatprep.subr.mxu0 %v2746
  %3169 = vmatpush2.msra.mxu0 %v2745
  %3170 = vmatprep.subr.mxu0 %v2740
  %3171 = vmatpush2.msra.mxu0 %v2739
  %3172 = vmatprep.subr.mxu0 %v2734
  %3173 = vmatpush2.msra.mxu0 %v2733
  %3174 = vmatprep.subr.mxu0 %v2728
  %3175 = vmatpush2.msra.mxu0 %v2727
  %3176 = vmatprep.subr.mxu0 %v2722
  %3177 = vmatpush2.msra.mxu0 %v2721
  %3178 = vmatprep.subr.mxu0 %v2716
  %3179 = vmatpush2.msra.mxu0 %v2715
  %3180 = vmatprep.subr.mxu0 %v2710
  %3181 = vmatpush2.msra.mxu0 %v2709
  %3182 = vmatprep.subr.mxu0 %v2704
  %3183 = vmatpush2.msra.mxu0 %v2703
  %3184 = vmatprep.subr.mxu0 %v2698
  %3185 = vmatpush2.msra.mxu0 %v2697
  %3186 = vmatprep.subr.mxu0 %v2692
  %3187 = vmatpush2.msra.mxu0 %v2691
  %3188 = vmatprep.subr.mxu0 %v2686
  %3189 = vmatpush2.msra.mxu0 %v2685
  %3190 = vmatprep.subr.mxu0 %v2680
  %3191 = vmatpush2.msra.mxu0 %v2679
  %3192 = vmatprep.subr.mxu0 %v2674
  %3193 = vmatpush2.msra.mxu0 %v2673
  %3194 = vmatprep.subr.mxu0 %v2668
  %3195 = vmatpush2.msra.mxu0 %v2667
  %3196 = vmatprep.subr.mxu0 %v2662
  %3197 = vmatpush2.msra.mxu0 %v2661
  %3198 = vmatprep.subr.mxu0 %v2656
  %3199 = vmatpush2.msra.mxu0 %v2655
  %3200 = vmatprep.mubr.f32.mxu0 %v2172
  %3201 = vmatmul.mubr.f32.gmra.mxu0 %v2171
  %v3202 = vpop.f32.mrf.mxu0
  %v3203 = vadd.f32 %v3132, %v3202
  %v3204 = vpop.f32.mrf.mxu0
  %v3205 = vadd.f32 %v3134, %v3204
  %3206 = vdwg.mxu0
  %3207 = vmatprep.subr.mxu0 %v2268
  %3208 = vmatpush1.msra.mxu0 %v2267
  %3209 = vmatprep.subr.mxu0 %v2262
  %3210 = vmatpush1.msra.mxu0 %v2261
  %3211 = vmatprep.subr.mxu0 %v2256
  %3212 = vmatpush1.msra.mxu0 %v2255
  %3213 = vmatprep.subr.mxu0 %v2250
  %3214 = vmatpush1.msra.mxu0 %v2249
  %3215 = vmatprep.subr.mxu0 %v2244
  %3216 = vmatpush1.msra.mxu0 %v2243
  %3217 = vmatprep.subr.mxu0 %v2238
  %3218 = vmatpush1.msra.mxu0 %v2237
  %3219 = vmatprep.subr.mxu0 %v2232
  %3220 = vmatpush1.msra.mxu0 %v2231
  %3221 = vmatprep.subr.mxu0 %v2226
  %3222 = vmatpush1.msra.mxu0 %v2225
  %3223 = vmatprep.subr.mxu0 %v2220
  %3224 = vmatpush1.msra.mxu0 %v2219
  %3225 = vmatprep.subr.mxu0 %v2214
  %3226 = vmatpush1.msra.mxu0 %v2213
  %3227 = vmatprep.subr.mxu0 %v2208
  %3228 = vmatpush1.msra.mxu0 %v2207
  %3229 = vmatprep.subr.mxu0 %v2202
  %3230 = vmatpush1.msra.mxu0 %v2201
  %3231 = vmatprep.subr.mxu0 %v2196
  %3232 = vmatpush1.msra.mxu0 %v2195
  %3233 = vmatprep.subr.mxu0 %v2190
  %3234 = vmatpush1.msra.mxu0 %v2189
  %3235 = vmatprep.subr.mxu0 %v2184
  %3236 = vmatpush1.msra.mxu0 %v2183
  %3237 = vmatprep.subr.mxu0 %v2178
  %3238 = vmatpush1.msra.mxu0 %v2177
  %3239 = vmatprep.subr.mxu0 %v2364
  %3240 = vmatpush2.msra.mxu0 %v2363
  %3241 = vmatprep.subr.mxu0 %v2358
  %3242 = vmatpush2.msra.mxu0 %v2357
  %3243 = vmatprep.subr.mxu0 %v2352
  %3244 = vmatpush2.msra.mxu0 %v2351
  %3245 = vmatprep.subr.mxu0 %v2346
  %3246 = vmatpush2.msra.mxu0 %v2345
  %3247 = vmatprep.subr.mxu0 %v2340
  %3248 = vmatpush2.msra.mxu0 %v2339
  %3249 = vmatprep.subr.mxu0 %v2334
  %3250 = vmatpush2.msra.mxu0 %v2333
  %3251 = vmatprep.subr.mxu0 %v2328
  %3252 = vmatpush2.msra.mxu0 %v2327
  %3253 = vmatprep.subr.mxu0 %v2322
  %3254 = vmatpush2.msra.mxu0 %v2321
  %3255 = vmatprep.subr.mxu0 %v2316
  %3256 = vmatpush2.msra.mxu0 %v2315
  %3257 = vmatprep.subr.mxu0 %v2310
  %3258 = vmatpush2.msra.mxu0 %v2309
  %3259 = vmatprep.subr.mxu0 %v2304
  %3260 = vmatpush2.msra.mxu0 %v2303
  %3261 = vmatprep.subr.mxu0 %v2298
  %3262 = vmatpush2.msra.mxu0 %v2297
  %3263 = vmatprep.subr.mxu0 %v2292
  %3264 = vmatpush2.msra.mxu0 %v2291
  %3265 = vmatprep.subr.mxu0 %v2286
  %3266 = vmatpush2.msra.mxu0 %v2285
  %3267 = vmatprep.subr.mxu0 %v2280
  %3268 = vmatpush2.msra.mxu0 %v2279
  %3269 = vmatprep.subr.mxu0 %v2274
  %3270 = vmatpush2.msra.mxu0 %v2273
  %3271 = vmatprep.mubr.f32.mxu0 %v2168
  %3272 = vmatmul.mubr.f32.gmra.mxu0 %v2167
  %v3273 = vpop.f32.mrf.mxu0
  %v3274 = vadd.f32 %v2770, %v3273
  %v3275 = vpop.f32.mrf.mxu0
  %v3276 = vadd.f32 %v2774, %v3275
  %3277 = vdwg.mxu0
  %3278 = vmatprep.subr.mxu0 %v2460
  %3279 = vmatpush1.msra.mxu0 %v2459
  %3280 = vmatprep.subr.mxu0 %v2454
  %3281 = vmatpush1.msra.mxu0 %v2453
  %3282 = vmatprep.subr.mxu0 %v2448
  %3283 = vmatpush1.msra.mxu0 %v2447
  %3284 = vmatprep.subr.mxu0 %v2442
  %3285 = vmatpush1.msra.mxu0 %v2441
  %3286 = vmatprep.subr.mxu0 %v2436
  %3287 = vmatpush1.msra.mxu0 %v2435
  %3288 = vmatprep.subr.mxu0 %v2430
  %3289 = vmatpush1.msra.mxu0 %v2429
  %3290 = vmatprep.subr.mxu0 %v2424
  %3291 = vmatpush1.msra.mxu0 %v2423
  %3292 = vmatprep.subr.mxu0 %v2418
  %3293 = vmatpush1.msra.mxu0 %v2417
  %3294 = vmatprep.subr.mxu0 %v2412
  %3295 = vmatpush1.msra.mxu0 %v2411
  %3296 = vmatprep.subr.mxu0 %v2406
  %3297 = vmatpush1.msra.mxu0 %v2405
  %3298 = vmatprep.subr.mxu0 %v2400
  %3299 = vmatpush1.msra.mxu0 %v2399
  %3300 = vmatprep.subr.mxu0 %v2394
  %3301 = vmatpush1.msra.mxu0 %v2393
  %3302 = vmatprep.subr.mxu0 %v2388
  %3303 = vmatpush1.msra.mxu0 %v2387
  %3304 = vmatprep.subr.mxu0 %v2382
  %3305 = vmatpush1.msra.mxu0 %v2381
  %3306 = vmatprep.subr.mxu0 %v2376
  %3307 = vmatpush1.msra.mxu0 %v2375
  %3308 = vmatprep.subr.mxu0 %v2370
  %3309 = vmatpush1.msra.mxu0 %v2369
  %3310 = vmatprep.subr.mxu0 %v2556
  %3311 = vmatpush2.msra.mxu0 %v2555
  %3312 = vmatprep.subr.mxu0 %v2550
  %3313 = vmatpush2.msra.mxu0 %v2549
  %3314 = vmatprep.subr.mxu0 %v2544
  %3315 = vmatpush2.msra.mxu0 %v2543
  %3316 = vmatprep.subr.mxu0 %v2538
  %3317 = vmatpush2.msra.mxu0 %v2537
  %3318 = vmatprep.subr.mxu0 %v2532
  %3319 = vmatpush2.msra.mxu0 %v2531
  %3320 = vmatprep.subr.mxu0 %v2526
  %3321 = vmatpush2.msra.mxu0 %v2525
  %3322 = vmatprep.subr.mxu0 %v2520
  %3323 = vmatpush2.msra.mxu0 %v2519
  %3324 = vmatprep.subr.mxu0 %v2514
  %3325 = vmatpush2.msra.mxu0 %v2513
  %3326 = vmatprep.subr.mxu0 %v2508
  %3327 = vmatpush2.msra.mxu0 %v2507
  %3328 = vmatprep.subr.mxu0 %v2502
  %3329 = vmatpush2.msra.mxu0 %v2501
  %3330 = vmatprep.subr.mxu0 %v2496
  %3331 = vmatpush2.msra.mxu0 %v2495
  %3332 = vmatprep.subr.mxu0 %v2490
  %3333 = vmatpush2.msra.mxu0 %v2489
  %3334 = vmatprep.subr.mxu0 %v2484
  %3335 = vmatpush2.msra.mxu0 %v2483
  %3336 = vmatprep.subr.mxu0 %v2478
  %3337 = vmatpush2.msra.mxu0 %v2477
  %3338 = vmatprep.subr.mxu0 %v2472
  %3339 = vmatpush2.msra.mxu0 %v2471
  %3340 = vmatprep.subr.mxu0 %v2466
  %3341 = vmatpush2.msra.mxu0 %v2465
  %3342 = vmatprep.mubr.f32.mxu0 %v2170
  %3343 = vmatmul.mubr.f32.gmra.mxu0 %v2169
  %v3344 = vpop.f32.mrf.mxu0
  %v3345 = vadd.f32 %v3274, %v3344
  %v3346 = vpop.f32.mrf.mxu0
  %v3347 = vadd.f32 %v3276, %v3346
  %3348 = vdwg.mxu0
  %3349 = vmatprep.subr.mxu0 %v2652
  %3350 = vmatpush1.msra.mxu0 %v2651
  %3351 = vmatprep.subr.mxu0 %v2646
  %3352 = vmatpush1.msra.mxu0 %v2645
  %3353 = vmatprep.subr.mxu0 %v2640
  %3354 = vmatpush1.msra.mxu0 %v2639
  %3355 = vmatprep.subr.mxu0 %v2634
  %3356 = vmatpush1.msra.mxu0 %v2633
  %3357 = vmatprep.subr.mxu0 %v2628
  %3358 = vmatpush1.msra.mxu0 %v2627
  %3359 = vmatprep.subr.mxu0 %v2622
  %3360 = vmatpush1.msra.mxu0 %v2621
  %3361 = vmatprep.subr.mxu0 %v2616
  %3362 = vmatpush1.msra.mxu0 %v2615
  %3363 = vmatprep.subr.mxu0 %v2610
  %3364 = vmatpush1.msra.mxu0 %v2609
  %3365 = vmatprep.subr.mxu0 %v2604
  %3366 = vmatpush1.msra.mxu0 %v2603
  %3367 = vmatprep.subr.mxu0 %v2598
  %3368 = vmatpush1.msra.mxu0 %v2597
  %3369 = vmatprep.subr.mxu0 %v2592
  %3370 = vmatpush1.msra.mxu0 %v2591
  %3371 = vmatprep.subr.mxu0 %v2586
  %3372 = vmatpush1.msra.mxu0 %v2585
  %3373 = vmatprep.subr.mxu0 %v2580
  %3374 = vmatpush1.msra.mxu0 %v2579
  %3375 = vmatprep.subr.mxu0 %v2574
  %3376 = vmatpush1.msra.mxu0 %v2573
  %3377 = vmatprep.subr.mxu0 %v2568
  %3378 = vmatpush1.msra.mxu0 %v2567
  %3379 = vmatprep.subr.mxu0 %v2562
  %3380 = vmatpush1.msra.mxu0 %v2561
  %3381 = vmatprep.subr.mxu0 %v2748
  %3382 = vmatpush2.msra.mxu0 %v2747
  %3383 = vmatprep.subr.mxu0 %v2742
  %3384 = vmatpush2.msra.mxu0 %v2741
  %3385 = vmatprep.subr.mxu0 %v2736
  %3386 = vmatpush2.msra.mxu0 %v2735
  %3387 = vmatprep.subr.mxu0 %v2730
  %3388 = vmatpush2.msra.mxu0 %v2729
  %3389 = vmatprep.subr.mxu0 %v2724
  %3390 = vmatpush2.msra.mxu0 %v2723
  %3391 = vmatprep.subr.mxu0 %v2718
  %3392 = vmatpush2.msra.mxu0 %v2717
  %3393 = vmatprep.subr.mxu0 %v2712
  %3394 = vmatpush2.msra.mxu0 %v2711
  %3395 = vmatprep.subr.mxu0 %v2706
  %3396 = vmatpush2.msra.mxu0 %v2705
  %3397 = vmatprep.subr.mxu0 %v2700
  %3398 = vmatpush2.msra.mxu0 %v2699
  %3399 = vmatprep.subr.mxu0 %v2694
  %3400 = vmatpush2.msra.mxu0 %v2693
  %3401 = vmatprep.subr.mxu0 %v2688
  %3402 = vmatpush2.msra.mxu0 %v2687
  %3403 = vmatprep.subr.mxu0 %v2682
  %3404 = vmatpush2.msra.mxu0 %v2681
  %3405 = vmatprep.subr.mxu0 %v2676
  %3406 = vmatpush2.msra.mxu0 %v2675
  %3407 = vmatprep.subr.mxu0 %v2670
  %3408 = vmatpush2.msra.mxu0 %v2669
  %3409 = vmatprep.subr.mxu0 %v2664
  %3410 = vmatpush2.msra.mxu0 %v2663
  %3411 = vmatprep.subr.mxu0 %v2658
  %3412 = vmatpush2.msra.mxu0 %v2657
  %3413 = vmatprep.mubr.f32.mxu0 %v2172
  %3414 = vmatmul.mubr.f32.gmra.mxu0 %v2171
  %v3415 = vpop.f32.mrf.mxu0
  %v3416 = vadd.f32 %v3345, %v3415
  %v3417 = vpop.f32.mrf.mxu0
  %v3418 = vadd.f32 %v3347, %v3417
  %3419 = vdwg.mxu0
  %v3420 = vmax.f32 %v2990, 0.0
  %v3421 = vmax.f32 %v2992, 0.0
  %v3422 = vmax.f32 %v3203, 0.0
  %v3423 = vmax.f32 %v3205, 0.0
  %v3424 = vmax.f32 %v3416, 0.0
  %v3425 = vmax.f32 %v3418, 0.0
  %v3426 = vld [vmem:[%s5] sm:$0xff]
  %v3427 = vld [vmem:[%s5 + $0x8] sm:$0xff]
  %v3428 = vld [vmem:[%s5 + $0x10] sm:$0xff]
  %v3429 = vld [vmem:[%s5 + $0x18] sm:$0xff]
  %v3430 = vld [vmem:[%s5 + $0x20] sm:$0xff]
  %v3431 = vld [vmem:[%s5 + $0x28] sm:$0xff]
  %v3432 = vld [vmem:[%s5 + $0x30] sm:$0xff]
  %v3433 = vld [vmem:[%s5 + $0x38] sm:$0xff]
  %v3434 = vld [vmem:[%s5 + $0x40] sm:$0xff]
  %v3435 = vld [vmem:[%s5 + $0x48] sm:$0xff]
  %v3436 = vld [vmem:[%s5 + $0x50] sm:$0xff]
  %v3437 = vld [vmem:[%s5 + $0x58] sm:$0xff]
  %v3438 = vld [vmem:[%s5 + $0x60] sm:$0xff]
  %v3439 = vld [vmem:[%s5 + $0x68] sm:$0xff]
  %v3440 = vld [vmem:[%s5 + $0x70] sm:$0xff]
  %v3441 = vld [vmem:[%s5 + $0x78] sm:$0xff]
  %v3442 = vld [vmem:[%s5 + $0x80] sm:$0xff]
  %v3443 = vld [vmem:[%s5 + $0x88] sm:$0xff]
  %v3444 = vld [vmem:[%s5 + $0x90] sm:$0xff]
  %v3445 = vld [vmem:[%s5 + $0x98] sm:$0xff]
  %v3446 = vld [vmem:[%s5 + $0xa0] sm:$0xff]
  %v3447 = vld [vmem:[%s5 + $0xa8] sm:$0xff]
  %v3448 = vld [vmem:[%s5 + $0xb0] sm:$0xff]
  %v3449 = vld [vmem:[%s5 + $0xb8] sm:$0xff]
  %v3450 = vld [vmem:[%s5 + $0xc0] sm:$0xff]
  %v3451 = vld [vmem:[%s5 + $0xc8] sm:$0xff]
  %v3452 = vld [vmem:[%s5 + $0xd0] sm:$0xff]
  %v3453 = vld [vmem:[%s5 + $0xd8] sm:$0xff]
  %v3454 = vld [vmem:[%s5 + $0xe0] sm:$0xff]
  %v3455 = vld [vmem:[%s5 + $0xe8] sm:$0xff]
  %v3456 = vld [vmem:[%s5 + $0xf0] sm:$0xff]
  %v3457 = vld [vmem:[%s5 + $0xf8] sm:$0xff]
  %v3458 = vld [vmem:[%s5 + $0x100] sm:$0xff]
  %v3459 = vld [vmem:[%s5 + $0x108] sm:$0xff]
  %v3460 = vld [vmem:[%s5 + $0x110] sm:$0xff]
  %v3461 = vld [vmem:[%s5 + $0x118] sm:$0xff]
  %v3462 = vld [vmem:[%s5 + $0x120] sm:$0xff]
  %v3463 = vld [vmem:[%s5 + $0x128] sm:$0xff]
  %v3464 = vld [vmem:[%s5 + $0x130] sm:$0xff]
  %v3465 = vld [vmem:[%s5 + $0x138] sm:$0xff]
  %v3466 = vld [vmem:[%s5 + $0x140] sm:$0xff]
  %v3467 = vld [vmem:[%s5 + $0x148] sm:$0xff]
  %v3468 = vld [vmem:[%s5 + $0x150] sm:$0xff]
  %v3469 = vld [vmem:[%s5 + $0x158] sm:$0xff]
  %v3470 = vld [vmem:[%s5 + $0x160] sm:$0xff]
  %v3471 = vld [vmem:[%s5 + $0x168] sm:$0xff]
  %v3472 = vld [vmem:[%s5 + $0x170] sm:$0xff]
  %v3473 = vld [vmem:[%s5 + $0x178] sm:$0xff]
  %v3474 = vld [vmem:[%s5 + $0x180] sm:$0xff]
  %v3475 = vld [vmem:[%s5 + $0x188] sm:$0xff]
  %v3476 = vld [vmem:[%s5 + $0x190] sm:$0xff]
  %v3477 = vld [vmem:[%s5 + $0x198] sm:$0xff]
  %v3478 = vld [vmem:[%s5 + $0x1a0] sm:$0xff]
  %v3479 = vld [vmem:[%s5 + $0x1a8] sm:$0xff]
  %v3480 = vld [vmem:[%s5 + $0x1b0] sm:$0xff]
  %v3481 = vld [vmem:[%s5 + $0x1b8] sm:$0xff]
  %v3482 = vld [vmem:[%s5 + $0x1c0] sm:$0xff]
  %v3483 = vld [vmem:[%s5 + $0x1c8] sm:$0xff]
  %v3484 = vld [vmem:[%s5 + $0x1d0] sm:$0xff]
  %v3485 = vld [vmem:[%s5 + $0x1d8] sm:$0xff]
  %v3486 = vld [vmem:[%s5 + $0x1e0] sm:$0xff]
  %v3487 = vld [vmem:[%s5 + $0x1e8] sm:$0xff]
  %v3488 = vld [vmem:[%s5 + $0x1f0] sm:$0xff]
  %v3489 = vld [vmem:[%s5 + $0x1f8] sm:$0xff]
  %v3490 = vld [vmem:[%s5 + $0x200] sm:$0xff]
  %v3491 = vld [vmem:[%s5 + $0x208] sm:$0xff]
  %v3492 = vld [vmem:[%s5 + $0x210] sm:$0xff]
  %v3493 = vld [vmem:[%s5 + $0x218] sm:$0xff]
  %v3494 = vld [vmem:[%s5 + $0x220] sm:$0xff]
  %v3495 = vld [vmem:[%s5 + $0x228] sm:$0xff]
  %v3496 = vld [vmem:[%s5 + $0x230] sm:$0xff]
  %v3497 = vld [vmem:[%s5 + $0x238] sm:$0xff]
  %v3498 = vld [vmem:[%s5 + $0x240] sm:$0xff]
  %v3499 = vld [vmem:[%s5 + $0x248] sm:$0xff]
  %v3500 = vld [vmem:[%s5 + $0x250] sm:$0xff]
  %v3501 = vld [vmem:[%s5 + $0x258] sm:$0xff]
  %v3502 = vld [vmem:[%s5 + $0x260] sm:$0xff]
  %v3503 = vld [vmem:[%s5 + $0x268] sm:$0xff]
  %v3504 = vld [vmem:[%s5 + $0x270] sm:$0xff]
  %v3505 = vld [vmem:[%s5 + $0x278] sm:$0xff]
  %v3506 = vld [vmem:[%s5 + $0x280] sm:$0xff]
  %v3507 = vld [vmem:[%s5 + $0x288] sm:$0xff]
  %v3508 = vld [vmem:[%s5 + $0x290] sm:$0xff]
  %v3509 = vld [vmem:[%s5 + $0x298] sm:$0xff]
  %v3510 = vld [vmem:[%s5 + $0x2a0] sm:$0xff]
  %v3511 = vld [vmem:[%s5 + $0x2a8] sm:$0xff]
  %v3512 = vld [vmem:[%s5 + $0x2b0] sm:$0xff]
  %v3513 = vld [vmem:[%s5 + $0x2b8] sm:$0xff]
  %v3514 = vld [vmem:[%s5 + $0x2c0] sm:$0xff]
  %v3515 = vld [vmem:[%s5 + $0x2c8] sm:$0xff]
  %v3516 = vld [vmem:[%s5 + $0x2d0] sm:$0xff]
  %v3517 = vld [vmem:[%s5 + $0x2d8] sm:$0xff]
  %v3518 = vld [vmem:[%s5 + $0x2e0] sm:$0xff]
  %v3519 = vld [vmem:[%s5 + $0x2e8] sm:$0xff]
  %v3520 = vld [vmem:[%s5 + $0x2f0] sm:$0xff]
  %v3521 = vld [vmem:[%s5 + $0x2f8] sm:$0xff]
  %v3522 = vld [vmem:[%s5 + $0x300] sm:$0xff]
  %v3523 = vld [vmem:[%s5 + $0x308] sm:$0xff]
  %v3524 = vld [vmem:[%s5 + $0x310] sm:$0xff]
  %v3525 = vld [vmem:[%s5 + $0x318] sm:$0xff]
  %v3526 = vld [vmem:[%s5 + $0x320] sm:$0xff]
  %v3527 = vld [vmem:[%s5 + $0x328] sm:$0xff]
  %v3528 = vld [vmem:[%s5 + $0x330] sm:$0xff]
  %v3529 = vld [vmem:[%s5 + $0x338] sm:$0xff]
  %v3530 = vld [vmem:[%s5 + $0x340] sm:$0xff]
  %v3531 = vld [vmem:[%s5 + $0x348] sm:$0xff]
  %v3532 = vld [vmem:[%s5 + $0x350] sm:$0xff]
  %v3533 = vld [vmem:[%s5 + $0x358] sm:$0xff]
  %v3534 = vld [vmem:[%s5 + $0x360] sm:$0xff]
  %v3535 = vld [vmem:[%s5 + $0x368] sm:$0xff]
  %v3536 = vld [vmem:[%s5 + $0x370] sm:$0xff]
  %v3537 = vld [vmem:[%s5 + $0x378] sm:$0xff]
  %v3538 = vld [vmem:[%s5 + $0x380] sm:$0xff]
  %v3539 = vld [vmem:[%s5 + $0x388] sm:$0xff]
  %v3540 = vld [vmem:[%s5 + $0x390] sm:$0xff]
  %v3541 = vld [vmem:[%s5 + $0x398] sm:$0xff]
  %v3542 = vld [vmem:[%s5 + $0x3a0] sm:$0xff]
  %v3543 = vld [vmem:[%s5 + $0x3a8] sm:$0xff]
  %v3544 = vld [vmem:[%s5 + $0x3b0] sm:$0xff]
  %v3545 = vld [vmem:[%s5 + $0x3b8] sm:$0xff]
  %v3546 = vld [vmem:[%s5 + $0x3c0] sm:$0xff]
  %v3547 = vld [vmem:[%s5 + $0x3c8] sm:$0xff]
  %v3548 = vld [vmem:[%s5 + $0x3d0] sm:$0xff]
  %v3549 = vld [vmem:[%s5 + $0x3d8] sm:$0xff]
  %v3550 = vld [vmem:[%s5 + $0x3e0] sm:$0xff]
  %v3551 = vld [vmem:[%s5 + $0x3e8] sm:$0xff]
  %v3552 = vld [vmem:[%s5 + $0x3f0] sm:$0xff]
  %v3553 = vld [vmem:[%s5 + $0x3f8] sm:$0xff]
  %v3554 = vld [vmem:[%s5 + $0x400] sm:$0xff]
  %v3555 = vld [vmem:[%s5 + $0x408] sm:$0xff]
  %v3556 = vld [vmem:[%s5 + $0x410] sm:$0xff]
  %v3557 = vld [vmem:[%s5 + $0x418] sm:$0xff]
  %v3558 = vld [vmem:[%s5 + $0x420] sm:$0xff]
  %v3559 = vld [vmem:[%s5 + $0x428] sm:$0xff]
  %v3560 = vld [vmem:[%s5 + $0x430] sm:$0xff]
  %v3561 = vld [vmem:[%s5 + $0x438] sm:$0xff]
  %v3562 = vld [vmem:[%s5 + $0x440] sm:$0xff]
  %v3563 = vld [vmem:[%s5 + $0x448] sm:$0xff]
  %v3564 = vld [vmem:[%s5 + $0x450] sm:$0xff]
  %v3565 = vld [vmem:[%s5 + $0x458] sm:$0xff]
  %v3566 = vld [vmem:[%s5 + $0x460] sm:$0xff]
  %v3567 = vld [vmem:[%s5 + $0x468] sm:$0xff]
  %v3568 = vld [vmem:[%s5 + $0x470] sm:$0xff]
  %v3569 = vld [vmem:[%s5 + $0x478] sm:$0xff]
  %v3570 = vld [vmem:[%s5 + $0x480] sm:$0xff]
  %v3571 = vld [vmem:[%s5 + $0x488] sm:$0xff]
  %v3572 = vld [vmem:[%s5 + $0x490] sm:$0xff]
  %v3573 = vld [vmem:[%s5 + $0x498] sm:$0xff]
  %v3574 = vld [vmem:[%s5 + $0x4a0] sm:$0xff]
  %v3575 = vld [vmem:[%s5 + $0x4a8] sm:$0xff]
  %v3576 = vld [vmem:[%s5 + $0x4b0] sm:$0xff]
  %v3577 = vld [vmem:[%s5 + $0x4b8] sm:$0xff]
  %v3578 = vld [vmem:[%s5 + $0x4c0] sm:$0xff]
  %v3579 = vld [vmem:[%s5 + $0x4c8] sm:$0xff]
  %v3580 = vld [vmem:[%s5 + $0x4d0] sm:$0xff]
  %v3581 = vld [vmem:[%s5 + $0x4d8] sm:$0xff]
  %v3582 = vld [vmem:[%s5 + $0x4e0] sm:$0xff]
  %v3583 = vld [vmem:[%s5 + $0x4e8] sm:$0xff]
  %v3584 = vld [vmem:[%s5 + $0x4f0] sm:$0xff]
  %v3585 = vld [vmem:[%s5 + $0x4f8] sm:$0xff]
  %v3586 = vld [vmem:[%s5 + $0x500] sm:$0xff]
  %v3587 = vld [vmem:[%s5 + $0x508] sm:$0xff]
  %v3588 = vld [vmem:[%s5 + $0x510] sm:$0xff]
  %v3589 = vld [vmem:[%s5 + $0x518] sm:$0xff]
  %v3590 = vld [vmem:[%s5 + $0x520] sm:$0xff]
  %v3591 = vld [vmem:[%s5 + $0x528] sm:$0xff]
  %v3592 = vld [vmem:[%s5 + $0x530] sm:$0xff]
  %v3593 = vld [vmem:[%s5 + $0x538] sm:$0xff]
  %v3594 = vld [vmem:[%s5 + $0x540] sm:$0xff]
  %v3595 = vld [vmem:[%s5 + $0x548] sm:$0xff]
  %v3596 = vld [vmem:[%s5 + $0x550] sm:$0xff]
  %v3597 = vld [vmem:[%s5 + $0x558] sm:$0xff]
  %v3598 = vld [vmem:[%s5 + $0x560] sm:$0xff]
  %v3599 = vld [vmem:[%s5 + $0x568] sm:$0xff]
  %v3600 = vld [vmem:[%s5 + $0x570] sm:$0xff]
  %v3601 = vld [vmem:[%s5 + $0x578] sm:$0xff]
  %v3602 = vld [vmem:[%s5 + $0x580] sm:$0xff]
  %v3603 = vld [vmem:[%s5 + $0x588] sm:$0xff]
  %v3604 = vld [vmem:[%s5 + $0x590] sm:$0xff]
  %v3605 = vld [vmem:[%s5 + $0x598] sm:$0xff]
  %v3606 = vld [vmem:[%s5 + $0x5a0] sm:$0xff]
  %v3607 = vld [vmem:[%s5 + $0x5a8] sm:$0xff]
  %v3608 = vld [vmem:[%s5 + $0x5b0] sm:$0xff]
  %v3609 = vld [vmem:[%s5 + $0x5b8] sm:$0xff]
  %v3610 = vld [vmem:[%s5 + $0x5c0] sm:$0xff]
  %v3611 = vld [vmem:[%s5 + $0x5c8] sm:$0xff]
  %v3612 = vld [vmem:[%s5 + $0x5d0] sm:$0xff]
  %v3613 = vld [vmem:[%s5 + $0x5d8] sm:$0xff]
  %v3614 = vld [vmem:[%s5 + $0x5e0] sm:$0xff]
  %v3615 = vld [vmem:[%s5 + $0x5e8] sm:$0xff]
  %v3616 = vld [vmem:[%s5 + $0x5f0] sm:$0xff]
  %v3617 = vld [vmem:[%s5 + $0x5f8] sm:$0xff]
  %v3618 = vld [vmem:[%s5 + $0x600] sm:$0xff]
  %v3619 = vld [vmem:[%s5 + $0x608] sm:$0xff]
  %v3620 = vld [vmem:[%s5 + $0x610] sm:$0xff]
  %v3621 = vld [vmem:[%s5 + $0x618] sm:$0xff]
  %v3622 = vld [vmem:[%s5 + $0x620] sm:$0xff]
  %v3623 = vld [vmem:[%s5 + $0x628] sm:$0xff]
  %v3624 = vld [vmem:[%s5 + $0x630] sm:$0xff]
  %v3625 = vld [vmem:[%s5 + $0x638] sm:$0xff]
  %v3626 = vld [vmem:[%s5 + $0x640] sm:$0xff]
  %v3627 = vld [vmem:[%s5 + $0x648] sm:$0xff]
  %v3628 = vld [vmem:[%s5 + $0x650] sm:$0xff]
  %v3629 = vld [vmem:[%s5 + $0x658] sm:$0xff]
  %v3630 = vld [vmem:[%s5 + $0x660] sm:$0xff]
  %v3631 = vld [vmem:[%s5 + $0x668] sm:$0xff]
  %v3632 = vld [vmem:[%s5 + $0x670] sm:$0xff]
  %v3633 = vld [vmem:[%s5 + $0x678] sm:$0xff]
  %v3634 = vld [vmem:[%s5 + $0x680] sm:$0xff]
  %v3635 = vld [vmem:[%s5 + $0x688] sm:$0xff]
  %v3636 = vld [vmem:[%s5 + $0x690] sm:$0xff]
  %v3637 = vld [vmem:[%s5 + $0x698] sm:$0xff]
  %v3638 = vld [vmem:[%s5 + $0x6a0] sm:$0xff]
  %v3639 = vld [vmem:[%s5 + $0x6a8] sm:$0xff]
  %v3640 = vld [vmem:[%s5 + $0x6b0] sm:$0xff]
  %v3641 = vld [vmem:[%s5 + $0x6b8] sm:$0xff]
  %v3642 = vld [vmem:[%s5 + $0x6c0] sm:$0xff]
  %v3643 = vld [vmem:[%s5 + $0x6c8] sm:$0xff]
  %v3644 = vld [vmem:[%s5 + $0x6d0] sm:$0xff]
  %v3645 = vld [vmem:[%s5 + $0x6d8] sm:$0xff]
  %v3646 = vld [vmem:[%s5 + $0x6e0] sm:$0xff]
  %v3647 = vld [vmem:[%s5 + $0x6e8] sm:$0xff]
  %v3648 = vld [vmem:[%s5 + $0x6f0] sm:$0xff]
  %v3649 = vld [vmem:[%s5 + $0x6f8] sm:$0xff]
  %v3650 = vld [vmem:[%s5 + $0x700] sm:$0xff]
  %v3651 = vld [vmem:[%s5 + $0x708] sm:$0xff]
  %v3652 = vld [vmem:[%s5 + $0x710] sm:$0xff]
  %v3653 = vld [vmem:[%s5 + $0x718] sm:$0xff]
  %v3654 = vld [vmem:[%s5 + $0x720] sm:$0xff]
  %v3655 = vld [vmem:[%s5 + $0x728] sm:$0xff]
  %v3656 = vld [vmem:[%s5 + $0x730] sm:$0xff]
  %v3657 = vld [vmem:[%s5 + $0x738] sm:$0xff]
  %v3658 = vld [vmem:[%s5 + $0x740] sm:$0xff]
  %v3659 = vld [vmem:[%s5 + $0x748] sm:$0xff]
  %v3660 = vld [vmem:[%s5 + $0x750] sm:$0xff]
  %v3661 = vld [vmem:[%s5 + $0x758] sm:$0xff]
  %v3662 = vld [vmem:[%s5 + $0x760] sm:$0xff]
  %v3663 = vld [vmem:[%s5 + $0x768] sm:$0xff]
  %v3664 = vld [vmem:[%s5 + $0x770] sm:$0xff]
  %v3665 = vld [vmem:[%s5 + $0x778] sm:$0xff]
  %v3666 = vld [vmem:[%s5 + $0x780] sm:$0xff]
  %v3667 = vld [vmem:[%s5 + $0x788] sm:$0xff]
  %v3668 = vld [vmem:[%s5 + $0x790] sm:$0xff]
  %v3669 = vld [vmem:[%s5 + $0x798] sm:$0xff]
  %v3670 = vld [vmem:[%s5 + $0x7a0] sm:$0xff]
  %v3671 = vld [vmem:[%s5 + $0x7a8] sm:$0xff]
  %v3672 = vld [vmem:[%s5 + $0x7b0] sm:$0xff]
  %v3673 = vld [vmem:[%s5 + $0x7b8] sm:$0xff]
  %v3674 = vld [vmem:[%s5 + $0x7c0] sm:$0xff]
  %v3675 = vld [vmem:[%s5 + $0x7c8] sm:$0xff]
  %v3676 = vld [vmem:[%s5 + $0x7d0] sm:$0xff]
  %v3677 = vld [vmem:[%s5 + $0x7d8] sm:$0xff]
  %v3678 = vld [vmem:[%s5 + $0x7e0] sm:$0xff]
  %v3679 = vld [vmem:[%s5 + $0x7e8] sm:$0xff]
  %v3680 = vld [vmem:[%s5 + $0x7f0] sm:$0xff]
  %v3681 = vld [vmem:[%s5 + $0x7f8] sm:$0xff]
  %v3682 = vld [vmem:[%s5 + $0x800] sm:$0xff]
  %v3683 = vld [vmem:[%s5 + $0x808] sm:$0xff]
  %v3684 = vld [vmem:[%s5 + $0x810] sm:$0xff]
  %v3685 = vld [vmem:[%s5 + $0x818] sm:$0xff]
  %v3686 = vld [vmem:[%s5 + $0x820] sm:$0xff]
  %v3687 = vld [vmem:[%s5 + $0x828] sm:$0xff]
  %v3688 = vld [vmem:[%s5 + $0x830] sm:$0xff]
  %v3689 = vld [vmem:[%s5 + $0x838] sm:$0xff]
  %v3690 = vld [vmem:[%s5 + $0x840] sm:$0xff]
  %v3691 = vld [vmem:[%s5 + $0x848] sm:$0xff]
  %v3692 = vld [vmem:[%s5 + $0x850] sm:$0xff]
  %v3693 = vld [vmem:[%s5 + $0x858] sm:$0xff]
  %v3694 = vld [vmem:[%s5 + $0x860] sm:$0xff]
  %v3695 = vld [vmem:[%s5 + $0x868] sm:$0xff]
  %v3696 = vld [vmem:[%s5 + $0x870] sm:$0xff]
  %v3697 = vld [vmem:[%s5 + $0x878] sm:$0xff]
  %v3698 = vld [vmem:[%s5 + $0x880] sm:$0xff]
  %v3699 = vld [vmem:[%s5 + $0x888] sm:$0xff]
  %v3700 = vld [vmem:[%s5 + $0x890] sm:$0xff]
  %v3701 = vld [vmem:[%s5 + $0x898] sm:$0xff]
  %v3702 = vld [vmem:[%s5 + $0x8a0] sm:$0xff]
  %v3703 = vld [vmem:[%s5 + $0x8a8] sm:$0xff]
  %v3704 = vld [vmem:[%s5 + $0x8b0] sm:$0xff]
  %v3705 = vld [vmem:[%s5 + $0x8b8] sm:$0xff]
  %v3706 = vld [vmem:[%s5 + $0x8c0] sm:$0xff]
  %v3707 = vld [vmem:[%s5 + $0x8c8] sm:$0xff]
  %v3708 = vld [vmem:[%s5 + $0x8d0] sm:$0xff]
  %v3709 = vld [vmem:[%s5 + $0x8d8] sm:$0xff]
  %v3710 = vld [vmem:[%s5 + $0x8e0] sm:$0xff]
  %v3711 = vld [vmem:[%s5 + $0x8e8] sm:$0xff]
  %v3712 = vld [vmem:[%s5 + $0x8f0] sm:$0xff]
  %v3713 = vld [vmem:[%s5 + $0x8f8] sm:$0xff]
  %v3714 = vld [vmem:[%s5 + $0x900] sm:$0xff]
  %v3715 = vld [vmem:[%s5 + $0x908] sm:$0xff]
  %v3716 = vld [vmem:[%s5 + $0x910] sm:$0xff]
  %v3717 = vld [vmem:[%s5 + $0x918] sm:$0xff]
  %v3718 = vld [vmem:[%s5 + $0x920] sm:$0xff]
  %v3719 = vld [vmem:[%s5 + $0x928] sm:$0xff]
  %v3720 = vld [vmem:[%s5 + $0x930] sm:$0xff]
  %v3721 = vld [vmem:[%s5 + $0x938] sm:$0xff]
  %v3722 = vld [vmem:[%s5 + $0x940] sm:$0xff]
  %v3723 = vld [vmem:[%s5 + $0x948] sm:$0xff]
  %v3724 = vld [vmem:[%s5 + $0x950] sm:$0xff]
  %v3725 = vld [vmem:[%s5 + $0x958] sm:$0xff]
  %v3726 = vld [vmem:[%s5 + $0x960] sm:$0xff]
  %v3727 = vld [vmem:[%s5 + $0x968] sm:$0xff]
  %v3728 = vld [vmem:[%s5 + $0x970] sm:$0xff]
  %v3729 = vld [vmem:[%s5 + $0x978] sm:$0xff]
  %v3730 = vld [vmem:[%s5 + $0x980] sm:$0xff]
  %v3731 = vld [vmem:[%s5 + $0x988] sm:$0xff]
  %v3732 = vld [vmem:[%s5 + $0x990] sm:$0xff]
  %v3733 = vld [vmem:[%s5 + $0x998] sm:$0xff]
  %v3734 = vld [vmem:[%s5 + $0x9a0] sm:$0xff]
  %v3735 = vld [vmem:[%s5 + $0x9a8] sm:$0xff]
  %v3736 = vld [vmem:[%s5 + $0x9b0] sm:$0xff]
  %v3737 = vld [vmem:[%s5 + $0x9b8] sm:$0xff]
  %v3738 = vld [vmem:[%s5 + $0x9c0] sm:$0xff]
  %v3739 = vld [vmem:[%s5 + $0x9c8] sm:$0xff]
  %v3740 = vld [vmem:[%s5 + $0x9d0] sm:$0xff]
  %v3741 = vld [vmem:[%s5 + $0x9d8] sm:$0xff]
  %v3742 = vld [vmem:[%s5 + $0x9e0] sm:$0xff]
  %v3743 = vld [vmem:[%s5 + $0x9e8] sm:$0xff]
  %v3744 = vld [vmem:[%s5 + $0x9f0] sm:$0xff]
  %v3745 = vld [vmem:[%s5 + $0x9f8] sm:$0xff]
  %v3746 = vld [vmem:[%s5 + $0xa00] sm:$0xff]
  %v3747 = vld [vmem:[%s5 + $0xa08] sm:$0xff]
  %v3748 = vld [vmem:[%s5 + $0xa10] sm:$0xff]
  %v3749 = vld [vmem:[%s5 + $0xa18] sm:$0xff]
  %v3750 = vld [vmem:[%s5 + $0xa20] sm:$0xff]
  %v3751 = vld [vmem:[%s5 + $0xa28] sm:$0xff]
  %v3752 = vld [vmem:[%s5 + $0xa30] sm:$0xff]
  %v3753 = vld [vmem:[%s5 + $0xa38] sm:$0xff]
  %v3754 = vld [vmem:[%s5 + $0xa40] sm:$0xff]
  %v3755 = vld [vmem:[%s5 + $0xa48] sm:$0xff]
  %v3756 = vld [vmem:[%s5 + $0xa50] sm:$0xff]
  %v3757 = vld [vmem:[%s5 + $0xa58] sm:$0xff]
  %v3758 = vld [vmem:[%s5 + $0xa60] sm:$0xff]
  %v3759 = vld [vmem:[%s5 + $0xa68] sm:$0xff]
  %v3760 = vld [vmem:[%s5 + $0xa70] sm:$0xff]
  %v3761 = vld [vmem:[%s5 + $0xa78] sm:$0xff]
  %v3762 = vld [vmem:[%s5 + $0xa80] sm:$0xff]
  %v3763 = vld [vmem:[%s5 + $0xa88] sm:$0xff]
  %v3764 = vld [vmem:[%s5 + $0xa90] sm:$0xff]
  %v3765 = vld [vmem:[%s5 + $0xa98] sm:$0xff]
  %v3766 = vld [vmem:[%s5 + $0xaa0] sm:$0xff]
  %v3767 = vld [vmem:[%s5 + $0xaa8] sm:$0xff]
  %v3768 = vld [vmem:[%s5 + $0xab0] sm:$0xff]
  %v3769 = vld [vmem:[%s5 + $0xab8] sm:$0xff]
  %v3770 = vld [vmem:[%s5 + $0xac0] sm:$0xff]
  %v3771 = vld [vmem:[%s5 + $0xac8] sm:$0xff]
  %v3772 = vld [vmem:[%s5 + $0xad0] sm:$0xff]
  %v3773 = vld [vmem:[%s5 + $0xad8] sm:$0xff]
  %v3774 = vld [vmem:[%s5 + $0xae0] sm:$0xff]
  %v3775 = vld [vmem:[%s5 + $0xae8] sm:$0xff]
  %v3776 = vld [vmem:[%s5 + $0xaf0] sm:$0xff]
  %v3777 = vld [vmem:[%s5 + $0xaf8] sm:$0xff]
  %v3778 = vld [vmem:[%s5 + $0xb00] sm:$0xff]
  %v3779 = vld [vmem:[%s5 + $0xb08] sm:$0xff]
  %v3780 = vld [vmem:[%s5 + $0xb10] sm:$0xff]
  %v3781 = vld [vmem:[%s5 + $0xb18] sm:$0xff]
  %v3782 = vld [vmem:[%s5 + $0xb20] sm:$0xff]
  %v3783 = vld [vmem:[%s5 + $0xb28] sm:$0xff]
  %v3784 = vld [vmem:[%s5 + $0xb30] sm:$0xff]
  %v3785 = vld [vmem:[%s5 + $0xb38] sm:$0xff]
  %v3786 = vld [vmem:[%s5 + $0xb40] sm:$0xff]
  %v3787 = vld [vmem:[%s5 + $0xb48] sm:$0xff]
  %v3788 = vld [vmem:[%s5 + $0xb50] sm:$0xff]
  %v3789 = vld [vmem:[%s5 + $0xb58] sm:$0xff]
  %v3790 = vld [vmem:[%s5 + $0xb60] sm:$0xff]
  %v3791 = vld [vmem:[%s5 + $0xb68] sm:$0xff]
  %v3792 = vld [vmem:[%s5 + $0xb70] sm:$0xff]
  %v3793 = vld [vmem:[%s5 + $0xb78] sm:$0xff]
  %v3794 = vld [vmem:[%s5 + $0xb80] sm:$0xff]
  %v3795 = vld [vmem:[%s5 + $0xb88] sm:$0xff]
  %v3796 = vld [vmem:[%s5 + $0xb90] sm:$0xff]
  %v3797 = vld [vmem:[%s5 + $0xb98] sm:$0xff]
  %v3798 = vld [vmem:[%s5 + $0xba0] sm:$0xff]
  %v3799 = vld [vmem:[%s5 + $0xba8] sm:$0xff]
  %v3800 = vld [vmem:[%s5 + $0xbb0] sm:$0xff]
  %v3801 = vld [vmem:[%s5 + $0xbb8] sm:$0xff]
  %v3802 = vld [vmem:[%s5 + $0xbc0] sm:$0xff]
  %v3803 = vld [vmem:[%s5 + $0xbc8] sm:$0xff]
  %v3804 = vld [vmem:[%s5 + $0xbd0] sm:$0xff]
  %v3805 = vld [vmem:[%s5 + $0xbd8] sm:$0xff]
  %v3806 = vld [vmem:[%s5 + $0xbe0] sm:$0xff]
  %v3807 = vld [vmem:[%s5 + $0xbe8] sm:$0xff]
  %v3808 = vld [vmem:[%s5 + $0xbf0] sm:$0xff]
  %v3809 = vld [vmem:[%s5 + $0xbf8] sm:$0xff]
  %v3810 = vld [vmem:[%s5 + $0xc00] sm:$0xff]
  %v3811 = vld [vmem:[%s5 + $0xc08] sm:$0xff]
  %v3812 = vld [vmem:[%s5 + $0xc10] sm:$0xff]
  %v3813 = vld [vmem:[%s5 + $0xc18] sm:$0xff]
  %v3814 = vld [vmem:[%s5 + $0xc20] sm:$0xff]
  %v3815 = vld [vmem:[%s5 + $0xc28] sm:$0xff]
  %v3816 = vld [vmem:[%s5 + $0xc30] sm:$0xff]
  %v3817 = vld [vmem:[%s5 + $0xc38] sm:$0xff]
  %v3818 = vld [vmem:[%s5 + $0xc40] sm:$0xff]
  %v3819 = vld [vmem:[%s5 + $0xc48] sm:$0xff]
  %v3820 = vld [vmem:[%s5 + $0xc50] sm:$0xff]
  %v3821 = vld [vmem:[%s5 + $0xc58] sm:$0xff]
  %v3822 = vld [vmem:[%s5 + $0xc60] sm:$0xff]
  %v3823 = vld [vmem:[%s5 + $0xc68] sm:$0xff]
  %v3824 = vld [vmem:[%s5 + $0xc70] sm:$0xff]
  %v3825 = vld [vmem:[%s5 + $0xc78] sm:$0xff]
  %v3826 = vld [vmem:[%s5 + $0xc80] sm:$0xff]
  %v3827 = vld [vmem:[%s5 + $0xc88] sm:$0xff]
  %v3828 = vld [vmem:[%s5 + $0xc90] sm:$0xff]
  %v3829 = vld [vmem:[%s5 + $0xc98] sm:$0xff]
  %v3830 = vld [vmem:[%s5 + $0xca0] sm:$0xff]
  %v3831 = vld [vmem:[%s5 + $0xca8] sm:$0xff]
  %v3832 = vld [vmem:[%s5 + $0xcb0] sm:$0xff]
  %v3833 = vld [vmem:[%s5 + $0xcb8] sm:$0xff]
  %v3834 = vld [vmem:[%s5 + $0xcc0] sm:$0xff]
  %v3835 = vld [vmem:[%s5 + $0xcc8] sm:$0xff]
  %v3836 = vld [vmem:[%s5 + $0xcd0] sm:$0xff]
  %v3837 = vld [vmem:[%s5 + $0xcd8] sm:$0xff]
  %v3838 = vld [vmem:[%s5 + $0xce0] sm:$0xff]
  %v3839 = vld [vmem:[%s5 + $0xce8] sm:$0xff]
  %v3840 = vld [vmem:[%s5 + $0xcf0] sm:$0xff]
  %v3841 = vld [vmem:[%s5 + $0xcf8] sm:$0xff]
  %v3842 = vld [vmem:[%s5 + $0xd00] sm:$0xff]
  %v3843 = vld [vmem:[%s5 + $0xd08] sm:$0xff]
  %v3844 = vld [vmem:[%s5 + $0xd10] sm:$0xff]
  %v3845 = vld [vmem:[%s5 + $0xd18] sm:$0xff]
  %v3846 = vld [vmem:[%s5 + $0xd20] sm:$0xff]
  %v3847 = vld [vmem:[%s5 + $0xd28] sm:$0xff]
  %v3848 = vld [vmem:[%s5 + $0xd30] sm:$0xff]
  %v3849 = vld [vmem:[%s5 + $0xd38] sm:$0xff]
  %v3850 = vld [vmem:[%s5 + $0xd40] sm:$0xff]
  %v3851 = vld [vmem:[%s5 + $0xd48] sm:$0xff]
  %v3852 = vld [vmem:[%s5 + $0xd50] sm:$0xff]
  %v3853 = vld [vmem:[%s5 + $0xd58] sm:$0xff]
  %v3854 = vld [vmem:[%s5 + $0xd60] sm:$0xff]
  %v3855 = vld [vmem:[%s5 + $0xd68] sm:$0xff]
  %v3856 = vld [vmem:[%s5 + $0xd70] sm:$0xff]
  %v3857 = vld [vmem:[%s5 + $0xd78] sm:$0xff]
  %v3858 = vld [vmem:[%s5 + $0xd80] sm:$0xff]
  %v3859 = vld [vmem:[%s5 + $0xd88] sm:$0xff]
  %v3860 = vld [vmem:[%s5 + $0xd90] sm:$0xff]
  %v3861 = vld [vmem:[%s5 + $0xd98] sm:$0xff]
  %v3862 = vld [vmem:[%s5 + $0xda0] sm:$0xff]
  %v3863 = vld [vmem:[%s5 + $0xda8] sm:$0xff]
  %v3864 = vld [vmem:[%s5 + $0xdb0] sm:$0xff]
  %v3865 = vld [vmem:[%s5 + $0xdb8] sm:$0xff]
  %v3866 = vld [vmem:[%s5 + $0xdc0] sm:$0xff]
  %v3867 = vld [vmem:[%s5 + $0xdc8] sm:$0xff]
  %v3868 = vld [vmem:[%s5 + $0xdd0] sm:$0xff]
  %v3869 = vld [vmem:[%s5 + $0xdd8] sm:$0xff]
  %v3870 = vld [vmem:[%s5 + $0xde0] sm:$0xff]
  %v3871 = vld [vmem:[%s5 + $0xde8] sm:$0xff]
  %v3872 = vld [vmem:[%s5 + $0xdf0] sm:$0xff]
  %v3873 = vld [vmem:[%s5 + $0xdf8] sm:$0xff]
  %v3874 = vld [vmem:[%s5 + $0xe00] sm:$0xff]
  %v3875 = vld [vmem:[%s5 + $0xe08] sm:$0xff]
  %v3876 = vld [vmem:[%s5 + $0xe10] sm:$0xff]
  %v3877 = vld [vmem:[%s5 + $0xe18] sm:$0xff]
  %v3878 = vld [vmem:[%s5 + $0xe20] sm:$0xff]
  %v3879 = vld [vmem:[%s5 + $0xe28] sm:$0xff]
  %v3880 = vld [vmem:[%s5 + $0xe30] sm:$0xff]
  %v3881 = vld [vmem:[%s5 + $0xe38] sm:$0xff]
  %v3882 = vld [vmem:[%s5 + $0xe40] sm:$0xff]
  %v3883 = vld [vmem:[%s5 + $0xe48] sm:$0xff]
  %v3884 = vld [vmem:[%s5 + $0xe50] sm:$0xff]
  %v3885 = vld [vmem:[%s5 + $0xe58] sm:$0xff]
  %v3886 = vld [vmem:[%s5 + $0xe60] sm:$0xff]
  %v3887 = vld [vmem:[%s5 + $0xe68] sm:$0xff]
  %v3888 = vld [vmem:[%s5 + $0xe70] sm:$0xff]
  %v3889 = vld [vmem:[%s5 + $0xe78] sm:$0xff]
  %v3890 = vld [vmem:[%s5 + $0xe80] sm:$0xff]
  %v3891 = vld [vmem:[%s5 + $0xe88] sm:$0xff]
  %v3892 = vld [vmem:[%s5 + $0xe90] sm:$0xff]
  %v3893 = vld [vmem:[%s5 + $0xe98] sm:$0xff]
  %v3894 = vld [vmem:[%s5 + $0xea0] sm:$0xff]
  %v3895 = vld [vmem:[%s5 + $0xea8] sm:$0xff]
  %v3896 = vld [vmem:[%s5 + $0xeb0] sm:$0xff]
  %v3897 = vld [vmem:[%s5 + $0xeb8] sm:$0xff]
  %v3898 = vld [vmem:[%s5 + $0xec0] sm:$0xff]
  %v3899 = vld [vmem:[%s5 + $0xec8] sm:$0xff]
  %v3900 = vld [vmem:[%s5 + $0xed0] sm:$0xff]
  %v3901 = vld [vmem:[%s5 + $0xed8] sm:$0xff]
  %v3902 = vld [vmem:[%s5 + $0xee0] sm:$0xff]
  %v3903 = vld [vmem:[%s5 + $0xee8] sm:$0xff]
  %v3904 = vld [vmem:[%s5 + $0xef0] sm:$0xff]
  %v3905 = vld [vmem:[%s5 + $0xef8] sm:$0xff]
  %v3906 = vld [vmem:[%s5 + $0xf00] sm:$0xff]
  %v3907 = vld [vmem:[%s5 + $0xf08] sm:$0xff]
  %v3908 = vld [vmem:[%s5 + $0xf10] sm:$0xff]
  %v3909 = vld [vmem:[%s5 + $0xf18] sm:$0xff]
  %v3910 = vld [vmem:[%s5 + $0xf20] sm:$0xff]
  %v3911 = vld [vmem:[%s5 + $0xf28] sm:$0xff]
  %v3912 = vld [vmem:[%s5 + $0xf30] sm:$0xff]
  %v3913 = vld [vmem:[%s5 + $0xf38] sm:$0xff]
  %v3914 = vld [vmem:[%s5 + $0xf40] sm:$0xff]
  %v3915 = vld [vmem:[%s5 + $0xf48] sm:$0xff]
  %v3916 = vld [vmem:[%s5 + $0xf50] sm:$0xff]
  %v3917 = vld [vmem:[%s5 + $0xf58] sm:$0xff]
  %v3918 = vld [vmem:[%s5 + $0xf60] sm:$0xff]
  %v3919 = vld [vmem:[%s5 + $0xf68] sm:$0xff]
  %v3920 = vld [vmem:[%s5 + $0xf70] sm:$0xff]
  %v3921 = vld [vmem:[%s5 + $0xf78] sm:$0xff]
  %v3922 = vld [vmem:[%s5 + $0xf80] sm:$0xff]
  %v3923 = vld [vmem:[%s5 + $0xf88] sm:$0xff]
  %v3924 = vld [vmem:[%s5 + $0xf90] sm:$0xff]
  %v3925 = vld [vmem:[%s5 + $0xf98] sm:$0xff]
  %v3926 = vld [vmem:[%s5 + $0xfa0] sm:$0xff]
  %v3927 = vld [vmem:[%s5 + $0xfa8] sm:$0xff]
  %v3928 = vld [vmem:[%s5 + $0xfb0] sm:$0xff]
  %v3929 = vld [vmem:[%s5 + $0xfb8] sm:$0xff]
  %v3930 = vld [vmem:[%s5 + $0xfc0] sm:$0xff]
  %v3931 = vld [vmem:[%s5 + $0xfc8] sm:$0xff]
  %v3932 = vld [vmem:[%s5 + $0xfd0] sm:$0xff]
  %v3933 = vld [vmem:[%s5 + $0xfd8] sm:$0xff]
  %v3934 = vld [vmem:[%s5 + $0xfe0] sm:$0xff]
  %v3935 = vld [vmem:[%s5 + $0xfe8] sm:$0xff]
  %v3936 = vld [vmem:[%s5 + $0xff0] sm:$0xff]
  %v3937 = vld [vmem:[%s5 + $0xff8] sm:$0xff]
  %v3938 = vld [vmem:[%s5 + $0x1000] sm:$0xff]
  %v3939 = vld [vmem:[%s5 + $0x1008] sm:$0xff]
  %v3940 = vld [vmem:[%s5 + $0x1010] sm:$0xff]
  %v3941 = vld [vmem:[%s5 + $0x1018] sm:$0xff]
  %v3942 = vld [vmem:[%s5 + $0x1020] sm:$0xff]
  %v3943 = vld [vmem:[%s5 + $0x1028] sm:$0xff]
  %v3944 = vld [vmem:[%s5 + $0x1030] sm:$0xff]
  %v3945 = vld [vmem:[%s5 + $0x1038] sm:$0xff]
  %v3946 = vld [vmem:[%s5 + $0x1040] sm:$0xff]
  %v3947 = vld [vmem:[%s5 + $0x1048] sm:$0xff]
  %v3948 = vld [vmem:[%s5 + $0x1050] sm:$0xff]
  %v3949 = vld [vmem:[%s5 + $0x1058] sm:$0xff]
  %v3950 = vld [vmem:[%s5 + $0x1060] sm:$0xff]
  %v3951 = vld [vmem:[%s5 + $0x1068] sm:$0xff]
  %v3952 = vld [vmem:[%s5 + $0x1070] sm:$0xff]
  %v3953 = vld [vmem:[%s5 + $0x1078] sm:$0xff]
  %v3954 = vld [vmem:[%s5 + $0x1080] sm:$0xff]
  %v3955 = vld [vmem:[%s5 + $0x1088] sm:$0xff]
  %v3956 = vld [vmem:[%s5 + $0x1090] sm:$0xff]
  %v3957 = vld [vmem:[%s5 + $0x1098] sm:$0xff]
  %v3958 = vld [vmem:[%s5 + $0x10a0] sm:$0xff]
  %v3959 = vld [vmem:[%s5 + $0x10a8] sm:$0xff]
  %v3960 = vld [vmem:[%s5 + $0x10b0] sm:$0xff]
  %v3961 = vld [vmem:[%s5 + $0x10b8] sm:$0xff]
  %v3962 = vld [vmem:[%s5 + $0x10c0] sm:$0xff]
  %v3963 = vld [vmem:[%s5 + $0x10c8] sm:$0xff]
  %v3964 = vld [vmem:[%s5 + $0x10d0] sm:$0xff]
  %v3965 = vld [vmem:[%s5 + $0x10d8] sm:$0xff]
  %v3966 = vld [vmem:[%s5 + $0x10e0] sm:$0xff]
  %v3967 = vld [vmem:[%s5 + $0x10e8] sm:$0xff]
  %v3968 = vld [vmem:[%s5 + $0x10f0] sm:$0xff]
  %v3969 = vld [vmem:[%s5 + $0x10f8] sm:$0xff]
  %v3970 = vld [vmem:[%s5 + $0x1100] sm:$0xff]
  %v3971 = vld [vmem:[%s5 + $0x1108] sm:$0xff]
  %v3972 = vld [vmem:[%s5 + $0x1110] sm:$0xff]
  %v3973 = vld [vmem:[%s5 + $0x1118] sm:$0xff]
  %v3974 = vld [vmem:[%s5 + $0x1120] sm:$0xff]
  %v3975 = vld [vmem:[%s5 + $0x1128] sm:$0xff]
  %v3976 = vld [vmem:[%s5 + $0x1130] sm:$0xff]
  %v3977 = vld [vmem:[%s5 + $0x1138] sm:$0xff]
  %v3978 = vld [vmem:[%s5 + $0x1140] sm:$0xff]
  %v3979 = vld [vmem:[%s5 + $0x1148] sm:$0xff]
  %v3980 = vld [vmem:[%s5 + $0x1150] sm:$0xff]
  %v3981 = vld [vmem:[%s5 + $0x1158] sm:$0xff]
  %v3982 = vld [vmem:[%s5 + $0x1160] sm:$0xff]
  %v3983 = vld [vmem:[%s5 + $0x1168] sm:$0xff]
  %v3984 = vld [vmem:[%s5 + $0x1170] sm:$0xff]
  %v3985 = vld [vmem:[%s5 + $0x1178] sm:$0xff]
  %v3986 = vld [vmem:[%s5 + $0x1180] sm:$0xff]
  %v3987 = vld [vmem:[%s5 + $0x1188] sm:$0xff]
  %v3988 = vld [vmem:[%s5 + $0x1190] sm:$0xff]
  %v3989 = vld [vmem:[%s5 + $0x1198] sm:$0xff]
  %v3990 = vld [vmem:[%s5 + $0x11a0] sm:$0xff]
  %v3991 = vld [vmem:[%s5 + $0x11a8] sm:$0xff]
  %v3992 = vld [vmem:[%s5 + $0x11b0] sm:$0xff]
  %v3993 = vld [vmem:[%s5 + $0x11b8] sm:$0xff]
  %v3994 = vld [vmem:[%s5 + $0x11c0] sm:$0xff]
  %v3995 = vld [vmem:[%s5 + $0x11c8] sm:$0xff]
  %v3996 = vld [vmem:[%s5 + $0x11d0] sm:$0xff]
  %v3997 = vld [vmem:[%s5 + $0x11d8] sm:$0xff]
  %v3998 = vld [vmem:[%s5 + $0x11e0] sm:$0xff]
  %v3999 = vld [vmem:[%s5 + $0x11e8] sm:$0xff]
  %v4000 = vld [vmem:[%s5 + $0x11f0] sm:$0xff]
  %v4001 = vld [vmem:[%s5 + $0x11f8] sm:$0xff]
  %v4002 = vld [vmem:[%s6] sm:$0x3f]
  %v4004 = vlaneseq
  %v4005 = vshrl.u32 %v4004, 7
  %v4006 = vsub.s32 0, %v4005
  %v4007 = vrot.slane %v4002, %v4006
  %v4008 = vlaneseq
  %v4009 = vshrl.u32 %v4008, 7
  %v4010 = vsub.s32 1, %v4009
  %v4011 = vrot.slane %v4002, %v4010
  %v4012 = vlaneseq
  %v4013 = vshrl.u32 %v4012, 7
  %v4014 = vsub.s32 2, %v4013
  %v4015 = vrot.slane %v4002, %v4014
  %v4016 = vlaneseq
  %v4017 = vshrl.u32 %v4016, 7
  %v4018 = vsub.s32 3, %v4017
  %v4019 = vrot.slane %v4002, %v4018
  %v4020 = vlaneseq
  %v4021 = vshrl.u32 %v4020, 7
  %v4022 = vsub.s32 4, %v4021
  %v4023 = vrot.slane %v4002, %v4022
  %v4024 = vlaneseq
  %v4025 = vshrl.u32 %v4024, 7
  %v4026 = vsub.s32 5, %v4025
  %v4027 = vrot.slane %v4002, %v4026
  %4034 = vmatprep.subr.mxu0 %v3517
  %4035 = vmatpush1.msra.mxu0 %v3516
  %4036 = vmatprep.subr.mxu0 %v3511
  %4037 = vmatpush1.msra.mxu0 %v3510
  %4038 = vmatprep.subr.mxu0 %v3505
  %4039 = vmatpush1.msra.mxu0 %v3504
  %4040 = vmatprep.subr.mxu0 %v3499
  %4041 = vmatpush1.msra.mxu0 %v3498
  %4042 = vmatprep.subr.mxu0 %v3493
  %4043 = vmatpush1.msra.mxu0 %v3492
  %4044 = vmatprep.subr.mxu0 %v3487
  %4045 = vmatpush1.msra.mxu0 %v3486
  %4046 = vmatprep.subr.mxu0 %v3481
  %4047 = vmatpush1.msra.mxu0 %v3480
  %4048 = vmatprep.subr.mxu0 %v3475
  %4049 = vmatpush1.msra.mxu0 %v3474
  %4050 = vmatprep.subr.mxu0 %v3469
  %4051 = vmatpush1.msra.mxu0 %v3468
  %4052 = vmatprep.subr.mxu0 %v3463
  %4053 = vmatpush1.msra.mxu0 %v3462
  %4054 = vmatprep.subr.mxu0 %v3457
  %4055 = vmatpush1.msra.mxu0 %v3456
  %4056 = vmatprep.subr.mxu0 %v3451
  %4057 = vmatpush1.msra.mxu0 %v3450
  %4058 = vmatprep.subr.mxu0 %v3445
  %4059 = vmatpush1.msra.mxu0 %v3444
  %4060 = vmatprep.subr.mxu0 %v3439
  %4061 = vmatpush1.msra.mxu0 %v3438
  %4062 = vmatprep.subr.mxu0 %v3433
  %4063 = vmatpush1.msra.mxu0 %v3432
  %4064 = vmatprep.subr.mxu0 %v3427
  %4065 = vmatpush1.msra.mxu0 %v3426
  %4066 = vmatprep.subr.mxu0 %v3613
  %4067 = vmatpush2.msra.mxu0 %v3612
  %4068 = vmatprep.subr.mxu0 %v3607
  %4069 = vmatpush2.msra.mxu0 %v3606
  %4070 = vmatprep.subr.mxu0 %v3601
  %4071 = vmatpush2.msra.mxu0 %v3600
  %4072 = vmatprep.subr.mxu0 %v3595
  %4073 = vmatpush2.msra.mxu0 %v3594
  %4074 = vmatprep.subr.mxu0 %v3589
  %4075 = vmatpush2.msra.mxu0 %v3588
  %4076 = vmatprep.subr.mxu0 %v3583
  %4077 = vmatpush2.msra.mxu0 %v3582
  %4078 = vmatprep.subr.mxu0 %v3577
  %4079 = vmatpush2.msra.mxu0 %v3576
  %4080 = vmatprep.subr.mxu0 %v3571
  %4081 = vmatpush2.msra.mxu0 %v3570
  %4082 = vmatprep.subr.mxu0 %v3565
  %4083 = vmatpush2.msra.mxu0 %v3564
  %4084 = vmatprep.subr.mxu0 %v3559
  %4085 = vmatpush2.msra.mxu0 %v3558
  %4086 = vmatprep.subr.mxu0 %v3553
  %4087 = vmatpush2.msra.mxu0 %v3552
  %4088 = vmatprep.subr.mxu0 %v3547
  %4089 = vmatpush2.msra.mxu0 %v3546
  %4090 = vmatprep.subr.mxu0 %v3541
  %4091 = vmatpush2.msra.mxu0 %v3540
  %4092 = vmatprep.subr.mxu0 %v3535
  %4093 = vmatpush2.msra.mxu0 %v3534
  %4094 = vmatprep.subr.mxu0 %v3529
  %4095 = vmatpush2.msra.mxu0 %v3528
  %4096 = vmatprep.subr.mxu0 %v3523
  %4097 = vmatpush2.msra.mxu0 %v3522
  %4098 = vmatprep.mubr.f32.mxu0 %v3421
  %4099 = vmatmul.mubr.f32.gmra.mxu0 %v3420
  %v4100 = vpop.f32.mrf.mxu0
  %v4101 = vadd.f32 %v4007, %v4100
  %v4102 = vpop.f32.mrf.mxu0
  %v4103 = vadd.f32 %v4011, %v4102
  %4104 = vdwg.mxu0
  %4105 = vmatprep.subr.mxu0 %v3709
  %4106 = vmatpush1.msra.mxu0 %v3708
  %4107 = vmatprep.subr.mxu0 %v3703
  %4108 = vmatpush1.msra.mxu0 %v3702
  %4109 = vmatprep.subr.mxu0 %v3697
  %4110 = vmatpush1.msra.mxu0 %v3696
  %4111 = vmatprep.subr.mxu0 %v3691
  %4112 = vmatpush1.msra.mxu0 %v3690
  %4113 = vmatprep.subr.mxu0 %v3685
  %4114 = vmatpush1.msra.mxu0 %v3684
  %4115 = vmatprep.subr.mxu0 %v3679
  %4116 = vmatpush1.msra.mxu0 %v3678
  %4117 = vmatprep.subr.mxu0 %v3673
  %4118 = vmatpush1.msra.mxu0 %v3672
  %4119 = vmatprep.subr.mxu0 %v3667
  %4120 = vmatpush1.msra.mxu0 %v3666
  %4121 = vmatprep.subr.mxu0 %v3661
  %4122 = vmatpush1.msra.mxu0 %v3660
  %4123 = vmatprep.subr.mxu0 %v3655
  %4124 = vmatpush1.msra.mxu0 %v3654
  %4125 = vmatprep.subr.mxu0 %v3649
  %4126 = vmatpush1.msra.mxu0 %v3648
  %4127 = vmatprep.subr.mxu0 %v3643
  %4128 = vmatpush1.msra.mxu0 %v3642
  %4129 = vmatprep.subr.mxu0 %v3637
  %4130 = vmatpush1.msra.mxu0 %v3636
  %4131 = vmatprep.subr.mxu0 %v3631
  %4132 = vmatpush1.msra.mxu0 %v3630
  %4133 = vmatprep.subr.mxu0 %v3625
  %4134 = vmatpush1.msra.mxu0 %v3624
  %4135 = vmatprep.subr.mxu0 %v3619
  %4136 = vmatpush1.msra.mxu0 %v3618
  %4137 = vmatprep.subr.mxu0 %v3805
  %4138 = vmatpush2.msra.mxu0 %v3804
  %4139 = vmatprep.subr.mxu0 %v3799
  %4140 = vmatpush2.msra.mxu0 %v3798
  %4141 = vmatprep.subr.mxu0 %v3793
  %4142 = vmatpush2.msra.mxu0 %v3792
  %4143 = vmatprep.subr.mxu0 %v3787
  %4144 = vmatpush2.msra.mxu0 %v3786
  %4145 = vmatprep.subr.mxu0 %v3781
  %4146 = vmatpush2.msra.mxu0 %v3780
  %4147 = vmatprep.subr.mxu0 %v3775
  %4148 = vmatpush2.msra.mxu0 %v3774
  %4149 = vmatprep.subr.mxu0 %v3769
  %4150 = vmatpush2.msra.mxu0 %v3768
  %4151 = vmatprep.subr.mxu0 %v3763
  %4152 = vmatpush2.msra.mxu0 %v3762
  %4153 = vmatprep.subr.mxu0 %v3757
  %4154 = vmatpush2.msra.mxu0 %v3756
  %4155 = vmatprep.subr.mxu0 %v3751
  %4156 = vmatpush2.msra.mxu0 %v3750
  %4157 = vmatprep.subr.mxu0 %v3745
  %4158 = vmatpush2.msra.mxu0 %v3744
  %4159 = vmatprep.subr.mxu0 %v3739
  %4160 = vmatpush2.msra.mxu0 %v3738
  %4161 = vmatprep.subr.mxu0 %v3733
  %4162 = vmatpush2.msra.mxu0 %v3732
  %4163 = vmatprep.subr.mxu0 %v3727
  %4164 = vmatpush2.msra.mxu0 %v3726
  %4165 = vmatprep.subr.mxu0 %v3721
  %4166 = vmatpush2.msra.mxu0 %v3720
  %4167 = vmatprep.subr.mxu0 %v3715
  %4168 = vmatpush2.msra.mxu0 %v3714
  %4169 = vmatprep.mubr.f32.mxu0 %v3423
  %4170 = vmatmul.mubr.f32.gmra.mxu0 %v3422
  %v4171 = vpop.f32.mrf.mxu0
  %v4172 = vadd.f32 %v4101, %v4171
  %v4173 = vpop.f32.mrf.mxu0
  %v4174 = vadd.f32 %v4103, %v4173
  %4175 = vdwg.mxu0
  %4176 = vmatprep.subr.mxu0 %v3901
  %4177 = vmatpush1.msra.mxu0 %v3900
  %4178 = vmatprep.subr.mxu0 %v3895
  %4179 = vmatpush1.msra.mxu0 %v3894
  %4180 = vmatprep.subr.mxu0 %v3889
  %4181 = vmatpush1.msra.mxu0 %v3888
  %4182 = vmatprep.subr.mxu0 %v3883
  %4183 = vmatpush1.msra.mxu0 %v3882
  %4184 = vmatprep.subr.mxu0 %v3877
  %4185 = vmatpush1.msra.mxu0 %v3876
  %4186 = vmatprep.subr.mxu0 %v3871
  %4187 = vmatpush1.msra.mxu0 %v3870
  %4188 = vmatprep.subr.mxu0 %v3865
  %4189 = vmatpush1.msra.mxu0 %v3864
  %4190 = vmatprep.subr.mxu0 %v3859
  %4191 = vmatpush1.msra.mxu0 %v3858
  %4192 = vmatprep.subr.mxu0 %v3853
  %4193 = vmatpush1.msra.mxu0 %v3852
  %4194 = vmatprep.subr.mxu0 %v3847
  %4195 = vmatpush1.msra.mxu0 %v3846
  %4196 = vmatprep.subr.mxu0 %v3841
  %4197 = vmatpush1.msra.mxu0 %v3840
  %4198 = vmatprep.subr.mxu0 %v3835
  %4199 = vmatpush1.msra.mxu0 %v3834
  %4200 = vmatprep.subr.mxu0 %v3829
  %4201 = vmatpush1.msra.mxu0 %v3828
  %4202 = vmatprep.subr.mxu0 %v3823
  %4203 = vmatpush1.msra.mxu0 %v3822
  %4204 = vmatprep.subr.mxu0 %v3817
  %4205 = vmatpush1.msra.mxu0 %v3816
  %4206 = vmatprep.subr.mxu0 %v3811
  %4207 = vmatpush1.msra.mxu0 %v3810
  %4208 = vmatprep.subr.mxu0 %v3997
  %4209 = vmatpush2.msra.mxu0 %v3996
  %4210 = vmatprep.subr.mxu0 %v3991
  %4211 = vmatpush2.msra.mxu0 %v3990
  %4212 = vmatprep.subr.mxu0 %v3985
  %4213 = vmatpush2.msra.mxu0 %v3984
  %4214 = vmatprep.subr.mxu0 %v3979
  %4215 = vmatpush2.msra.mxu0 %v3978
  %4216 = vmatprep.subr.mxu0 %v3973
  %4217 = vmatpush2.msra.mxu0 %v3972
  %4218 = vmatprep.subr.mxu0 %v3967
  %4219 = vmatpush2.msra.mxu0 %v3966
  %4220 = vmatprep.subr.mxu0 %v3961
  %4221 = vmatpush2.msra.mxu0 %v3960
  %4222 = vmatprep.subr.mxu0 %v3955
  %4223 = vmatpush2.msra.mxu0 %v3954
  %4224 = vmatprep.subr.mxu0 %v3949
  %4225 = vmatpush2.msra.mxu0 %v3948
  %4226 = vmatprep.subr.mxu0 %v3943
  %4227 = vmatpush2.msra.mxu0 %v3942
  %4228 = vmatprep.subr.mxu0 %v3937
  %4229 = vmatpush2.msra.mxu0 %v3936
  %4230 = vmatprep.subr.mxu0 %v3931
  %4231 = vmatpush2.msra.mxu0 %v3930
  %4232 = vmatprep.subr.mxu0 %v3925
  %4233 = vmatpush2.msra.mxu0 %v3924
  %4234 = vmatprep.subr.mxu0 %v3919
  %4235 = vmatpush2.msra.mxu0 %v3918
  %4236 = vmatprep.subr.mxu0 %v3913
  %4237 = vmatpush2.msra.mxu0 %v3912
  %4238 = vmatprep.subr.mxu0 %v3907
  %4239 = vmatpush2.msra.mxu0 %v3906
  %4240 = vmatprep.mubr.f32.mxu0 %v3425
  %4241 = vmatmul.mubr.f32.gmra.mxu0 %v3424
  %v4242 = vpop.f32.mrf.mxu0
  %v4243 = vadd.f32 %v4172, %v4242
  %v4244 = vpop.f32.mrf.mxu0
  %v4245 = vadd.f32 %v4174, %v4244
  %4246 = vdwg.mxu0
  %4247 = vmatprep.subr.mxu0 %v3519
  %4248 = vmatpush1.msra.mxu0 %v3518
  %4249 = vmatprep.subr.mxu0 %v3513
  %4250 = vmatpush1.msra.mxu0 %v3512
  %4251 = vmatprep.subr.mxu0 %v3507
  %4252 = vmatpush1.msra.mxu0 %v3506
  %4253 = vmatprep.subr.mxu0 %v3501
  %4254 = vmatpush1.msra.mxu0 %v3500
  %4255 = vmatprep.subr.mxu0 %v3495
  %4256 = vmatpush1.msra.mxu0 %v3494
  %4257 = vmatprep.subr.mxu0 %v3489
  %4258 = vmatpush1.msra.mxu0 %v3488
  %4259 = vmatprep.subr.mxu0 %v3483
  %4260 = vmatpush1.msra.mxu0 %v3482
  %4261 = vmatprep.subr.mxu0 %v3477
  %4262 = vmatpush1.msra.mxu0 %v3476
  %4263 = vmatprep.subr.mxu0 %v3471
  %4264 = vmatpush1.msra.mxu0 %v3470
  %4265 = vmatprep.subr.mxu0 %v3465
  %4266 = vmatpush1.msra.mxu0 %v3464
  %4267 = vmatprep.subr.mxu0 %v3459
  %4268 = vmatpush1.msra.mxu0 %v3458
  %4269 = vmatprep.subr.mxu0 %v3453
  %4270 = vmatpush1.msra.mxu0 %v3452
  %4271 = vmatprep.subr.mxu0 %v3447
  %4272 = vmatpush1.msra.mxu0 %v3446
  %4273 = vmatprep.subr.mxu0 %v3441
  %4274 = vmatpush1.msra.mxu0 %v3440
  %4275 = vmatprep.subr.mxu0 %v3435
  %4276 = vmatpush1.msra.mxu0 %v3434
  %4277 = vmatprep.subr.mxu0 %v3429
  %4278 = vmatpush1.msra.mxu0 %v3428
  %4279 = vmatprep.subr.mxu0 %v3615
  %4280 = vmatpush2.msra.mxu0 %v3614
  %4281 = vmatprep.subr.mxu0 %v3609
  %4282 = vmatpush2.msra.mxu0 %v3608
  %4283 = vmatprep.subr.mxu0 %v3603
  %4284 = vmatpush2.msra.mxu0 %v3602
  %4285 = vmatprep.subr.mxu0 %v3597
  %4286 = vmatpush2.msra.mxu0 %v3596
  %4287 = vmatprep.subr.mxu0 %v3591
  %4288 = vmatpush2.msra.mxu0 %v3590
  %4289 = vmatprep.subr.mxu0 %v3585
  %4290 = vmatpush2.msra.mxu0 %v3584
  %4291 = vmatprep.subr.mxu0 %v3579
  %4292 = vmatpush2.msra.mxu0 %v3578
  %4293 = vmatprep.subr.mxu0 %v3573
  %4294 = vmatpush2.msra.mxu0 %v3572
  %4295 = vmatprep.subr.mxu0 %v3567
  %4296 = vmatpush2.msra.mxu0 %v3566
  %4297 = vmatprep.subr.mxu0 %v3561
  %4298 = vmatpush2.msra.mxu0 %v3560
  %4299 = vmatprep.subr.mxu0 %v3555
  %4300 = vmatpush2.msra.mxu0 %v3554
  %4301 = vmatprep.subr.mxu0 %v3549
  %4302 = vmatpush2.msra.mxu0 %v3548
  %4303 = vmatprep.subr.mxu0 %v3543
  %4304 = vmatpush2.msra.mxu0 %v3542
  %4305 = vmatprep.subr.mxu0 %v3537
  %4306 = vmatpush2.msra.mxu0 %v3536
  %4307 = vmatprep.subr.mxu0 %v3531
  %4308 = vmatpush2.msra.mxu0 %v3530
  %4309 = vmatprep.subr.mxu0 %v3525
  %4310 = vmatpush2.msra.mxu0 %v3524
  %4311 = vmatprep.mubr.f32.mxu0 %v3421
  %4312 = vmatmul.mubr.f32.gmra.mxu0 %v3420
  %v4313 = vpop.f32.mrf.mxu0
  %v4314 = vadd.f32 %v4015, %v4313
  %v4315 = vpop.f32.mrf.mxu0
  %v4316 = vadd.f32 %v4019, %v4315
  %4317 = vdwg.mxu0
  %4318 = vmatprep.subr.mxu0 %v3711
  %4319 = vmatpush1.msra.mxu0 %v3710
  %4320 = vmatprep.subr.mxu0 %v3705
  %4321 = vmatpush1.msra.mxu0 %v3704
  %4322 = vmatprep.subr.mxu0 %v3699
  %4323 = vmatpush1.msra.mxu0 %v3698
  %4324 = vmatprep.subr.mxu0 %v3693
  %4325 = vmatpush1.msra.mxu0 %v3692
  %4326 = vmatprep.subr.mxu0 %v3687
  %4327 = vmatpush1.msra.mxu0 %v3686
  %4328 = vmatprep.subr.mxu0 %v3681
  %4329 = vmatpush1.msra.mxu0 %v3680
  %4330 = vmatprep.subr.mxu0 %v3675
  %4331 = vmatpush1.msra.mxu0 %v3674
  %4332 = vmatprep.subr.mxu0 %v3669
  %4333 = vmatpush1.msra.mxu0 %v3668
  %4334 = vmatprep.subr.mxu0 %v3663
  %4335 = vmatpush1.msra.mxu0 %v3662
  %4336 = vmatprep.subr.mxu0 %v3657
  %4337 = vmatpush1.msra.mxu0 %v3656
  %4338 = vmatprep.subr.mxu0 %v3651
  %4339 = vmatpush1.msra.mxu0 %v3650
  %4340 = vmatprep.subr.mxu0 %v3645
  %4341 = vmatpush1.msra.mxu0 %v3644
  %4342 = vmatprep.subr.mxu0 %v3639
  %4343 = vmatpush1.msra.mxu0 %v3638
  %4344 = vmatprep.subr.mxu0 %v3633
  %4345 = vmatpush1.msra.mxu0 %v3632
  %4346 = vmatprep.subr.mxu0 %v3627
  %4347 = vmatpush1.msra.mxu0 %v3626
  %4348 = vmatprep.subr.mxu0 %v3621
  %4349 = vmatpush1.msra.mxu0 %v3620
  %4350 = vmatprep.subr.mxu0 %v3807
  %4351 = vmatpush2.msra.mxu0 %v3806
  %4352 = vmatprep.subr.mxu0 %v3801
  %4353 = vmatpush2.msra.mxu0 %v3800
  %4354 = vmatprep.subr.mxu0 %v3795
  %4355 = vmatpush2.msra.mxu0 %v3794
  %4356 = vmatprep.subr.mxu0 %v3789
  %4357 = vmatpush2.msra.mxu0 %v3788
  %4358 = vmatprep.subr.mxu0 %v3783
  %4359 = vmatpush2.msra.mxu0 %v3782
  %4360 = vmatprep.subr.mxu0 %v3777
  %4361 = vmatpush2.msra.mxu0 %v3776
  %4362 = vmatprep.subr.mxu0 %v3771
  %4363 = vmatpush2.msra.mxu0 %v3770
  %4364 = vmatprep.subr.mxu0 %v3765
  %4365 = vmatpush2.msra.mxu0 %v3764
  %4366 = vmatprep.subr.mxu0 %v3759
  %4367 = vmatpush2.msra.mxu0 %v3758
  %4368 = vmatprep.subr.mxu0 %v3753
  %4369 = vmatpush2.msra.mxu0 %v3752
  %4370 = vmatprep.subr.mxu0 %v3747
  %4371 = vmatpush2.msra.mxu0 %v3746
  %4372 = vmatprep.subr.mxu0 %v3741
  %4373 = vmatpush2.msra.mxu0 %v3740
  %4374 = vmatprep.subr.mxu0 %v3735
  %4375 = vmatpush2.msra.mxu0 %v3734
  %4376 = vmatprep.subr.mxu0 %v3729
  %4377 = vmatpush2.msra.mxu0 %v3728
  %4378 = vmatprep.subr.mxu0 %v3723
  %4379 = vmatpush2.msra.mxu0 %v3722
  %4380 = vmatprep.subr.mxu0 %v3717
  %4381 = vmatpush2.msra.mxu0 %v3716
  %4382 = vmatprep.mubr.f32.mxu0 %v3423
  %4383 = vmatmul.mubr.f32.gmra.mxu0 %v3422
  %v4384 = vpop.f32.mrf.mxu0
  %v4385 = vadd.f32 %v4314, %v4384
  %v4386 = vpop.f32.mrf.mxu0
  %v4387 = vadd.f32 %v4316, %v4386
  %4388 = vdwg.mxu0
  %4389 = vmatprep.subr.mxu0 %v3903
  %4390 = vmatpush1.msra.mxu0 %v3902
  %4391 = vmatprep.subr.mxu0 %v3897
  %4392 = vmatpush1.msra.mxu0 %v3896
  %4393 = vmatprep.subr.mxu0 %v3891
  %4394 = vmatpush1.msra.mxu0 %v3890
  %4395 = vmatprep.subr.mxu0 %v3885
  %4396 = vmatpush1.msra.mxu0 %v3884
  %4397 = vmatprep.subr.mxu0 %v3879
  %4398 = vmatpush1.msra.mxu0 %v3878
  %4399 = vmatprep.subr.mxu0 %v3873
  %4400 = vmatpush1.msra.mxu0 %v3872
  %4401 = vmatprep.subr.mxu0 %v3867
  %4402 = vmatpush1.msra.mxu0 %v3866
  %4403 = vmatprep.subr.mxu0 %v3861
  %4404 = vmatpush1.msra.mxu0 %v3860
  %4405 = vmatprep.subr.mxu0 %v3855
  %4406 = vmatpush1.msra.mxu0 %v3854
  %4407 = vmatprep.subr.mxu0 %v3849
  %4408 = vmatpush1.msra.mxu0 %v3848
  %4409 = vmatprep.subr.mxu0 %v3843
  %4410 = vmatpush1.msra.mxu0 %v3842
  %4411 = vmatprep.subr.mxu0 %v3837
  %4412 = vmatpush1.msra.mxu0 %v3836
  %4413 = vmatprep.subr.mxu0 %v3831
  %4414 = vmatpush1.msra.mxu0 %v3830
  %4415 = vmatprep.subr.mxu0 %v3825
  %4416 = vmatpush1.msra.mxu0 %v3824
  %4417 = vmatprep.subr.mxu0 %v3819
  %4418 = vmatpush1.msra.mxu0 %v3818
  %4419 = vmatprep.subr.mxu0 %v3813
  %4420 = vmatpush1.msra.mxu0 %v3812
  %4421 = vmatprep.subr.mxu0 %v3999
  %4422 = vmatpush2.msra.mxu0 %v3998
  %4423 = vmatprep.subr.mxu0 %v3993
  %4424 = vmatpush2.msra.mxu0 %v3992
  %4425 = vmatprep.subr.mxu0 %v3987
  %4426 = vmatpush2.msra.mxu0 %v3986
  %4427 = vmatprep.subr.mxu0 %v3981
  %4428 = vmatpush2.msra.mxu0 %v3980
  %4429 = vmatprep.subr.mxu0 %v3975
  %4430 = vmatpush2.msra.mxu0 %v3974
  %4431 = vmatprep.subr.mxu0 %v3969
  %4432 = vmatpush2.msra.mxu0 %v3968
  %4433 = vmatprep.subr.mxu0 %v3963
  %4434 = vmatpush2.msra.mxu0 %v3962
  %4435 = vmatprep.subr.mxu0 %v3957
  %4436 = vmatpush2.msra.mxu0 %v3956
  %4437 = vmatprep.subr.mxu0 %v3951
  %4438 = vmatpush2.msra.mxu0 %v3950
  %4439 = vmatprep.subr.mxu0 %v3945
  %4440 = vmatpush2.msra.mxu0 %v3944
  %4441 = vmatprep.subr.mxu0 %v3939
  %4442 = vmatpush2.msra.mxu0 %v3938
  %4443 = vmatprep.subr.mxu0 %v3933
  %4444 = vmatpush2.msra.mxu0 %v3932
  %4445 = vmatprep.subr.mxu0 %v3927
  %4446 = vmatpush2.msra.mxu0 %v3926
  %4447 = vmatprep.subr.mxu0 %v3921
  %4448 = vmatpush2.msra.mxu0 %v3920
  %4449 = vmatprep.subr.mxu0 %v3915
  %4450 = vmatpush2.msra.mxu0 %v3914
  %4451 = vmatprep.subr.mxu0 %v3909
  %4452 = vmatpush2.msra.mxu0 %v3908
  %4453 = vmatprep.mubr.f32.mxu0 %v3425
  %4454 = vmatmul.mubr.f32.gmra.mxu0 %v3424
  %v4455 = vpop.f32.mrf.mxu0
  %v4456 = vadd.f32 %v4385, %v4455
  %v4457 = vpop.f32.mrf.mxu0
  %v4458 = vadd.f32 %v4387, %v4457
  %4459 = vdwg.mxu0
  %4460 = vmatprep.subr.mxu0 %v3521
  %4461 = vmatpush1.msra.mxu0 %v3520
  %4462 = vmatprep.subr.mxu0 %v3515
  %4463 = vmatpush1.msra.mxu0 %v3514
  %4464 = vmatprep.subr.mxu0 %v3509
  %4465 = vmatpush1.msra.mxu0 %v3508
  %4466 = vmatprep.subr.mxu0 %v3503
  %4467 = vmatpush1.msra.mxu0 %v3502
  %4468 = vmatprep.subr.mxu0 %v3497
  %4469 = vmatpush1.msra.mxu0 %v3496
  %4470 = vmatprep.subr.mxu0 %v3491
  %4471 = vmatpush1.msra.mxu0 %v3490
  %4472 = vmatprep.subr.mxu0 %v3485
  %4473 = vmatpush1.msra.mxu0 %v3484
  %4474 = vmatprep.subr.mxu0 %v3479
  %4475 = vmatpush1.msra.mxu0 %v3478
  %4476 = vmatprep.subr.mxu0 %v3473
  %4477 = vmatpush1.msra.mxu0 %v3472
  %4478 = vmatprep.subr.mxu0 %v3467
  %4479 = vmatpush1.msra.mxu0 %v3466
  %4480 = vmatprep.subr.mxu0 %v3461
  %4481 = vmatpush1.msra.mxu0 %v3460
  %4482 = vmatprep.subr.mxu0 %v3455
  %4483 = vmatpush1.msra.mxu0 %v3454
  %4484 = vmatprep.subr.mxu0 %v3449
  %4485 = vmatpush1.msra.mxu0 %v3448
  %4486 = vmatprep.subr.mxu0 %v3443
  %4487 = vmatpush1.msra.mxu0 %v3442
  %4488 = vmatprep.subr.mxu0 %v3437
  %4489 = vmatpush1.msra.mxu0 %v3436
  %4490 = vmatprep.subr.mxu0 %v3431
  %4491 = vmatpush1.msra.mxu0 %v3430
  %4492 = vmatprep.subr.mxu0 %v3617
  %4493 = vmatpush2.msra.mxu0 %v3616
  %4494 = vmatprep.subr.mxu0 %v3611
  %4495 = vmatpush2.msra.mxu0 %v3610
  %4496 = vmatprep.subr.mxu0 %v3605
  %4497 = vmatpush2.msra.mxu0 %v3604
  %4498 = vmatprep.subr.mxu0 %v3599
  %4499 = vmatpush2.msra.mxu0 %v3598
  %4500 = vmatprep.subr.mxu0 %v3593
  %4501 = vmatpush2.msra.mxu0 %v3592
  %4502 = vmatprep.subr.mxu0 %v3587
  %4503 = vmatpush2.msra.mxu0 %v3586
  %4504 = vmatprep.subr.mxu0 %v3581
  %4505 = vmatpush2.msra.mxu0 %v3580
  %4506 = vmatprep.subr.mxu0 %v3575
  %4507 = vmatpush2.msra.mxu0 %v3574
  %4508 = vmatprep.subr.mxu0 %v3569
  %4509 = vmatpush2.msra.mxu0 %v3568
  %4510 = vmatprep.subr.mxu0 %v3563
  %4511 = vmatpush2.msra.mxu0 %v3562
  %4512 = vmatprep.subr.mxu0 %v3557
  %4513 = vmatpush2.msra.mxu0 %v3556
  %4514 = vmatprep.subr.mxu0 %v3551
  %4515 = vmatpush2.msra.mxu0 %v3550
  %4516 = vmatprep.subr.mxu0 %v3545
  %4517 = vmatpush2.msra.mxu0 %v3544
  %4518 = vmatprep.subr.mxu0 %v3539
  %4519 = vmatpush2.msra.mxu0 %v3538
  %4520 = vmatprep.subr.mxu0 %v3533
  %4521 = vmatpush2.msra.mxu0 %v3532
  %4522 = vmatprep.subr.mxu0 %v3527
  %4523 = vmatpush2.msra.mxu0 %v3526
  %4524 = vmatprep.mubr.f32.mxu0 %v3421
  %4525 = vmatmul.mubr.f32.gmra.mxu0 %v3420
  %v4526 = vpop.f32.mrf.mxu0
  %v4527 = vadd.f32 %v4023, %v4526
  %v4528 = vpop.f32.mrf.mxu0
  %v4529 = vadd.f32 %v4027, %v4528
  %4530 = vdwg.mxu0
  %4531 = vmatprep.subr.mxu0 %v3713
  %4532 = vmatpush1.msra.mxu0 %v3712
  %4533 = vmatprep.subr.mxu0 %v3707
  %4534 = vmatpush1.msra.mxu0 %v3706
  %4535 = vmatprep.subr.mxu0 %v3701
  %4536 = vmatpush1.msra.mxu0 %v3700
  %4537 = vmatprep.subr.mxu0 %v3695
  %4538 = vmatpush1.msra.mxu0 %v3694
  %4539 = vmatprep.subr.mxu0 %v3689
  %4540 = vmatpush1.msra.mxu0 %v3688
  %4541 = vmatprep.subr.mxu0 %v3683
  %4542 = vmatpush1.msra.mxu0 %v3682
  %4543 = vmatprep.subr.mxu0 %v3677
  %4544 = vmatpush1.msra.mxu0 %v3676
  %4545 = vmatprep.subr.mxu0 %v3671
  %4546 = vmatpush1.msra.mxu0 %v3670
  %4547 = vmatprep.subr.mxu0 %v3665
  %4548 = vmatpush1.msra.mxu0 %v3664
  %4549 = vmatprep.subr.mxu0 %v3659
  %4550 = vmatpush1.msra.mxu0 %v3658
  %4551 = vmatprep.subr.mxu0 %v3653
  %4552 = vmatpush1.msra.mxu0 %v3652
  %4553 = vmatprep.subr.mxu0 %v3647
  %4554 = vmatpush1.msra.mxu0 %v3646
  %4555 = vmatprep.subr.mxu0 %v3641
  %4556 = vmatpush1.msra.mxu0 %v3640
  %4557 = vmatprep.subr.mxu0 %v3635
  %4558 = vmatpush1.msra.mxu0 %v3634
  %4559 = vmatprep.subr.mxu0 %v3629
  %4560 = vmatpush1.msra.mxu0 %v3628
  %4561 = vmatprep.subr.mxu0 %v3623
  %4562 = vmatpush1.msra.mxu0 %v3622
  %4563 = vmatprep.subr.mxu0 %v3809
  %4564 = vmatpush2.msra.mxu0 %v3808
  %4565 = vmatprep.subr.mxu0 %v3803
  %4566 = vmatpush2.msra.mxu0 %v3802
  %4567 = vmatprep.subr.mxu0 %v3797
  %4568 = vmatpush2.msra.mxu0 %v3796
  %4569 = vmatprep.subr.mxu0 %v3791
  %4570 = vmatpush2.msra.mxu0 %v3790
  %4571 = vmatprep.subr.mxu0 %v3785
  %4572 = vmatpush2.msra.mxu0 %v3784
  %4573 = vmatprep.subr.mxu0 %v3779
  %4574 = vmatpush2.msra.mxu0 %v3778
  %4575 = vmatprep.subr.mxu0 %v3773
  %4576 = vmatpush2.msra.mxu0 %v3772
  %4577 = vmatprep.subr.mxu0 %v3767
  %4578 = vmatpush2.msra.mxu0 %v3766
  %4579 = vmatprep.subr.mxu0 %v3761
  %4580 = vmatpush2.msra.mxu0 %v3760
  %4581 = vmatprep.subr.mxu0 %v3755
  %4582 = vmatpush2.msra.mxu0 %v3754
  %4583 = vmatprep.subr.mxu0 %v3749
  %4584 = vmatpush2.msra.mxu0 %v3748
  %4585 = vmatprep.subr.mxu0 %v3743
  %4586 = vmatpush2.msra.mxu0 %v3742
  %4587 = vmatprep.subr.mxu0 %v3737
  %4588 = vmatpush2.msra.mxu0 %v3736
  %4589 = vmatprep.subr.mxu0 %v3731
  %4590 = vmatpush2.msra.mxu0 %v3730
  %4591 = vmatprep.subr.mxu0 %v3725
  %4592 = vmatpush2.msra.mxu0 %v3724
  %4593 = vmatprep.subr.mxu0 %v3719
  %4594 = vmatpush2.msra.mxu0 %v3718
  %4595 = vmatprep.mubr.f32.mxu0 %v3423
  %4596 = vmatmul.mubr.f32.gmra.mxu0 %v3422
  %v4597 = vpop.f32.mrf.mxu0
  %v4598 = vadd.f32 %v4527, %v4597
  %v4599 = vpop.f32.mrf.mxu0
  %v4600 = vadd.f32 %v4529, %v4599
  %4601 = vdwg.mxu0
  %4602 = vmatprep.subr.mxu0 %v3905
  %4603 = vmatpush1.msra.mxu0 %v3904
  %4604 = vmatprep.subr.mxu0 %v3899
  %4605 = vmatpush1.msra.mxu0 %v3898
  %4606 = vmatprep.subr.mxu0 %v3893
  %4607 = vmatpush1.msra.mxu0 %v3892
  %4608 = vmatprep.subr.mxu0 %v3887
  %4609 = vmatpush1.msra.mxu0 %v3886
  %4610 = vmatprep.subr.mxu0 %v3881
  %4611 = vmatpush1.msra.mxu0 %v3880
  %4612 = vmatprep.subr.mxu0 %v3875
  %4613 = vmatpush1.msra.mxu0 %v3874
  %4614 = vmatprep.subr.mxu0 %v3869
  %4615 = vmatpush1.msra.mxu0 %v3868
  %4616 = vmatprep.subr.mxu0 %v3863
  %4617 = vmatpush1.msra.mxu0 %v3862
  %4618 = vmatprep.subr.mxu0 %v3857
  %4619 = vmatpush1.msra.mxu0 %v3856
  %4620 = vmatprep.subr.mxu0 %v3851
  %4621 = vmatpush1.msra.mxu0 %v3850
  %4622 = vmatprep.subr.mxu0 %v3845
  %4623 = vmatpush1.msra.mxu0 %v3844
  %4624 = vmatprep.subr.mxu0 %v3839
  %4625 = vmatpush1.msra.mxu0 %v3838
  %4626 = vmatprep.subr.mxu0 %v3833
  %4627 = vmatpush1.msra.mxu0 %v3832
  %4628 = vmatprep.subr.mxu0 %v3827
  %4629 = vmatpush1.msra.mxu0 %v3826
  %4630 = vmatprep.subr.mxu0 %v3821
  %4631 = vmatpush1.msra.mxu0 %v3820
  %4632 = vmatprep.subr.mxu0 %v3815
  %4633 = vmatpush1.msra.mxu0 %v3814
  %4634 = vmatprep.subr.mxu0 %v4001
  %4635 = vmatpush2.msra.mxu0 %v4000
  %4636 = vmatprep.subr.mxu0 %v3995
  %4637 = vmatpush2.msra.mxu0 %v3994
  %4638 = vmatprep.subr.mxu0 %v3989
  %4639 = vmatpush2.msra.mxu0 %v3988
  %4640 = vmatprep.subr.mxu0 %v3983
  %4641 = vmatpush2.msra.mxu0 %v3982
  %4642 = vmatprep.subr.mxu0 %v3977
  %4643 = vmatpush2.msra.mxu0 %v3976
  %4644 = vmatprep.subr.mxu0 %v3971
  %4645 = vmatpush2.msra.mxu0 %v3970
  %4646 = vmatprep.subr.mxu0 %v3965
  %4647 = vmatpush2.msra.mxu0 %v3964
  %4648 = vmatprep.subr.mxu0 %v3959
  %4649 = vmatpush2.msra.mxu0 %v3958
  %4650 = vmatprep.subr.mxu0 %v3953
  %4651 = vmatpush2.msra.mxu0 %v3952
  %4652 = vmatprep.subr.mxu0 %v3947
  %4653 = vmatpush2.msra.mxu0 %v3946
  %4654 = vmatprep.subr.mxu0 %v3941
  %4655 = vmatpush2.msra.mxu0 %v3940
  %4656 = vmatprep.subr.mxu0 %v3935
  %4657 = vmatpush2.msra.mxu0 %v3934
  %4658 = vmatprep.subr.mxu0 %v3929
  %4659 = vmatpush2.msra.mxu0 %v3928
  %4660 = vmatprep.subr.mxu0 %v3923
  %4661 = vmatpush2.msra.mxu0 %v3922
  %4662 = vmatprep.subr.mxu0 %v3917
  %4663 = vmatpush2.msra.mxu0 %v3916
  %4664 = vmatprep.subr.mxu0 %v3911
  %4665 = vmatpush2.msra.mxu0 %v3910
  %4666 = vmatprep.mubr.f32.mxu0 %v3425
  %4667 = vmatmul.mubr.f32.gmra.mxu0 %v3424
  %v4668 = vpop.f32.mrf.mxu0
  %v4669 = vadd.f32 %v4598, %v4668
  %v4670 = vpop.f32.mrf.mxu0
  %v4671 = vadd.f32 %v4600, %v4670
  %4672 = vdwg.mxu0
  %v4673 = vtanh.pop %v4243
  %v4674 = vtanh.pop %v4245
  %v4675 = vtanh.pop %v4456
  %v4676 = vtanh.pop %v4458
  %v4677 = vtanh.pop %v4669
  %v4678 = vtanh.pop %v4671
  %4679 = vst [vmem:[%s7] sm:$0xff] %v4673
  %4680 = vst [vmem:[%s7 + $0x8] sm:$0xff] %v4674
  %4681 = vst [vmem:[%s7 + $0x10] sm:$0xff] %v4675
  %4682 = vst [vmem:[%s7 + $0x18] sm:$0xff] %v4676
  %4683 = vst [vmem:[%s7 + $0x20] sm:$0xff] %v4677
  %4684 = vst [vmem:[%s7 + $0x28] sm:$0xff] %v4678
  // Predicated region
  $region30: #{_decoder_forward.1} parent=0 // pred_check
    _
  $region31: #{_decoder_forward.1} parent=0 // pred_check_branch
    %4686 = sbr.rel (0) target = $region33
  $region32: #{_decoder_forward.1} parent=0 // pred_region
    _
  $region33: #{_decoder_forward.1} parent=0 // pred_fallthru
    _
  // Predicated region
  $region34: #{_decoder_forward.1} parent=0 // pred_check
    _
  $region35: #{_decoder_forward.1} parent=0 // pred_check_branch
    %4688 = sbr.rel (0) target = $region37
  $region36: #{_decoder_forward.1} parent=0 // pred_region
    _
  $region37: #{_decoder_forward.1} parent=0 // pred_fallthru
    _

</llo_original>
